<compile_context>
chip_gen: v6e
topology: v6e:2x2x1
jax: 0.10.0
libtpu: 0.0.40
codegen_flags: <defaults>
</compile_context>

<pallas_src>
import functools

import numpy as np
import jax
import jax.numpy as jnp
from jax.experimental import pallas as pl
from jax.experimental.pallas import tpu as pltpu


# ----------------------------- Pallas kernel ---------------------------------

def _swin_block_kernel(x_ref, bias_ref, ln_ref, wqkv_ref, bqkv_ref,
                       wproj_ref, bproj_ref, w1_ref, b1_ref, w2_ref, b2_ref,
                       o_ref, *, num_heads, head_dim, scale):
    x = x_ref[0]                      # (TM, C) f32
    C = x.shape[-1]

    ln = ln_ref[...]                  # (4, C): [g1, b1, g2, b2]
    g1, be1, g2, be2 = ln[0:1], ln[1:2], ln[2:3], ln[3:4]

    # --- LayerNorm 1 ---
    mu = jnp.mean(x, axis=-1, keepdims=True)
    xc = x - mu
    var = jnp.mean(xc * xc, axis=-1, keepdims=True)
    y = xc * jax.lax.rsqrt(var + 1e-5) * g1 + be1

    # --- fused QKV projection (single wide MXU matmul, N = 3C) ---
    qkv = jnp.dot(y, wqkv_ref[...], preferred_element_type=jnp.float32) + bqkv_ref[...]

    # --- window attention: dense (TM, TM) scores with block-diagonal bias ---
    # Accumulate the output projection per head (block-matmul) to avoid a concat.
    attn_acc = jnp.zeros_like(x)
    for h in range(num_heads):
        lo = h * head_dim
        qh = qkv[:, lo:lo + head_dim] * scale
        kh = qkv[:, C + lo:C + lo + head_dim]
        vh = qkv[:, 2 * C + lo:2 * C + lo + head_dim]
        s = jax.lax.dot_general(qh, kh, (((1,), (1,)), ((), ())),
                                preferred_element_type=jnp.float32)
        s = s + bias_ref[0, h]                      # rel-pos + shift mask, -1e9 off-window
        s = s - jnp.max(s, axis=-1, keepdims=True)
        p = jnp.exp(s)
        p = p / jnp.sum(p, axis=-1, keepdims=True)
        oh = jnp.dot(p, vh, preferred_element_type=jnp.float32)           # (TM, hd)
        attn_acc = attn_acc + jnp.dot(oh, wproj_ref[lo:lo + head_dim, :],
                                      preferred_element_type=jnp.float32)
    x1 = x + attn_acc + bproj_ref[...]              # residual 1

    # --- LayerNorm 2 + MLP ---
    mu2 = jnp.mean(x1, axis=-1, keepdims=True)
    xc2 = x1 - mu2
    var2 = jnp.mean(xc2 * xc2, axis=-1, keepdims=True)
    y2 = xc2 * jax.lax.rsqrt(var2 + 1e-5) * g2 + be2
    hmid = jnp.dot(y2, w1_ref[...], preferred_element_type=jnp.float32) + b1_ref[...]
    hmid = jax.nn.gelu(hmid, approximate=True)      # tanh-approx GELU (see TODO above)
    mlp_out = jnp.dot(hmid, w2_ref[...], preferred_element_type=jnp.float32) + b2_ref[...]

    o_ref[0] = (x1 + mlp_out).astype(o_ref.dtype)   # residual 2


# ----------------------------- wrappers ---------------------------------------

def _choose_tile_rows(L, ws, target=128):
    """Largest row-tile <= target that divides L, is a multiple of ws, and is
    sublane-legal (multiple of 8 or equal to L)."""
    cands = [t for t in range(ws, L + 1, ws)
             if L % t == 0 and (t % 8 == 0 or t == L)]
    below = [t for t in cands if t <= target]
    return max(below) if below else min(cands)


def _relative_position_bias(rel_table, ws, nh):
    # window_size = (1, ws)  =>  index[i, j] = (i - j) + ws - 1
    idx = jnp.arange(ws)[:, None] - jnp.arange(ws)[None, :] + (ws - 1)   # (ws, ws)
    rel = rel_table[idx]                                                 # (ws, ws, nh)
    return jnp.transpose(rel, (2, 0, 1)).astype(jnp.float32)             # (nh, ws, ws)


def _build_shift_mask(L, ws, shift):
    """Exact replica of the PyTorch attn_mask construction (1-D)."""
    nW = L // ws
    if shift == 0:
        return jnp.zeros((nW, ws, ws), jnp.float32)
    img = np.zeros((1, 1, L, 1), np.float32)            # (1, H=1, W=L, 1)
    slices = (slice(0, -ws), slice(-ws, -shift), slice(-shift, None))
    cnt = 0
    for hs in slices:
        for wsl in slices:
            img[:, hs, wsl, :] = cnt
            cnt += 1
    mw = img.reshape(nW, ws)                             # window_partition_1d + view(-1, ws)
    am = mw[:, None, :] - mw[:, :, None]                 # (nW, ws, ws)
    am = np.where(am != 0, -100.0, 0.0).astype(np.float32)
    return jnp.asarray(am)


def _build_dense_bias(rel_bias, attn_mask, L, TM, ws, nh):
    """Per-tile dense additive bias (nT, nh, TM, TM): rel-pos + shift mask inside a
    window, -1e9 everywhere else (implements the window partition)."""
    nT = L // TM
    TW = TM // ws
    i = jnp.arange(TM)
    wi = i // ws
    pi = i % ws
    same = wi[:, None] == wi[None, :]                                      # (TM, TM)
    rel_full = rel_bias[:, pi[:, None], pi[None, :]]                       # (nh, TM, TM)
    gw = jnp.arange(nT)[:, None] * TW + wi[None, :]                        # (nT, TM)
    msk_full = attn_mask[gw[:, :, None], pi[None, :, None], pi[None, None, :]]  # (nT, TM, TM)
    bias = jnp.where(same[None, None, :, :],
                     rel_full[None, :, :, :] + msk_full[:, None, :, :],
                     -1e9)
    return bias.astype(jnp.float32)


def _swin_block_pallas(x, bias_full, ln, wqkv, bqkv, wproj, bproj, w1, b1, w2, b2,
                       *, num_heads, head_dim, tile_rows):
    B, L, C = x.shape
    TM = tile_rows
    nT = L // TM
    H = w1.shape[1]

    kernel = functools.partial(_swin_block_kernel, num_heads=num_heads,
                               head_dim=head_dim, scale=float(head_dim) ** -0.5)

    # advisory cost estimate for XLA scheduling around the kernel
    M = B * L
    flops = int(2 * M * C * (3 * C + 2 * TM + C + 2 * H))
    transc = int(M * (num_heads * TM + H))
    param_elems = C * 3 * C + 3 * C + C * C + C + 4 * C + C * H + H + H * C + C
    bytes_accessed = int(4 * (2 * M * C + nT * num_heads * TM * TM + param_elems))

    const = lambda t, b: (0, 0)
    grid_spec = pl.GridSpec(
        grid=(nT, B),
        in_specs=[
            pl.BlockSpec((1, TM, C), lambda t, b: (b, t, 0)),           # x tile
            pl.BlockSpec((1, num_heads, TM, TM), lambda t, b: (t, 0, 0, 0)),  # attn bias
            pl.BlockSpec((4, C), const),                                # LN params
            pl.BlockSpec((C, 3 * C), const),                            # Wqkv
            pl.BlockSpec((1, 3 * C), const),                            # bqkv
            pl.BlockSpec((C, C), const),                                # Wproj
            pl.BlockSpec((1, C), const),                                # bproj
            pl.BlockSpec((C, H), const),                                # W1
            pl.BlockSpec((1, H), const),                                # b1
            pl.BlockSpec((H, C), const),                                # W2
            pl.BlockSpec((1, C), const),                                # b2
        ],
        out_specs=pl.BlockSpec((1, TM, C), lambda t, b: (b, t, 0)),
    )

    return pl.pallas_call(
        kernel,
        out_shape=jax.ShapeDtypeStruct((B, L, C), x.dtype),
        grid_spec=grid_spec,
        compiler_params=pltpu.CompilerParams(
            dimension_semantics=("parallel", "parallel")),
        cost_estimate=pl.CostEstimate(flops=flops, transcendentals=transc,
                                      bytes_accessed=bytes_accessed),
    )(x, bias_full, ln, wqkv, bqkv, wproj, bproj, w1, b1, w2, b2)


def _swin_block_forward(x, p, *, window_size, num_heads, shift, tile_rows):
    B, L, C = x.shape
    assert C % num_heads == 0 and L % window_size == 0
    head_dim = C // num_heads
    TM = tile_rows
    assert L % TM == 0 and TM % window_size == 0

    rel = _relative_position_bias(p["rel_table"], window_size, num_heads)
    mask = _build_shift_mask(L, window_size, shift)
    bias_full = _build_dense_bias(rel, mask, L, TM, window_size, num_heads)

    xin = jnp.roll(x, -shift, axis=1) if shift > 0 else x
    out = _swin_block_pallas(xin, bias_full, p["ln"], p["wqkv"], p["bqkv"],
                             p["wproj"], p["bproj"], p["w1"], p["b1"],
                             p["w2"], p["b2"],
                             num_heads=num_heads, head_dim=head_dim, tile_rows=TM)
    if shift > 0:
        out = jnp.roll(out, shift, axis=1)
    return out


@functools.partial(jax.jit, static_argnames=("window_size", "num_heads", "tile_rows"))
def basic_layer_forward(x, blocks_params, *, window_size, num_heads, tile_rows=None):
    """BasicLayer.forward: depth SwinTransformerBlocks (alternating shift), no downsample."""
    B, L, C = x.shape
    TM = tile_rows if tile_rows is not None else _choose_tile_rows(L, window_size)
    for i, p in enumerate(blocks_params):
        shift = 0 if i % 2 == 0 else window_size // 2
        x = _swin_block_forward(x, p, window_size=window_size, num_heads=num_heads,
                                shift=shift, tile_rows=TM)
    return x


# ----------------------------- pure-JAX reference -----------------------------

def _ref_swin_block(x, p, *, window_size, num_heads, shift):
    B, L, C = x.shape
    ws, nh = window_size, num_heads
    hd = C // nh
    scale = hd ** -0.5
    ln = p["ln"]
    g1, be1, g2, be2 = ln[0:1], ln[1:2], ln[2:3], ln[3:4]

    def layer_norm(z, g, b):
        mu = jnp.mean(z, -1, keepdims=True)
        v = jnp.mean((z - mu) ** 2, -1, keepdims=True)
        return (z - mu) / jnp.sqrt(v + 1e-5) * g + b

    shortcut = x
    y = layer_norm(x, g1, be1)
    if shift > 0:
        y = jnp.roll(y, -shift, axis=1)
    nW = L // ws
    yw = y.reshape(B * nW, ws, C)
    qkv = yw @ p["wqkv"] + p["bqkv"]
    qkv = qkv.reshape(B * nW, ws, 3, nh, hd).transpose(2, 0, 3, 1, 4)
    q, k, v = qkv[0] * scale, qkv[1], qkv[2]
    attn = jnp.einsum("bhid,bhjd->bhij", q, k)
    attn = attn + _relative_position_bias(p["rel_table"], ws, nh)[None]
    if shift > 0:
        mask = _build_shift_mask(L, ws, shift)
        attn = attn.reshape(B, nW, nh, ws, ws) + mask[None, :, None]
        attn = attn.reshape(B * nW, nh, ws, ws)
    attn = jax.nn.softmax(attn, axis=-1)
    out = jnp.einsum("bhij,bhjd->bhid", attn, v)
    out = out.transpose(0, 2, 1, 3).reshape(B * nW, ws, C)
    out = out @ p["wproj"] + p["bproj"]
    out = out.reshape(B, L, C)
    if shift > 0:
        out = jnp.roll(out, shift, axis=1)
    x = shortcut + out
    y2 = layer_norm(x, g2, be2)
    h = jax.nn.gelu(y2 @ p["w1"] + p["b1"], approximate=True)
    return x + (h @ p["w2"] + p["b2"])


# ----------------------------- demo / self-check ------------------------------

if __name__ == "__main__":
    jax.config.update("jax_default_matmul_precision", "highest")

    # Small shapes consistent with the module: B=2, L=16, dim=32, heads=2,
    # window_size=4, depth=2 (exercises both shift=0 and shift=window//2), mlp_ratio=4.
    B, L, C = 2, 16, 32
    window_size, num_heads, depth = 4, 2, 2
    mlp_ratio = 4.0
    H = int(C * mlp_ratio)

    key = jax.random.PRNGKey(0)
    keys = jax.random.split(key, 1 + depth)
    x = jax.random.normal(keys[0], (B, L, C), dtype=jnp.float32)

    blocks_params = []
    for i in range(depth):
        ks = jax.random.split(keys[1 + i], 12)
        ln = jnp.concatenate([
            1.0 + 0.1 * jax.random.normal(ks[0], (1, C)),
            0.1 * jax.random.normal(ks[1], (1, C)),
            1.0 + 0.1 * jax.random.normal(ks[2], (1, C)),
            0.1 * jax.random.normal(ks[3], (1, C)),
        ], axis=0).astype(jnp.float32)
        p = dict(
            ln=ln,
            wqkv=0.1 * jax.random.normal(ks[4], (C, 3 * C), dtype=jnp.float32),
            bqkv=0.1 * jax.random.normal(ks[5], (1, 3 * C), dtype=jnp.float32),
            wproj=0.1 * jax.random.normal(ks[6], (C, C), dtype=jnp.float32),
            bproj=0.1 * jax.random.normal(ks[7], (1, C), dtype=jnp.float32),
            rel_table=0.02 * jax.random.normal(ks[8], (2 * window_size - 1, num_heads),
                                               dtype=jnp.float32),
            w1=0.1 * jax.random.normal(ks[9], (C, H), dtype=jnp.float32),
            b1=0.1 * jax.random.normal(ks[10], (1, H), dtype=jnp.float32),
            w2=0.1 * jax.random.normal(ks[11], (H, C), dtype=jnp.float32),
            b2=jnp.zeros((1, C), dtype=jnp.float32),
        )
        blocks_params.append(p)

    out = basic_layer_forward(x, blocks_params, window_size=window_size,
                              num_heads=num_heads)
    out = jax.block_until_ready(out)

    # Pure-JAX reference mirroring the PyTorch BasicLayer forward.
    ref = x
    for i, p in enumerate(blocks_params):
        shift = 0 if i % 2 == 0 else window_size // 2
        ref = _ref_swin_block(ref, p, window_size=window_size,
                              num_heads=num_heads, shift=shift)
    ref = jax.block_until_ready(ref)

    assert out.shape == (B, L, C)
    assert jnp.allclose(out, ref, atol=1e-3, rtol=1e-3), (
        f"max abs err {float(jnp.max(jnp.abs(out - ref)))}")

    print("KERNEL_OK")
</pallas_src>

<mosaic_0001>
module attributes {stable_mosaic.version = 11 : i64} {
  func.func @_swin_block_kernel(%arg0: i32, %arg1: i32, %arg2: memref<1x16x32xf32, #tpu.memory_space<vmem>>, %arg3: memref<1x2x16x16xf32, #tpu.memory_space<vmem>>, %arg4: memref<4x32xf32, #tpu.memory_space<vmem>>, %arg5: memref<32x96xf32, #tpu.memory_space<vmem>>, %arg6: memref<1x96xf32, #tpu.memory_space<vmem>>, %arg7: memref<32x32xf32, #tpu.memory_space<vmem>>, %arg8: memref<1x32xf32, #tpu.memory_space<vmem>>, %arg9: memref<32x128xf32, #tpu.memory_space<vmem>>, %arg10: memref<1x128xf32, #tpu.memory_space<vmem>>, %arg11: memref<128x32xf32, #tpu.memory_space<vmem>>, %arg12: memref<1x32xf32, #tpu.memory_space<vmem>>, %arg13: memref<1x16x32xf32, #tpu.memory_space<vmem>>) attributes {dimension_semantics = [#tpu.dimension_semantics<parallel>, #tpu.dimension_semantics<parallel>], iteration_bounds = array<i64: 1, 2>, scalar_prefetch = 0 : i64, scratch_operands = 0 : i64, tpu.core_type = #tpu.core_type<tc>, window_params = [{transform_indices = @transform_0, window_bounds = array<i64: 1, 16, 32>}, {transform_indices = @transform_1, window_bounds = array<i64: 1, 2, 16, 16>}, {pipeline_mode = #tpu.pipeline_mode<synchronous>, transform_indices = @transform_2, window_bounds = array<i64: 4, 32>}, {pipeline_mode = #tpu.pipeline_mode<synchronous>, transform_indices = @transform_3, window_bounds = array<i64: 32, 96>}, {pipeline_mode = #tpu.pipeline_mode<synchronous>, transform_indices = @transform_4, window_bounds = array<i64: 1, 96>}, {pipeline_mode = #tpu.pipeline_mode<synchronous>, transform_indices = @transform_5, window_bounds = array<i64: 32, 32>}, {pipeline_mode = #tpu.pipeline_mode<synchronous>, transform_indices = @transform_6, window_bounds = array<i64: 1, 32>}, {pipeline_mode = #tpu.pipeline_mode<synchronous>, transform_indices = @transform_7, window_bounds = array<i64: 32, 128>}, {pipeline_mode = #tpu.pipeline_mode<synchronous>, transform_indices = @transform_8, window_bounds = array<i64: 1, 128>}, {pipeline_mode = #tpu.pipeline_mode<synchronous>, transform_indices = @transform_9, window_bounds = array<i64: 128, 32>}, {pipeline_mode = #tpu.pipeline_mode<synchronous>, transform_indices = @transform_10, window_bounds = array<i64: 1, 32>}, {transform_indices = @transform_11, window_bounds = array<i64: 1, 16, 32>}]} {
    %c0 = arith.constant 0 : index
    %c0_0 = arith.constant 0 : index
    %c0_1 = arith.constant 0 : index
    %0 = vector.load %arg2[%c0, %c0_0, %c0_1] : memref<1x16x32xf32, #tpu.memory_space<vmem>>, vector<1x16x32xf32>
    %1 = vector.shape_cast %0 : vector<1x16x32xf32> to vector<16x32xf32>
    %c0_2 = arith.constant 0 : index
    %c0_3 = arith.constant 0 : index
    %2 = vector.load %arg4[%c0_2, %c0_3] : memref<4x32xf32, #tpu.memory_space<vmem>>, vector<4x32xf32>
    %3 = vector.extract_strided_slice %2 {offsets = [0, 0], sizes = [1, 32], strides = [1, 1]} : vector<4x32xf32> to vector<1x32xf32>
    %4 = vector.extract_strided_slice %2 {offsets = [1, 0], sizes = [1, 32], strides = [1, 1]} : vector<4x32xf32> to vector<1x32xf32>
    %5 = vector.extract_strided_slice %2 {offsets = [2, 0], sizes = [1, 32], strides = [1, 1]} : vector<4x32xf32> to vector<1x32xf32>
    %6 = vector.extract_strided_slice %2 {offsets = [3, 0], sizes = [1, 32], strides = [1, 1]} : vector<4x32xf32> to vector<1x32xf32>
    %cst = arith.constant dense<0.000000e+00> : vector<16xf32>
    %7 = vector.multi_reduction <add>, %1, %cst [1] : vector<16x32xf32> to vector<16xf32>
    %8 = vector.shape_cast %7 : vector<16xf32> to vector<16x1xf32>
    %cst_4 = arith.constant 3.200000e+01 : f32
    %9 = vector.broadcast %cst_4 : f32 to vector<16x1xf32>
    %10 = arith.divf %8, %9 : vector<16x1xf32>
    %11 = vector.broadcast %10 : vector<16x1xf32> to vector<16x32xf32>
    %12 = arith.subf %1, %11 : vector<16x32xf32>
    %13 = arith.mulf %12, %12 : vector<16x32xf32>
    %cst_5 = arith.constant dense<0.000000e+00> : vector<16xf32>
    %14 = vector.multi_reduction <add>, %13, %cst_5 [1] : vector<16x32xf32> to vector<16xf32>
    %15 = vector.shape_cast %14 : vector<16xf32> to vector<16x1xf32>
    %cst_6 = arith.constant 3.200000e+01 : f32
    %16 = vector.broadcast %cst_6 : f32 to vector<16x1xf32>
    %17 = arith.divf %15, %16 : vector<16x1xf32>
    %cst_7 = arith.constant 9.99999974E-6 : f32
    %18 = vector.broadcast %cst_7 : f32 to vector<16x1xf32>
    %19 = arith.addf %17, %18 : vector<16x1xf32>
    %20 = math.rsqrt %19 : vector<16x1xf32>
    %21 = vector.broadcast %20 : vector<16x1xf32> to vector<16x32xf32>
    %22 = arith.mulf %12, %21 : vector<16x32xf32>
    %23 = vector.broadcast %3 : vector<1x32xf32> to vector<16x32xf32>
    %24 = arith.mulf %22, %23 : vector<16x32xf32>
    %25 = vector.broadcast %4 : vector<1x32xf32> to vector<16x32xf32>
    %26 = arith.addf %24, %25 : vector<16x32xf32>
    %c0_8 = arith.constant 0 : index
    %c0_9 = arith.constant 0 : index
    %27 = vector.load %arg5[%c0_8, %c0_9] : memref<32x96xf32, #tpu.memory_space<vmem>>, vector<32x96xf32>
    %cst_10 = arith.constant dense<0.000000e+00> : vector<16x96xf32>
    %28 = tpu.matmul %26, %27, %cst_10 {dimension_numbers = #tpu.dot_dimension_numbers<[1], [0], [0], [1], [0, 0, 1, 1], [], []>, precision = #tpu.contract_precision<fp32>} : vector<16x32xf32>, vector<32x96xf32>, vector<16x96xf32> -> vector<16x96xf32>
    %c0_11 = arith.constant 0 : index
    %c0_12 = arith.constant 0 : index
    %29 = vector.load %arg6[%c0_11, %c0_12] : memref<1x96xf32, #tpu.memory_space<vmem>>, vector<1x96xf32>
    %30 = vector.broadcast %29 : vector<1x96xf32> to vector<16x96xf32>
    %31 = arith.addf %28, %30 : vector<16x96xf32>
    %cst_13 = arith.constant 0.000000e+00 : f32
    %32 = vector.broadcast %cst_13 : f32 to vector<16x32xf32>
    %33 = vector.extract_strided_slice %31 {offsets = [0, 0], sizes = [16, 16], strides = [1, 1]} : vector<16x96xf32> to vector<16x16xf32>
    %cst_14 = arith.constant 2.500000e-01 : f32
    %34 = vector.broadcast %cst_14 : f32 to vector<16x16xf32>
    %35 = arith.mulf %33, %34 : vector<16x16xf32>
    %36 = vector.extract_strided_slice %31 {offsets = [0, 32], sizes = [16, 16], strides = [1, 1]} : vector<16x96xf32> to vector<16x16xf32>
    %37 = vector.extract_strided_slice %31 {offsets = [0, 64], sizes = [16, 16], strides = [1, 1]} : vector<16x96xf32> to vector<16x16xf32>
    %cst_15 = arith.constant dense<0.000000e+00> : vector<16x16xf32>
    %38 = tpu.matmul %35, %36, %cst_15 {dimension_numbers = #tpu.dot_dimension_numbers<[1], [1], [0], [0], [0, 0, 1, 0], [], []>, precision = #tpu.contract_precision<fp32>} : vector<16x16xf32>, vector<16x16xf32>, vector<16x16xf32> -> vector<16x16xf32>
    %c0_16 = arith.constant 0 : index
    %c0_17 = arith.constant 0 : index
    %c0_18 = arith.constant 0 : index
    %c0_19 = arith.constant 0 : index
    %39 = vector.load %arg3[%c0_16, %c0_17, %c0_18, %c0_19] : memref<1x2x16x16xf32, #tpu.memory_space<vmem>>, vector<1x1x16x16xf32>
    %40 = vector.shape_cast %39 : vector<1x1x16x16xf32> to vector<16x16xf32>
    %41 = arith.addf %38, %40 : vector<16x16xf32>
    %cst_20 = arith.constant dense<0xFF800000> : vector<16xf32>
    %42 = vector.multi_reduction <maximumf>, %41, %cst_20 [1] : vector<16x16xf32> to vector<16xf32>
    %43 = vector.shape_cast %42 : vector<16xf32> to vector<16x1xf32>
    %44 = vector.broadcast %43 : vector<16x1xf32> to vector<16x16xf32>
    %45 = arith.subf %41, %44 : vector<16x16xf32>
    %46 = math.exp %45 : vector<16x16xf32>
    %cst_21 = arith.constant dense<0.000000e+00> : vector<16xf32>
    %47 = vector.multi_reduction <add>, %46, %cst_21 [1] : vector<16x16xf32> to vector<16xf32>
    %48 = vector.shape_cast %47 : vector<16xf32> to vector<16x1xf32>
    %49 = vector.broadcast %48 : vector<16x1xf32> to vector<16x16xf32>
    %50 = arith.divf %46, %49 : vector<16x16xf32>
    %cst_22 = arith.constant dense<0.000000e+00> : vector<16x16xf32>
    %51 = tpu.matmul %50, %37, %cst_22 {dimension_numbers = #tpu.dot_dimension_numbers<[1], [0], [0], [1], [0, 0, 1, 1], [], []>, precision = #tpu.contract_precision<fp32>} : vector<16x16xf32>, vector<16x16xf32>, vector<16x16xf32> -> vector<16x16xf32>
    %c0_23 = arith.constant 0 : index
    %c0_24 = arith.constant 0 : index
    %52 = vector.load %arg7[%c0_23, %c0_24] : memref<32x32xf32, #tpu.memory_space<vmem>>, vector<16x32xf32>
    %cst_25 = arith.constant dense<0.000000e+00> : vector<16x32xf32>
    %53 = tpu.matmul %51, %52, %cst_25 {dimension_numbers = #tpu.dot_dimension_numbers<[1], [0], [0], [1], [0, 0, 1, 1], [], []>, precision = #tpu.contract_precision<fp32>} : vector<16x16xf32>, vector<16x32xf32>, vector<16x32xf32> -> vector<16x32xf32>
    %54 = arith.addf %32, %53 : vector<16x32xf32>
    %55 = vector.extract_strided_slice %31 {offsets = [0, 16], sizes = [16, 16], strides = [1, 1]} : vector<16x96xf32> to vector<16x16xf32>
    %cst_26 = arith.constant 2.500000e-01 : f32
    %56 = vector.broadcast %cst_26 : f32 to vector<16x16xf32>
    %57 = arith.mulf %55, %56 : vector<16x16xf32>
    %58 = vector.extract_strided_slice %31 {offsets = [0, 48], sizes = [16, 16], strides = [1, 1]} : vector<16x96xf32> to vector<16x16xf32>
    %59 = vector.extract_strided_slice %31 {offsets = [0, 80], sizes = [16, 16], strides = [1, 1]} : vector<16x96xf32> to vector<16x16xf32>
    %cst_27 = arith.constant dense<0.000000e+00> : vector<16x16xf32>
    %60 = tpu.matmul %57, %58, %cst_27 {dimension_numbers = #tpu.dot_dimension_numbers<[1], [1], [0], [0], [0, 0, 1, 0], [], []>, precision = #tpu.contract_precision<fp32>} : vector<16x16xf32>, vector<16x16xf32>, vector<16x16xf32> -> vector<16x16xf32>
    %c0_28 = arith.constant 0 : index
    %c1 = arith.constant 1 : index
    %c0_29 = arith.constant 0 : index
    %c0_30 = arith.constant 0 : index
    %61 = vector.load %arg3[%c0_28, %c1, %c0_29, %c0_30] : memref<1x2x16x16xf32, #tpu.memory_space<vmem>>, vector<1x1x16x16xf32>
    %62 = vector.shape_cast %61 : vector<1x1x16x16xf32> to vector<16x16xf32>
    %63 = arith.addf %60, %62 : vector<16x16xf32>
    %cst_31 = arith.constant dense<0xFF800000> : vector<16xf32>
    %64 = vector.multi_reduction <maximumf>, %63, %cst_31 [1] : vector<16x16xf32> to vector<16xf32>
    %65 = vector.shape_cast %64 : vector<16xf32> to vector<16x1xf32>
    %66 = vector.broadcast %65 : vector<16x1xf32> to vector<16x16xf32>
    %67 = arith.subf %63, %66 : vector<16x16xf32>
    %68 = math.exp %67 : vector<16x16xf32>
    %cst_32 = arith.constant dense<0.000000e+00> : vector<16xf32>
    %69 = vector.multi_reduction <add>, %68, %cst_32 [1] : vector<16x16xf32> to vector<16xf32>
    %70 = vector.shape_cast %69 : vector<16xf32> to vector<16x1xf32>
    %71 = vector.broadcast %70 : vector<16x1xf32> to vector<16x16xf32>
    %72 = arith.divf %68, %71 : vector<16x16xf32>
    %cst_33 = arith.constant dense<0.000000e+00> : vector<16x16xf32>
    %73 = tpu.matmul %72, %59, %cst_33 {dimension_numbers = #tpu.dot_dimension_numbers<[1], [0], [0], [1], [0, 0, 1, 1], [], []>, precision = #tpu.contract_precision<fp32>} : vector<16x16xf32>, vector<16x16xf32>, vector<16x16xf32> -> vector<16x16xf32>
    %c16 = arith.constant 16 : index
    %c0_34 = arith.constant 0 : index
    %74 = vector.load %arg7[%c16, %c0_34] : memref<32x32xf32, #tpu.memory_space<vmem>>, vector<16x32xf32>
    %cst_35 = arith.constant dense<0.000000e+00> : vector<16x32xf32>
    %75 = tpu.matmul %73, %74, %cst_35 {dimension_numbers = #tpu.dot_dimension_numbers<[1], [0], [0], [1], [0, 0, 1, 1], [], []>, precision = #tpu.contract_precision<fp32>} : vector<16x16xf32>, vector<16x32xf32>, vector<16x32xf32> -> vector<16x32xf32>
    %76 = arith.addf %54, %75 : vector<16x32xf32>
    %77 = arith.addf %1, %76 : vector<16x32xf32>
    %c0_36 = arith.constant 0 : index
    %c0_37 = arith.constant 0 : index
    %78 = vector.load %arg8[%c0_36, %c0_37] : memref<1x32xf32, #tpu.memory_space<vmem>>, vector<1x32xf32>
    %79 = vector.broadcast %78 : vector<1x32xf32> to vector<16x32xf32>
    %80 = arith.addf %77, %79 : vector<16x32xf32>
    %cst_38 = arith.constant dense<0.000000e+00> : vector<16xf32>
    %81 = vector.multi_reduction <add>, %80, %cst_38 [1] : vector<16x32xf32> to vector<16xf32>
    %82 = vector.shape_cast %81 : vector<16xf32> to vector<16x1xf32>
    %cst_39 = arith.constant 3.200000e+01 : f32
    %83 = vector.broadcast %cst_39 : f32 to vector<16x1xf32>
    %84 = arith.divf %82, %83 : vector<16x1xf32>
    %85 = vector.broadcast %84 : vector<16x1xf32> to vector<16x32xf32>
    %86 = arith.subf %80, %85 : vector<16x32xf32>
    %87 = arith.mulf %86, %86 : vector<16x32xf32>
    %cst_40 = arith.constant dense<0.000000e+00> : vector<16xf32>
    %88 = vector.multi_reduction <add>, %87, %cst_40 [1] : vector<16x32xf32> to vector<16xf32>
    %89 = vector.shape_cast %88 : vector<16xf32> to vector<16x1xf32>
    %cst_41 = arith.constant 3.200000e+01 : f32
    %90 = vector.broadcast %cst_41 : f32 to vector<16x1xf32>
    %91 = arith.divf %89, %90 : vector<16x1xf32>
    %cst_42 = arith.constant 9.99999974E-6 : f32
    %92 = vector.broadcast %cst_42 : f32 to vector<16x1xf32>
    %93 = arith.addf %91, %92 : vector<16x1xf32>
    %94 = math.rsqrt %93 : vector<16x1xf32>
    %95 = vector.broadcast %94 : vector<16x1xf32> to vector<16x32xf32>
    %96 = arith.mulf %86, %95 : vector<16x32xf32>
    %97 = vector.broadcast %5 : vector<1x32xf32> to vector<16x32xf32>
    %98 = arith.mulf %96, %97 : vector<16x32xf32>
    %99 = vector.broadcast %6 : vector<1x32xf32> to vector<16x32xf32>
    %100 = arith.addf %98, %99 : vector<16x32xf32>
    %c0_43 = arith.constant 0 : index
    %c0_44 = arith.constant 0 : index
    %101 = vector.load %arg9[%c0_43, %c0_44] : memref<32x128xf32, #tpu.memory_space<vmem>>, vector<32x128xf32>
    %cst_45 = arith.constant dense<0.000000e+00> : vector<16x128xf32>
    %102 = tpu.matmul %100, %101, %cst_45 {dimension_numbers = #tpu.dot_dimension_numbers<[1], [0], [0], [1], [0, 0, 1, 1], [], []>, precision = #tpu.contract_precision<fp32>} : vector<16x32xf32>, vector<32x128xf32>, vector<16x128xf32> -> vector<16x128xf32>
    %c0_46 = arith.constant 0 : index
    %c0_47 = arith.constant 0 : index
    %103 = vector.load %arg10[%c0_46, %c0_47] : memref<1x128xf32, #tpu.memory_space<vmem>>, vector<1x128xf32>
    %104 = vector.broadcast %103 : vector<1x128xf32> to vector<16x128xf32>
    %105 = arith.addf %102, %104 : vector<16x128xf32>
    %106 = arith.mulf %105, %105 : vector<16x128xf32>
    %107 = arith.mulf %105, %106 : vector<16x128xf32>
    %cst_48 = arith.constant 4.471500e-02 : f32
    %108 = vector.broadcast %cst_48 : f32 to vector<16x128xf32>
    %109 = arith.mulf %108, %107 : vector<16x128xf32>
    %110 = arith.addf %105, %109 : vector<16x128xf32>
    %cst_49 = arith.constant 0.797884583 : f32
    %111 = vector.broadcast %cst_49 : f32 to vector<16x128xf32>
    %112 = arith.mulf %111, %110 : vector<16x128xf32>
    %113 = math.tanh %112 : vector<16x128xf32>
    %cst_50 = arith.constant 1.000000e+00 : f32
    %114 = vector.broadcast %cst_50 : f32 to vector<16x128xf32>
    %115 = arith.addf %114, %113 : vector<16x128xf32>
    %cst_51 = arith.constant 5.000000e-01 : f32
    %116 = vector.broadcast %cst_51 : f32 to vector<16x128xf32>
    %117 = arith.mulf %116, %115 : vector<16x128xf32>
    %118 = arith.mulf %105, %117 : vector<16x128xf32>
    %c0_52 = arith.constant 0 : index
    %c0_53 = arith.constant 0 : index
    %119 = vector.load %arg11[%c0_52, %c0_53] : memref<128x32xf32, #tpu.memory_space<vmem>>, vector<128x32xf32>
    %cst_54 = arith.constant dense<0.000000e+00> : vector<16x32xf32>
    %120 = tpu.matmul %118, %119, %cst_54 {dimension_numbers = #tpu.dot_dimension_numbers<[1], [0], [0], [1], [0, 0, 1, 1], [], []>, precision = #tpu.contract_precision<fp32>} : vector<16x128xf32>, vector<128x32xf32>, vector<16x32xf32> -> vector<16x32xf32>
    %c0_55 = arith.constant 0 : index
    %c0_56 = arith.constant 0 : index
    %121 = vector.load %arg12[%c0_55, %c0_56] : memref<1x32xf32, #tpu.memory_space<vmem>>, vector<1x32xf32>
    %122 = vector.broadcast %121 : vector<1x32xf32> to vector<16x32xf32>
    %123 = arith.addf %120, %122 : vector<16x32xf32>
    %124 = arith.addf %80, %123 : vector<16x32xf32>
    %c0_57 = arith.constant 0 : index
    %c0_58 = arith.constant 0 : index
    %c0_59 = arith.constant 0 : index
    %125 = vector.load %arg13[%c0_57, %c0_58, %c0_59] : memref<1x16x32xf32, #tpu.memory_space<vmem>>, vector<1x16x32xf32>
    %126 = vector.shape_cast %125 : vector<1x16x32xf32> to vector<16x32xf32>
    %127 = vector.shape_cast %124 : vector<16x32xf32> to vector<1x16x32xf32>
    tpu.vector_store %arg13[%c0_57, %c0_58, %c0_59], %127 {strides = array<i32>} : memref<1x16x32xf32, #tpu.memory_space<vmem>>, vector<1x16x32xf32>,
    return
  }
  func.func @transform_0(%arg0: i32, %arg1: i32) -> (i32, i32, i32) {
    %c0_i32 = arith.constant 0 : i32
    %c0_i32_0 = arith.constant 0 : i32
    return %arg1, %arg0, %c0_i32 : i32, i32, i32
  }
  func.func @transform_1(%arg0: i32, %arg1: i32) -> (i32, i32, i32, i32) {
    %c0_i32 = arith.constant 0 : i32
    %c0_i32_0 = arith.constant 0 : i32
    %c0_i32_1 = arith.constant 0 : i32
    %c0_i32_2 = arith.constant 0 : i32
    return %arg0, %c0_i32, %c0_i32_0, %c0_i32_1 : i32, i32, i32, i32
  }
  func.func @transform_2(%arg0: i32, %arg1: i32) -> (i32, i32) {
    %c0_i32 = arith.constant 0 : i32
    %c0_i32_0 = arith.constant 0 : i32
    %c0_i32_1 = arith.constant 0 : i32
    return %c0_i32, %c0_i32_0 : i32, i32
  }
  func.func @transform_3(%arg0: i32, %arg1: i32) -> (i32, i32) {
    %c0_i32 = arith.constant 0 : i32
    %c0_i32_0 = arith.constant 0 : i32
    %c0_i32_1 = arith.constant 0 : i32
    return %c0_i32, %c0_i32_0 : i32, i32
  }
  func.func @transform_4(%arg0: i32, %arg1: i32) -> (i32, i32) {
    %c0_i32 = arith.constant 0 : i32
    %c0_i32_0 = arith.constant 0 : i32
    %c0_i32_1 = arith.constant 0 : i32
    return %c0_i32, %c0_i32_0 : i32, i32
  }
  func.func @transform_5(%arg0: i32, %arg1: i32) -> (i32, i32) {
    %c0_i32 = arith.constant 0 : i32
    %c0_i32_0 = arith.constant 0 : i32
    %c0_i32_1 = arith.constant 0 : i32
    return %c0_i32, %c0_i32_0 : i32, i32
  }
  func.func @transform_6(%arg0: i32, %arg1: i32) -> (i32, i32) {
    %c0_i32 = arith.constant 0 : i32
    %c0_i32_0 = arith.constant 0 : i32
    %c0_i32_1 = arith.constant 0 : i32
    return %c0_i32, %c0_i32_0 : i32, i32
  }
  func.func @transform_7(%arg0: i32, %arg1: i32) -> (i32, i32) {
    %c0_i32 = arith.constant 0 : i32
    %c0_i32_0 = arith.constant 0 : i32
    %c0_i32_1 = arith.constant 0 : i32
    return %c0_i32, %c0_i32_0 : i32, i32
  }
  func.func @transform_8(%arg0: i32, %arg1: i32) -> (i32, i32) {
    %c0_i32 = arith.constant 0 : i32
    %c0_i32_0 = arith.constant 0 : i32
    %c0_i32_1 = arith.constant 0 : i32
    return %c0_i32, %c0_i32_0 : i32, i32
  }
  func.func @transform_9(%arg0: i32, %arg1: i32) -> (i32, i32) {
    %c0_i32 = arith.constant 0 : i32
    %c0_i32_0 = arith.constant 0 : i32
    %c0_i32_1 = arith.constant 0 : i32
    return %c0_i32, %c0_i32_0 : i32, i32
  }
  func.func @transform_10(%arg0: i32, %arg1: i32) -> (i32, i32) {
    %c0_i32 = arith.constant 0 : i32
    %c0_i32_0 = arith.constant 0 : i32
    %c0_i32_1 = arith.constant 0 : i32
    return %c0_i32, %c0_i32_0 : i32, i32
  }
  func.func @transform_11(%arg0: i32, %arg1: i32) -> (i32, i32, i32) {
    %c0_i32 = arith.constant 0 : i32
    %c0_i32_0 = arith.constant 0 : i32
    return %arg1, %arg0, %c0_i32 : i32, i32, i32
  }
}

</mosaic_0001>

<llo_original>
// kernel: basic_layer_forward.2
$region0: #{basic_layer_forward.2}
  #allocation0 [shape = 'u32[]', space=smem, size = 0x4, offset = 0x4, fixed_abs, tag = 'smem constant byte address 0x4 - core index']
  #allocation1 [shape = 'u32[144,128]{1,0:T(1,128)}', space=vmem, size = 0x12000, scoped, tag = 'internal scratch']
  %s0 = inlined_call_operand.vmem [shape: f32[2,16,32], index: 0, kind: input, shape index: {}]
  %s1 = inlined_call_operand.vmem [shape: f32[1,2,16,16], index: 1, kind: input, shape index: {}]
  %s2 = inlined_call_operand.vmem [shape: f32[4,32], index: 2, kind: input, shape index: {}]
  %s3 = inlined_call_operand.vmem [shape: f32[32,96], index: 3, kind: input, shape index: {}]
  %s4 = inlined_call_operand.vmem [shape: f32[1,96], index: 4, kind: input, shape index: {}]
  %s5 = inlined_call_operand.vmem [shape: f32[32,32], index: 5, kind: input, shape index: {}]
  %s6 = inlined_call_operand.vmem [shape: f32[1,32], index: 6, kind: input, shape index: {}]
  %s7 = inlined_call_operand.vmem [shape: f32[32,128], index: 7, kind: input, shape index: {}]
  %s8 = inlined_call_operand.vmem [shape: f32[1,128], index: 8, kind: input, shape index: {}]
  %s9 = inlined_call_operand.vmem [shape: f32[128,32], index: 9, kind: input, shape index: {}]
  %s10 = inlined_call_operand.vmem [shape: f32[1,32], index: 10, kind: input, shape index: {}]
  %s11 = inlined_call_operand.vmem [shape: f32[2,16,32], index: 11, kind: output, shape index: {}]
  %s12 = sld [smem:[#allocation0]]
  $region77: #{basic_layer_forward.2} parent=0
    _
  %s14 = ssub.s32 1, %s12
  %s15 = scalar_select 0, %s14, %s12
  loop: start=0, step=1, limit=4
  $region2: #{basic_layer_forward.2} parent=0 // loop_pre_header
    _
  $region3: #{basic_layer_forward.2} parent=0 // loop_header
    %s17 = sphi 0, %s21
    %p18 = scmp.ge.s32.totalorder %s17, 4
    %s24 = sphi 0, %s36
    %s25 = sphi 0, %s32
    %s26 = sphi 0, %s24
    %s27 = sphi 0, %s25
    %s28 = sphi 0, %s26
    %s29 = sphi 0, %s27
    %s41 = sphi 0, %s43
    %s44 = sphi 0, %s41
    %s45 = sphi 0, %s44
    %s61 = sphi 0, %s45
    %s67 = sphi 0, %s69
    %s70 = sphi 0, %s67
    %s71 = sphi 0, %s70
    %s87 = sphi 0, %s71
    %s91 = sphi 0, %s91
    %s93 = sphi 0, %s91
    %s94 = sphi 0, %s93
    %s108 = sphi 0, %s94
    %s112 = sphi 0, %s112
    %s114 = sphi 0, %s112
    %s115 = sphi 0, %s114
    %s129 = sphi 0, %s115
    %s133 = sphi 0, %s133
    %s135 = sphi 0, %s133
    %s136 = sphi 0, %s135
    %s150 = sphi 0, %s136
    %s154 = sphi 0, %s154
    %s156 = sphi 0, %s154
    %s157 = sphi 0, %s156
    %s171 = sphi 0, %s157
    %s175 = sphi 0, %s175
    %s177 = sphi 0, %s175
    %s178 = sphi 0, %s177
    %s192 = sphi 0, %s178
    %s196 = sphi 0, %s196
    %s198 = sphi 0, %s196
    %s199 = sphi 0, %s198
    %s213 = sphi 0, %s199
    %s217 = sphi 0, %s217
    %s219 = sphi 0, %s217
    %s220 = sphi 0, %s219
    %s234 = sphi 0, %s220
    %s238 = sphi 0, %s238
    %s240 = sphi 0, %s238
    %s241 = sphi 0, %s240
    %s255 = sphi 0, %s241
    %s259 = sphi 0, %s259
    %s261 = sphi 0, %s259
    %s262 = sphi 0, %s261
    %s276 = sphi 0, %s262
    %s284 = sphi 0, %s286
    %s287 = sphi 0, %s284
    %s288 = sphi 0, %s287
    %s304 = sphi 0, %s288
  $region4: #{basic_layer_forward.2} parent=0 // loop_header_branch
    %20 = sbr.rel (%p18) target = $region8
  $region5: #{basic_layer_forward.2} parent=0 // loop_body
    %s22 = ssub.s32 %s17, 1
    %s23 = ssub.s32 %s17, 2
    %s30 = sadd.s32 1, %s25
    %p31 = scmp.ge.s32.totalorder %s30, 2
    %s32 = scalar_select %p31, 0, %s30
    %s33 = sadd.s32 1, %s24
    %s34 = scalar_select %p31, %s33, %s24
    %p35 = scmp.ge.s32.totalorder %s34, 1
    %s36 = scalar_select %p35, 0, %s34
    %s37 = ssub.s32 %s25, %s32
    %s38 = ssub.s32 %s24, %s36
    %s39 = sor.u32 %s37, %s38
    %p40 = scmp.eq.s32.totalorder %s39, 0
    %s42 = sadd.s32 %s41, 1
    %s43 = scalar_select %p40, %s41, %s42
    %p46 = pneg %p40
    %p47 = scmp.eq.s32.totalorder %s17, 1
    %p48 = por %p46, %p47
    %p49 = scmp.ne.s32.totalorder %s41, %s44
    %p50 = scmp.eq.s32.totalorder %s17, 0
    %p51 = por %p49, %p50
    %p52 = scmp.ne.s32.totalorder %s41, %s44
    %p53 = scmp.eq.s32.totalorder %s22, 1
    %p54 = por %p52, %p53
    %p55 = scmp.ne.s32.totalorder %s44, %s45
    %p56 = scmp.eq.s32.totalorder %s22, 0
    %p57 = por %p55, %p56
    %p58 = scmp.ne.s32.totalorder %s44, %s45
    %p59 = scmp.eq.s32.totalorder %s23, 1
    %p60 = por %p58, %p59
    %p62 = scmp.ne.s32.totalorder %s45, %s61
    %p63 = scmp.eq.s32.totalorder %s23, 0
    %p64 = por %p62, %p63
    %s65 = ssub.s32 %s24, %s36
    %p66 = scmp.eq.s32.totalorder %s65, 0
    %s68 = sadd.s32 %s67, 1
    %s69 = scalar_select %p66, %s67, %s68
    %p72 = pneg %p66
    %p73 = scmp.eq.s32.totalorder %s17, 1
    %p74 = por %p72, %p73
    %p75 = scmp.ne.s32.totalorder %s67, %s70
    %p76 = scmp.eq.s32.totalorder %s17, 0
    %p77 = por %p75, %p76
    %p78 = scmp.ne.s32.totalorder %s67, %s70
    %p79 = scmp.eq.s32.totalorder %s22, 1
    %p80 = por %p78, %p79
    %p81 = scmp.ne.s32.totalorder %s70, %s71
    %p82 = scmp.eq.s32.totalorder %s22, 0
    %p83 = por %p81, %p82
    %p84 = scmp.ne.s32.totalorder %s70, %s71
    %p85 = scmp.eq.s32.totalorder %s23, 1
    %p86 = por %p84, %p85
    %p88 = scmp.ne.s32.totalorder %s71, %s87
    %p89 = scmp.eq.s32.totalorder %s23, 0
    %p90 = por %p88, %p89
    %s92 = sadd.s32 %s91, 1
    %p95 = scmp.eq.s32.totalorder %s17, 1
    %p96 = scmp.ne.s32.totalorder %s91, %s93
    %p97 = scmp.eq.s32.totalorder %s17, 0
    %p98 = por %p96, %p97
    %p99 = scmp.ne.s32.totalorder %s91, %s93
    %p100 = scmp.eq.s32.totalorder %s22, 1
    %p101 = por %p99, %p100
    %p102 = scmp.ne.s32.totalorder %s93, %s94
    %p103 = scmp.eq.s32.totalorder %s22, 0
    %p104 = por %p102, %p103
    %p105 = scmp.ne.s32.totalorder %s93, %s94
    %p106 = scmp.eq.s32.totalorder %s23, 1
    %p107 = por %p105, %p106
    %p109 = scmp.ne.s32.totalorder %s94, %s108
    %p110 = scmp.eq.s32.totalorder %s23, 0
    %p111 = por %p109, %p110
    %s113 = sadd.s32 %s112, 1
    %p116 = scmp.eq.s32.totalorder %s17, 1
    %p117 = scmp.ne.s32.totalorder %s112, %s114
    %p118 = scmp.eq.s32.totalorder %s17, 0
    %p119 = por %p117, %p118
    %p120 = scmp.ne.s32.totalorder %s112, %s114
    %p121 = scmp.eq.s32.totalorder %s22, 1
    %p122 = por %p120, %p121
    %p123 = scmp.ne.s32.totalorder %s114, %s115
    %p124 = scmp.eq.s32.totalorder %s22, 0
    %p125 = por %p123, %p124
    %p126 = scmp.ne.s32.totalorder %s114, %s115
    %p127 = scmp.eq.s32.totalorder %s23, 1
    %p128 = por %p126, %p127
    %p130 = scmp.ne.s32.totalorder %s115, %s129
    %p131 = scmp.eq.s32.totalorder %s23, 0
    %p132 = por %p130, %p131
    %s134 = sadd.s32 %s133, 1
    %p137 = scmp.eq.s32.totalorder %s17, 1
    %p138 = scmp.ne.s32.totalorder %s133, %s135
    %p139 = scmp.eq.s32.totalorder %s17, 0
    %p140 = por %p138, %p139
    %p141 = scmp.ne.s32.totalorder %s133, %s135
    %p142 = scmp.eq.s32.totalorder %s22, 1
    %p143 = por %p141, %p142
    %p144 = scmp.ne.s32.totalorder %s135, %s136
    %p145 = scmp.eq.s32.totalorder %s22, 0
    %p146 = por %p144, %p145
    %p147 = scmp.ne.s32.totalorder %s135, %s136
    %p148 = scmp.eq.s32.totalorder %s23, 1
    %p149 = por %p147, %p148
    %p151 = scmp.ne.s32.totalorder %s136, %s150
    %p152 = scmp.eq.s32.totalorder %s23, 0
    %p153 = por %p151, %p152
    %s155 = sadd.s32 %s154, 1
    %p158 = scmp.eq.s32.totalorder %s17, 1
    %p159 = scmp.ne.s32.totalorder %s154, %s156
    %p160 = scmp.eq.s32.totalorder %s17, 0
    %p161 = por %p159, %p160
    %p162 = scmp.ne.s32.totalorder %s154, %s156
    %p163 = scmp.eq.s32.totalorder %s22, 1
    %p164 = por %p162, %p163
    %p165 = scmp.ne.s32.totalorder %s156, %s157
    %p166 = scmp.eq.s32.totalorder %s22, 0
    %p167 = por %p165, %p166
    %p168 = scmp.ne.s32.totalorder %s156, %s157
    %p169 = scmp.eq.s32.totalorder %s23, 1
    %p170 = por %p168, %p169
    %p172 = scmp.ne.s32.totalorder %s157, %s171
    %p173 = scmp.eq.s32.totalorder %s23, 0
    %p174 = por %p172, %p173
    %s176 = sadd.s32 %s175, 1
    %p179 = scmp.eq.s32.totalorder %s17, 1
    %p180 = scmp.ne.s32.totalorder %s175, %s177
    %p181 = scmp.eq.s32.totalorder %s17, 0
    %p182 = por %p180, %p181
    %p183 = scmp.ne.s32.totalorder %s175, %s177
    %p184 = scmp.eq.s32.totalorder %s22, 1
    %p185 = por %p183, %p184
    %p186 = scmp.ne.s32.totalorder %s177, %s178
    %p187 = scmp.eq.s32.totalorder %s22, 0
    %p188 = por %p186, %p187
    %p189 = scmp.ne.s32.totalorder %s177, %s178
    %p190 = scmp.eq.s32.totalorder %s23, 1
    %p191 = por %p189, %p190
    %p193 = scmp.ne.s32.totalorder %s178, %s192
    %p194 = scmp.eq.s32.totalorder %s23, 0
    %p195 = por %p193, %p194
    %s197 = sadd.s32 %s196, 1
    %p200 = scmp.eq.s32.totalorder %s17, 1
    %p201 = scmp.ne.s32.totalorder %s196, %s198
    %p202 = scmp.eq.s32.totalorder %s17, 0
    %p203 = por %p201, %p202
    %p204 = scmp.ne.s32.totalorder %s196, %s198
    %p205 = scmp.eq.s32.totalorder %s22, 1
    %p206 = por %p204, %p205
    %p207 = scmp.ne.s32.totalorder %s198, %s199
    %p208 = scmp.eq.s32.totalorder %s22, 0
    %p209 = por %p207, %p208
    %p210 = scmp.ne.s32.totalorder %s198, %s199
    %p211 = scmp.eq.s32.totalorder %s23, 1
    %p212 = por %p210, %p211
    %p214 = scmp.ne.s32.totalorder %s199, %s213
    %p215 = scmp.eq.s32.totalorder %s23, 0
    %p216 = por %p214, %p215
    %s218 = sadd.s32 %s217, 1
    %p221 = scmp.eq.s32.totalorder %s17, 1
    %p222 = scmp.ne.s32.totalorder %s217, %s219
    %p223 = scmp.eq.s32.totalorder %s17, 0
    %p224 = por %p222, %p223
    %p225 = scmp.ne.s32.totalorder %s217, %s219
    %p226 = scmp.eq.s32.totalorder %s22, 1
    %p227 = por %p225, %p226
    %p228 = scmp.ne.s32.totalorder %s219, %s220
    %p229 = scmp.eq.s32.totalorder %s22, 0
    %p230 = por %p228, %p229
    %p231 = scmp.ne.s32.totalorder %s219, %s220
    %p232 = scmp.eq.s32.totalorder %s23, 1
    %p233 = por %p231, %p232
    %p235 = scmp.ne.s32.totalorder %s220, %s234
    %p236 = scmp.eq.s32.totalorder %s23, 0
    %p237 = por %p235, %p236
    %s239 = sadd.s32 %s238, 1
    %p242 = scmp.eq.s32.totalorder %s17, 1
    %p243 = scmp.ne.s32.totalorder %s238, %s240
    %p244 = scmp.eq.s32.totalorder %s17, 0
    %p245 = por %p243, %p244
    %p246 = scmp.ne.s32.totalorder %s238, %s240
    %p247 = scmp.eq.s32.totalorder %s22, 1
    %p248 = por %p246, %p247
    %p249 = scmp.ne.s32.totalorder %s240, %s241
    %p250 = scmp.eq.s32.totalorder %s22, 0
    %p251 = por %p249, %p250
    %p252 = scmp.ne.s32.totalorder %s240, %s241
    %p253 = scmp.eq.s32.totalorder %s23, 1
    %p254 = por %p252, %p253
    %p256 = scmp.ne.s32.totalorder %s241, %s255
    %p257 = scmp.eq.s32.totalorder %s23, 0
    %p258 = por %p256, %p257
    %s260 = sadd.s32 %s259, 1
    %p263 = scmp.eq.s32.totalorder %s17, 1
    %p264 = scmp.ne.s32.totalorder %s259, %s261
    %p265 = scmp.eq.s32.totalorder %s17, 0
    %p266 = por %p264, %p265
    %p267 = scmp.ne.s32.totalorder %s259, %s261
    %p268 = scmp.eq.s32.totalorder %s22, 1
    %p269 = por %p267, %p268
    %p270 = scmp.ne.s32.totalorder %s261, %s262
    %p271 = scmp.eq.s32.totalorder %s22, 0
    %p272 = por %p270, %p271
    %p273 = scmp.ne.s32.totalorder %s261, %s262
    %p274 = scmp.eq.s32.totalorder %s23, 1
    %p275 = por %p273, %p274
    %p277 = scmp.ne.s32.totalorder %s262, %s276
    %p278 = scmp.eq.s32.totalorder %s23, 0
    %p279 = por %p277, %p278
    %s280 = ssub.s32 %s25, %s32
    %s281 = ssub.s32 %s24, %s36
    %s282 = sor.u32 %s280, %s281
    %p283 = scmp.eq.s32.totalorder %s282, 0
    %s285 = sadd.s32 %s284, 1
    %s286 = scalar_select %p283, %s284, %s285
    %p289 = pneg %p283
    %p290 = scmp.eq.s32.totalorder %s17, 1
    %p291 = por %p289, %p290
    %p292 = scmp.ne.s32.totalorder %s284, %s287
    %p293 = scmp.eq.s32.totalorder %s17, 0
    %p294 = por %p292, %p293
    %p295 = scmp.ne.s32.totalorder %s284, %s287
    %p296 = scmp.eq.s32.totalorder %s22, 1
    %p297 = por %p295, %p296
    %p298 = scmp.ne.s32.totalorder %s287, %s288
    %p299 = scmp.eq.s32.totalorder %s22, 0
    %p300 = por %p298, %p299
    %p301 = scmp.ne.s32.totalorder %s287, %s288
    %p302 = scmp.eq.s32.totalorder %s23, 1
    %p303 = por %p301, %p302
    %p305 = scmp.ne.s32.totalorder %s288, %s304
    %p306 = scmp.eq.s32.totalorder %s23, 0
    %p307 = por %p305, %p306
    %p308 = scmp.le.s32.totalorder 1, %s17
    %p309 = scmp.lt.s32.totalorder %s17, 3
    %p310 = pnand %p308, %p309
    %p311 = pneg %p310
    // Predicated region
    $region9: #{basic_layer_forward.2} parent=5 // pred_check
      _
    $region10: #{basic_layer_forward.2} parent=5 // pred_check_branch
      %313 = sbr.rel (%p310) target = $region12
    $region11: #{basic_layer_forward.2} parent=5 // pred_region
      %s314 = ssub.s32 %s17, 1
      // Predicated region
      $region13: #{basic_layer_forward.2} parent=11 // pred_check
        %p315 = pneg %p83
      $region14: #{basic_layer_forward.2} parent=11 // pred_check_branch
        %317 = sbr.rel (%p315) target = $region16
      $region15: #{basic_layer_forward.2} parent=11 // pred_region
        %p318 = scmp.lt.s32.totalorder %s26, 0
        %s319 = scalar_select %p318, %s26, 0
        %s320 = smul.addr %s319, 4
        %s321 = smul.addr %s320, 8
        %s322 = scalar_lea.vmem %s1, %s321
      $region16: #{basic_layer_forward.2} parent=11 // pred_fallthru
        _
      // Predicated region
      $region17: #{basic_layer_forward.2} parent=11 // pred_check
        %p323 = pneg %p104
      $region18: #{basic_layer_forward.2} parent=11 // pred_check_branch
        %325 = sbr.rel (%p323) target = $region20
      $region19: #{basic_layer_forward.2} parent=11 // pred_region
        _
      $region20: #{basic_layer_forward.2} parent=11 // pred_fallthru
        _
      // Predicated region
      $region21: #{basic_layer_forward.2} parent=11 // pred_check
        %p326 = pneg %p125
      $region22: #{basic_layer_forward.2} parent=11 // pred_check_branch
        %328 = sbr.rel (%p326) target = $region24
      $region23: #{basic_layer_forward.2} parent=11 // pred_region
        _
      $region24: #{basic_layer_forward.2} parent=11 // pred_fallthru
        _
      // Predicated region
      $region25: #{basic_layer_forward.2} parent=11 // pred_check
        %p329 = pneg %p146
      $region26: #{basic_layer_forward.2} parent=11 // pred_check_branch
        %331 = sbr.rel (%p329) target = $region28
      $region27: #{basic_layer_forward.2} parent=11 // pred_region
        _
      $region28: #{basic_layer_forward.2} parent=11 // pred_fallthru
        _
      // Predicated region
      $region29: #{basic_layer_forward.2} parent=11 // pred_check
        %p332 = pneg %p167
      $region30: #{basic_layer_forward.2} parent=11 // pred_check_branch
        %334 = sbr.rel (%p332) target = $region32
      $region31: #{basic_layer_forward.2} parent=11 // pred_region
        _
      $region32: #{basic_layer_forward.2} parent=11 // pred_fallthru
        _
      // Predicated region
      $region33: #{basic_layer_forward.2} parent=11 // pred_check
        %p335 = pneg %p188
      $region34: #{basic_layer_forward.2} parent=11 // pred_check_branch
        %337 = sbr.rel (%p335) target = $region36
      $region35: #{basic_layer_forward.2} parent=11 // pred_region
        _
      $region36: #{basic_layer_forward.2} parent=11 // pred_fallthru
        _
      // Predicated region
      $region37: #{basic_layer_forward.2} parent=11 // pred_check
        %p338 = pneg %p209
      $region38: #{basic_layer_forward.2} parent=11 // pred_check_branch
        %340 = sbr.rel (%p338) target = $region40
      $region39: #{basic_layer_forward.2} parent=11 // pred_region
        _
      $region40: #{basic_layer_forward.2} parent=11 // pred_fallthru
        _
      // Predicated region
      $region41: #{basic_layer_forward.2} parent=11 // pred_check
        %p341 = pneg %p230
      $region42: #{basic_layer_forward.2} parent=11 // pred_check_branch
        %343 = sbr.rel (%p341) target = $region44
      $region43: #{basic_layer_forward.2} parent=11 // pred_region
        _
      $region44: #{basic_layer_forward.2} parent=11 // pred_fallthru
        _
      // Predicated region
      $region45: #{basic_layer_forward.2} parent=11 // pred_check
        %p344 = pneg %p251
      $region46: #{basic_layer_forward.2} parent=11 // pred_check_branch
        %346 = sbr.rel (%p344) target = $region48
      $region47: #{basic_layer_forward.2} parent=11 // pred_region
        _
      $region48: #{basic_layer_forward.2} parent=11 // pred_fallthru
        _
      // Predicated region
      $region49: #{basic_layer_forward.2} parent=11 // pred_check
        %p347 = pneg %p272
      $region50: #{basic_layer_forward.2} parent=11 // pred_check_branch
        %349 = sbr.rel (%p347) target = $region52
      $region51: #{basic_layer_forward.2} parent=11 // pred_region
        _
      $region52: #{basic_layer_forward.2} parent=11 // pred_fallthru
        _
    $region12: #{basic_layer_forward.2} parent=5 // pred_fallthru
      _
    %p350 = scmp.lt.s32.totalorder %s17, 2
    // Predicated region
    $region53: #{basic_layer_forward.2} parent=5 // pred_check
      %p351 = pneg %p350
    $region54: #{basic_layer_forward.2} parent=5 // pred_check_branch
      %353 = sbr.rel (%p351) target = $region56
    $region55: #{basic_layer_forward.2} parent=5 // pred_region
      // Predicated region
      $region57: #{basic_layer_forward.2} parent=55 // pred_check
        %p354 = pneg %p51
      $region58: #{basic_layer_forward.2} parent=55 // pred_check_branch
        %356 = sbr.rel (%p354) target = $region60
      $region59: #{basic_layer_forward.2} parent=55 // pred_region
        %s357 = smul.u32 2, %s24
        %p358 = scmp.lt.s32.totalorder %s25, 1
        %s359 = scalar_select %p358, %s25, 1
        %p360 = scmp.lt.s32.totalorder %s357, 1
        %s361 = scalar_select %p360, %s357, 1
        %s362 = smul.addr %s359, 2
        %s363 = sadd.s32 %s361, %s362
        %s364 = smul.addr %s363, 8
        %s365 = scalar_lea.vmem %s0, %s364
        %s366 = smul.u32 2, %s24
      $region60: #{basic_layer_forward.2} parent=55 // pred_fallthru
        _
    $region56: #{basic_layer_forward.2} parent=5 // pred_fallthru
      _
    %p367 = scmp.le.s32.totalorder 1, %s17
    %p368 = scmp.lt.s32.totalorder %s17, 3
    %p369 = pnand %p367, %p368
    %p370 = pneg %p369
    // Predicated region
    $region61: #{basic_layer_forward.2} parent=5 // pred_check
      _
    $region62: #{basic_layer_forward.2} parent=5 // pred_check_branch
      %372 = sbr.rel (%p369) target = $region64
    $region63: #{basic_layer_forward.2} parent=5 // pred_region
      %s373 = ssub.s32 %s17, 1
      %s374 = smul.u32 2, %s26
      %p375 = scmp.lt.s32.totalorder %s27, 1
      %s376 = scalar_select %p375, %s27, 1
      %p377 = scmp.lt.s32.totalorder %s374, 1
      %s378 = scalar_select %p377, %s374, 1
      %s379 = smul.addr %s376, 2
      %s380 = sadd.s32 %s378, %s379
      %s381 = smul.addr %s380, 8
      %s382 = scalar_lea.vmem %s0, %s381
      %p383 = pneg %p57
      %p384 = pneg %p54
      %p385 = scmp.lt.s32.totalorder %s26, 0
      %s386 = scalar_select %p385, %s26, 0
      %s387 = smul.addr %s386, 4
      %s388 = smul.addr %s387, 8
      %s389 = scalar_lea.vmem %s1, %s388
      %p390 = pneg %p83
      %p391 = pneg %p80
      %p392 = pneg %p104
      %p393 = pneg %p101
      %p394 = pneg %p125
      %p395 = pneg %p122
      %p396 = pneg %p146
      %p397 = pneg %p143
      %p398 = pneg %p167
      %p399 = pneg %p164
      %p400 = pneg %p188
      %p401 = pneg %p185
      %p402 = pneg %p209
      %p403 = pneg %p206
      %p404 = pneg %p230
      %p405 = pneg %p227
      %p406 = pneg %p251
      %p407 = pneg %p248
      %p408 = pneg %p272
      %p409 = pneg %p269
      %p410 = pneg %p300
      %p411 = pneg %p297
      %s412 = smul.u32 2, %s26
      %p413 = scmp.lt.s32.totalorder %s27, 1
      %s414 = scalar_select %p413, %s27, 1
      %p415 = scmp.lt.s32.totalorder %s412, 1
      %s416 = scalar_select %p415, %s412, 1
      %s417 = smul.addr %s414, 2
      %s418 = sadd.s32 %s416, %s417
      %s419 = smul.addr %s418, 8
      %s420 = scalar_lea.vmem %s11, %s419
      %s421 = smul.u32 2, %s26
      %p422 = scmp.lt.s32.totalorder %s27, 1
      %s423 = scalar_select %p422, %s27, 1
      %p424 = scmp.lt.s32.totalorder %s421, 1
      %s425 = scalar_select %p424, %s421, 1
      %s426 = smul.addr %s423, 2
      %s427 = sadd.s32 %s425, %s426
      %s428 = smul.addr %s427, 8
      %s429 = scalar_lea.vmem %s0, %s428
      %s430 = smul.u32 2, %s26
      %p431 = scmp.lt.s32.totalorder %s26, 0
      %s432 = scalar_select %p431, %s26, 0
      %s433 = smul.addr %s432, 4
      %s434 = smul.addr %s433, 8
      %s435 = scalar_lea.vmem %s1, %s434
      %s436 = smul.u32 2, %s26
      %p437 = scmp.lt.s32.totalorder %s27, 1
      %s438 = scalar_select %p437, %s27, 1
      %p439 = scmp.lt.s32.totalorder %s436, 1
      %s440 = scalar_select %p439, %s436, 1
      %s441 = smul.addr %s438, 2
      %s442 = sadd.s32 %s440, %s441
      %s443 = smul.addr %s442, 8
      %s444 = scalar_lea.vmem %s11, %s443
      %s445 = smul.u32 2, %s26
      %v446 = vld [vmem:[%s429] sm:$0xff]
      %v447 = vld [vmem:[%s429 + $0x8] sm:$0xff]
      %v448 = vld [vmem:[%s2] sm:$0xf]
      %vm449 = vcmask 261120
      %v450 = vsel %vm449, %v446, 0.0
      %451 = vadd.xlane.f32.xlu0 %v450
      %v452 = vpop.xlane.xlu0 %451
      %v453 = vsel %vm449, %v447, 0.0
      %454 = vadd.xlane.f32.xlu0 %v453
      %v455 = vpop.xlane.xlu0 %454
      %v456 = vrcp.pop 32.0
      %v457 = vmul.f32 %v452, %v456
      %v458 = vmul.f32 %v455, %v456
      %v459 = vsub.f32 %v446, %v457
      %v460 = vsub.f32 %v447, %v458
      %v461 = vmul.f32 %v459, %v459
      %v462 = vmul.f32 %v460, %v460
      %v463 = vsel %vm449, %v461, 0.0
      %464 = vadd.xlane.f32.xlu0 %v463
      %v465 = vpop.xlane.xlu0 %464
      %v466 = vsel %vm449, %v462, 0.0
      %467 = vadd.xlane.f32.xlu0 %v466
      %v468 = vpop.xlane.xlu0 %467
      %v469 = vmul.f32 %v465, %v456
      %v470 = vmul.f32 %v468, %v456
      %v471 = vadd.f32 %v469, 1e-05
      %v472 = vadd.f32 %v470, 1e-05
      %v473 = vrsqrt.pop %v471
      %v474 = vrsqrt.pop %v472
      %v475 = vmul.f32 %v459, %v473
      %v476 = vmul.f32 %v460, %v474
      %v477 = vlaneseq
      %v478 = vshrl.u32 %v477, 7
      %v479 = vsub.s32 0, %v478
      %v480 = vrot.slane %v448, %v479
      %v481 = vmul.f32 %v475, %v480
      %v482 = vmul.f32 %v476, %v480
      %v483 = vlaneseq
      %v484 = vshrl.u32 %v483, 7
      %v485 = vsub.s32 1, %v484
      %v486 = vrot.slane %v448, %v485
      %v487 = vadd.f32 %v481, %v486
      %v488 = vadd.f32 %v482, %v486
      %v489 = vld [vmem:[%s3] sm:$0xff]
      %v490 = vld [vmem:[%s3 + $0x8] sm:$0xff]
      %v491 = vld [vmem:[%s3 + $0x10] sm:$0xff]
      %v492 = vld [vmem:[%s3 + $0x18] sm:$0xff]
      %v493 = vld [vmem:[%s4] sm:$0x1]
      %v495 = vlaneseq
      %v496 = vshrl.u32 %v495, 7
      %v497 = vsub.s32 0, %v496
      %v498 = vrot.slane %v493, %v497
      %v501 = vsel %vm449, %v487, 0
      %v504 = vsel %vm449, %v488, 0
      %506 = vmatprep.subr.mxu0 0.0
      %507 = vmatpush1.msra.mxu0 0.0
      %508 = vmatprep.subr.mxu0 0.0
      %509 = vmatpush1.msra.mxu0 0.0
      %510 = vmatprep.subr.mxu0 0.0
      %511 = vmatpush1.msra.mxu0 0.0
      %512 = vmatprep.subr.mxu0 0.0
      %513 = vmatpush1.msra.mxu0 0.0
      %514 = vmatprep.subr.mxu0 0.0
      %515 = vmatpush1.msra.mxu0 0.0
      %516 = vmatprep.subr.mxu0 0.0
      %517 = vmatpush1.msra.mxu0 0.0
      %518 = vmatprep.subr.mxu0 0.0
      %519 = vmatpush1.msra.mxu0 0.0
      %520 = vmatprep.subr.mxu0 0.0
      %521 = vmatpush1.msra.mxu0 0.0
      %522 = vmatprep.subr.mxu0 0.0
      %523 = vmatpush1.msra.mxu0 0.0
      %524 = vmatprep.subr.mxu0 0.0
      %525 = vmatpush1.msra.mxu0 0.0
      %526 = vmatprep.subr.mxu0 0.0
      %527 = vmatpush1.msra.mxu0 0.0
      %528 = vmatprep.subr.mxu0 0.0
      %529 = vmatpush1.msra.mxu0 0.0
      %530 = vmatprep.subr.mxu0 0.0
      %v531 = vand.u32 %v492, 4294901760
      %532 = vmatpush1.msra.mxu0 %v531
      %533 = vmatprep.subr.mxu0 0.0
      %v534 = vand.u32 %v491, 4294901760
      %535 = vmatpush1.msra.mxu0 %v534
      %536 = vmatprep.subr.mxu0 0.0
      %v537 = vand.u32 %v490, 4294901760
      %538 = vmatpush1.msra.mxu0 %v537
      %539 = vmatprep.subr.mxu0 0.0
      %v540 = vand.u32 %v489, 4294901760
      %541 = vmatpush1.msra.mxu0 %v540
      %542 = vmatprep.subr.mxu0 0.0
      %543 = vmatpush2.msra.mxu0 0.0
      %544 = vmatprep.subr.mxu0 0.0
      %545 = vmatpush2.msra.mxu0 0.0
      %546 = vmatprep.subr.mxu0 0.0
      %547 = vmatpush2.msra.mxu0 0.0
      %548 = vmatprep.subr.mxu0 0.0
      %549 = vmatpush2.msra.mxu0 0.0
      %550 = vmatprep.subr.mxu0 0.0
      %551 = vmatpush2.msra.mxu0 0.0
      %552 = vmatprep.subr.mxu0 0.0
      %553 = vmatpush2.msra.mxu0 0.0
      %554 = vmatprep.subr.mxu0 0.0
      %555 = vmatpush2.msra.mxu0 0.0
      %556 = vmatprep.subr.mxu0 0.0
      %557 = vmatpush2.msra.mxu0 0.0
      %558 = vmatprep.subr.mxu0 0.0
      %559 = vmatpush2.msra.mxu0 0.0
      %560 = vmatprep.subr.mxu0 0.0
      %561 = vmatpush2.msra.mxu0 0.0
      %562 = vmatprep.subr.mxu0 0.0
      %563 = vmatpush2.msra.mxu0 0.0
      %564 = vmatprep.subr.mxu0 0.0
      %565 = vmatpush2.msra.mxu0 0.0
      %566 = vmatprep.subr.mxu0 0.0
      %567 = vmatpush2.msra.mxu0 0.0
      %568 = vmatprep.subr.mxu0 0.0
      %569 = vmatpush2.msra.mxu0 0.0
      %570 = vmatprep.subr.mxu0 0.0
      %571 = vmatpush2.msra.mxu0 0.0
      %572 = vmatprep.subr.mxu0 0.0
      %573 = vmatpush2.msra.mxu0 0.0
      %574 = vmatprep.mubr.f32.mxu0 0.0
      %v575 = vand.u32 %v501, 4294901760
      %v576 = vsub.f32 %v501, %v575
      %v577 = vand.u32 %v576, 4294901760
      %v578 = vsub.f32 %v576, %v577
      %v579 = vand.u32 %v578, 4294901760
      %580 = vmatmul.mubr.f32.gmra.mxu0 %v579
      %v581 = vpop.f32.mrf.mxu0
      %v582 = vadd.f32 %v498, %v581
      %v583 = vpop.f32.mrf.mxu0
      %584 = vmatprep.mubr.f32.mxu0 0.0
      %v585 = vand.u32 %v504, 4294901760
      %v586 = vsub.f32 %v504, %v585
      %v587 = vand.u32 %v586, 4294901760
      %v588 = vsub.f32 %v586, %v587
      %v589 = vand.u32 %v588, 4294901760
      %590 = vmatmul.mubr.f32.gmra.mxu0 %v589
      %v591 = vpop.f32.mrf.mxu0
      %v592 = vadd.f32 %v498, %v591
      %v593 = vpop.f32.mrf.mxu0
      %594 = vdwg.mxu0
      %595 = vmatprep.subr.mxu0 0.0
      %596 = vmatpush1.msra.mxu0 0.0
      %597 = vmatprep.subr.mxu0 0.0
      %598 = vmatpush1.msra.mxu0 0.0
      %599 = vmatprep.subr.mxu0 0.0
      %600 = vmatpush1.msra.mxu0 0.0
      %601 = vmatprep.subr.mxu0 0.0
      %602 = vmatpush1.msra.mxu0 0.0
      %603 = vmatprep.subr.mxu0 0.0
      %604 = vmatpush1.msra.mxu0 0.0
      %605 = vmatprep.subr.mxu0 0.0
      %606 = vmatpush1.msra.mxu0 0.0
      %607 = vmatprep.subr.mxu0 0.0
      %608 = vmatpush1.msra.mxu0 0.0
      %609 = vmatprep.subr.mxu0 0.0
      %610 = vmatpush1.msra.mxu0 0.0
      %611 = vmatprep.subr.mxu0 0.0
      %612 = vmatpush1.msra.mxu0 0.0
      %613 = vmatprep.subr.mxu0 0.0
      %614 = vmatpush1.msra.mxu0 0.0
      %615 = vmatprep.subr.mxu0 0.0
      %616 = vmatpush1.msra.mxu0 0.0
      %617 = vmatprep.subr.mxu0 0.0
      %618 = vmatpush1.msra.mxu0 0.0
      %619 = vmatprep.subr.mxu0 0.0
      %v620 = vand.u32 %v492, 4294901760
      %v621 = vsub.f32 %v492, %v620
      %v622 = vand.u32 %v621, 4294901760
      %v623 = vsub.f32 %v621, %v622
      %v624 = vand.u32 %v623, 4294901760
      %625 = vmatpush1.msra.mxu0 %v624
      %626 = vmatprep.subr.mxu0 0.0
      %v627 = vand.u32 %v491, 4294901760
      %v628 = vsub.f32 %v491, %v627
      %v629 = vand.u32 %v628, 4294901760
      %v630 = vsub.f32 %v628, %v629
      %v631 = vand.u32 %v630, 4294901760
      %632 = vmatpush1.msra.mxu0 %v631
      %633 = vmatprep.subr.mxu0 0.0
      %v634 = vand.u32 %v490, 4294901760
      %v635 = vsub.f32 %v490, %v634
      %v636 = vand.u32 %v635, 4294901760
      %v637 = vsub.f32 %v635, %v636
      %v638 = vand.u32 %v637, 4294901760
      %639 = vmatpush1.msra.mxu0 %v638
      %640 = vmatprep.subr.mxu0 0.0
      %v641 = vand.u32 %v489, 4294901760
      %v642 = vsub.f32 %v489, %v641
      %v643 = vand.u32 %v642, 4294901760
      %v644 = vsub.f32 %v642, %v643
      %v645 = vand.u32 %v644, 4294901760
      %646 = vmatpush1.msra.mxu0 %v645
      %647 = vmatprep.subr.mxu0 0.0
      %648 = vmatpush2.msra.mxu0 0.0
      %649 = vmatprep.subr.mxu0 0.0
      %650 = vmatpush2.msra.mxu0 0.0
      %651 = vmatprep.subr.mxu0 0.0
      %652 = vmatpush2.msra.mxu0 0.0
      %653 = vmatprep.subr.mxu0 0.0
      %654 = vmatpush2.msra.mxu0 0.0
      %655 = vmatprep.subr.mxu0 0.0
      %656 = vmatpush2.msra.mxu0 0.0
      %657 = vmatprep.subr.mxu0 0.0
      %658 = vmatpush2.msra.mxu0 0.0
      %659 = vmatprep.subr.mxu0 0.0
      %660 = vmatpush2.msra.mxu0 0.0
      %661 = vmatprep.subr.mxu0 0.0
      %662 = vmatpush2.msra.mxu0 0.0
      %663 = vmatprep.subr.mxu0 0.0
      %664 = vmatpush2.msra.mxu0 0.0
      %665 = vmatprep.subr.mxu0 0.0
      %666 = vmatpush2.msra.mxu0 0.0
      %667 = vmatprep.subr.mxu0 0.0
      %668 = vmatpush2.msra.mxu0 0.0
      %669 = vmatprep.subr.mxu0 0.0
      %670 = vmatpush2.msra.mxu0 0.0
      %671 = vmatprep.subr.mxu0 0.0
      %672 = vmatpush2.msra.mxu0 0.0
      %673 = vmatprep.subr.mxu0 0.0
      %674 = vmatpush2.msra.mxu0 0.0
      %675 = vmatprep.subr.mxu0 0.0
      %676 = vmatpush2.msra.mxu0 0.0
      %677 = vmatprep.subr.mxu0 0.0
      %678 = vmatpush2.msra.mxu0 0.0
      %679 = vmatprep.mubr.f32.mxu0 0.0
      %v680 = vand.u32 %v501, 4294901760
      %681 = vmatmul.mubr.f32.gmra.mxu0 %v680
      %v682 = vpop.f32.mrf.mxu0
      %v683 = vadd.f32 %v582, %v682
      %v684 = vpop.f32.mrf.mxu0
      %685 = vmatprep.mubr.f32.mxu0 0.0
      %v686 = vand.u32 %v504, 4294901760
      %687 = vmatmul.mubr.f32.gmra.mxu0 %v686
      %v688 = vpop.f32.mrf.mxu0
      %v689 = vadd.f32 %v592, %v688
      %v690 = vpop.f32.mrf.mxu0
      %691 = vdwg.mxu0
      %692 = vmatprep.subr.mxu0 0.0
      %693 = vmatpush1.msra.mxu0 0.0
      %694 = vmatprep.subr.mxu0 0.0
      %695 = vmatpush1.msra.mxu0 0.0
      %696 = vmatprep.subr.mxu0 0.0
      %697 = vmatpush1.msra.mxu0 0.0
      %698 = vmatprep.subr.mxu0 0.0
      %699 = vmatpush1.msra.mxu0 0.0
      %700 = vmatprep.subr.mxu0 0.0
      %701 = vmatpush1.msra.mxu0 0.0
      %702 = vmatprep.subr.mxu0 0.0
      %703 = vmatpush1.msra.mxu0 0.0
      %704 = vmatprep.subr.mxu0 0.0
      %705 = vmatpush1.msra.mxu0 0.0
      %706 = vmatprep.subr.mxu0 0.0
      %707 = vmatpush1.msra.mxu0 0.0
      %708 = vmatprep.subr.mxu0 0.0
      %709 = vmatpush1.msra.mxu0 0.0
      %710 = vmatprep.subr.mxu0 0.0
      %711 = vmatpush1.msra.mxu0 0.0
      %712 = vmatprep.subr.mxu0 0.0
      %713 = vmatpush1.msra.mxu0 0.0
      %714 = vmatprep.subr.mxu0 0.0
      %715 = vmatpush1.msra.mxu0 0.0
      %716 = vmatprep.subr.mxu0 0.0
      %v717 = vand.u32 %v492, 4294901760
      %v718 = vsub.f32 %v492, %v717
      %719 = vmatpush1.msra.mxu0 %v718
      %720 = vmatprep.subr.mxu0 0.0
      %v721 = vand.u32 %v491, 4294901760
      %v722 = vsub.f32 %v491, %v721
      %723 = vmatpush1.msra.mxu0 %v722
      %724 = vmatprep.subr.mxu0 0.0
      %v725 = vand.u32 %v490, 4294901760
      %v726 = vsub.f32 %v490, %v725
      %727 = vmatpush1.msra.mxu0 %v726
      %728 = vmatprep.subr.mxu0 0.0
      %v729 = vand.u32 %v489, 4294901760
      %v730 = vsub.f32 %v489, %v729
      %731 = vmatpush1.msra.mxu0 %v730
      %732 = vmatprep.subr.mxu0 0.0
      %733 = vmatpush2.msra.mxu0 0.0
      %734 = vmatprep.subr.mxu0 0.0
      %735 = vmatpush2.msra.mxu0 0.0
      %736 = vmatprep.subr.mxu0 0.0
      %737 = vmatpush2.msra.mxu0 0.0
      %738 = vmatprep.subr.mxu0 0.0
      %739 = vmatpush2.msra.mxu0 0.0
      %740 = vmatprep.subr.mxu0 0.0
      %741 = vmatpush2.msra.mxu0 0.0
      %742 = vmatprep.subr.mxu0 0.0
      %743 = vmatpush2.msra.mxu0 0.0
      %744 = vmatprep.subr.mxu0 0.0
      %745 = vmatpush2.msra.mxu0 0.0
      %746 = vmatprep.subr.mxu0 0.0
      %747 = vmatpush2.msra.mxu0 0.0
      %748 = vmatprep.subr.mxu0 0.0
      %749 = vmatpush2.msra.mxu0 0.0
      %750 = vmatprep.subr.mxu0 0.0
      %751 = vmatpush2.msra.mxu0 0.0
      %752 = vmatprep.subr.mxu0 0.0
      %753 = vmatpush2.msra.mxu0 0.0
      %754 = vmatprep.subr.mxu0 0.0
      %755 = vmatpush2.msra.mxu0 0.0
      %756 = vmatprep.subr.mxu0 0.0
      %757 = vmatpush2.msra.mxu0 0.0
      %758 = vmatprep.subr.mxu0 0.0
      %759 = vmatpush2.msra.mxu0 0.0
      %760 = vmatprep.subr.mxu0 0.0
      %761 = vmatpush2.msra.mxu0 0.0
      %762 = vmatprep.subr.mxu0 0.0
      %763 = vmatpush2.msra.mxu0 0.0
      %764 = vmatprep.mubr.f32.mxu0 0.0
      %v765 = vand.u32 %v501, 4294901760
      %v766 = vsub.f32 %v501, %v765
      %767 = vmatmul.mubr.f32.gmra.mxu0 %v766
      %v768 = vpop.f32.mrf.mxu0
      %v769 = vadd.f32 %v683, %v768
      %v770 = vpop.f32.mrf.mxu0
      %771 = vmatprep.mubr.f32.mxu0 0.0
      %v772 = vand.u32 %v504, 4294901760
      %v773 = vsub.f32 %v504, %v772
      %774 = vmatmul.mubr.f32.gmra.mxu0 %v773
      %v775 = vpop.f32.mrf.mxu0
      %v776 = vadd.f32 %v689, %v775
      %v777 = vpop.f32.mrf.mxu0
      %778 = vdwg.mxu0
      %779 = vmatprep.subr.mxu0 0.0
      %780 = vmatpush1.msra.mxu0 0.0
      %781 = vmatprep.subr.mxu0 0.0
      %782 = vmatpush1.msra.mxu0 0.0
      %783 = vmatprep.subr.mxu0 0.0
      %784 = vmatpush1.msra.mxu0 0.0
      %785 = vmatprep.subr.mxu0 0.0
      %786 = vmatpush1.msra.mxu0 0.0
      %787 = vmatprep.subr.mxu0 0.0
      %788 = vmatpush1.msra.mxu0 0.0
      %789 = vmatprep.subr.mxu0 0.0
      %790 = vmatpush1.msra.mxu0 0.0
      %791 = vmatprep.subr.mxu0 0.0
      %792 = vmatpush1.msra.mxu0 0.0
      %793 = vmatprep.subr.mxu0 0.0
      %794 = vmatpush1.msra.mxu0 0.0
      %795 = vmatprep.subr.mxu0 0.0
      %796 = vmatpush1.msra.mxu0 0.0
      %797 = vmatprep.subr.mxu0 0.0
      %798 = vmatpush1.msra.mxu0 0.0
      %799 = vmatprep.subr.mxu0 0.0
      %800 = vmatpush1.msra.mxu0 0.0
      %801 = vmatprep.subr.mxu0 0.0
      %802 = vmatpush1.msra.mxu0 0.0
      %803 = vmatprep.subr.mxu0 0.0
      %v804 = vand.u32 %v492, 4294901760
      %805 = vmatpush1.msra.mxu0 %v804
      %806 = vmatprep.subr.mxu0 0.0
      %v807 = vand.u32 %v491, 4294901760
      %808 = vmatpush1.msra.mxu0 %v807
      %809 = vmatprep.subr.mxu0 0.0
      %v810 = vand.u32 %v490, 4294901760
      %811 = vmatpush1.msra.mxu0 %v810
      %812 = vmatprep.subr.mxu0 0.0
      %v813 = vand.u32 %v489, 4294901760
      %814 = vmatpush1.msra.mxu0 %v813
      %815 = vmatprep.subr.mxu0 0.0
      %816 = vmatpush2.msra.mxu0 0.0
      %817 = vmatprep.subr.mxu0 0.0
      %818 = vmatpush2.msra.mxu0 0.0
      %819 = vmatprep.subr.mxu0 0.0
      %820 = vmatpush2.msra.mxu0 0.0
      %821 = vmatprep.subr.mxu0 0.0
      %822 = vmatpush2.msra.mxu0 0.0
      %823 = vmatprep.subr.mxu0 0.0
      %824 = vmatpush2.msra.mxu0 0.0
      %825 = vmatprep.subr.mxu0 0.0
      %826 = vmatpush2.msra.mxu0 0.0
      %827 = vmatprep.subr.mxu0 0.0
      %828 = vmatpush2.msra.mxu0 0.0
      %829 = vmatprep.subr.mxu0 0.0
      %830 = vmatpush2.msra.mxu0 0.0
      %831 = vmatprep.subr.mxu0 0.0
      %832 = vmatpush2.msra.mxu0 0.0
      %833 = vmatprep.subr.mxu0 0.0
      %834 = vmatpush2.msra.mxu0 0.0
      %835 = vmatprep.subr.mxu0 0.0
      %836 = vmatpush2.msra.mxu0 0.0
      %837 = vmatprep.subr.mxu0 0.0
      %838 = vmatpush2.msra.mxu0 0.0
      %839 = vmatprep.subr.mxu0 0.0
      %840 = vmatpush2.msra.mxu0 0.0
      %841 = vmatprep.subr.mxu0 0.0
      %842 = vmatpush2.msra.mxu0 0.0
      %843 = vmatprep.subr.mxu0 0.0
      %844 = vmatpush2.msra.mxu0 0.0
      %845 = vmatprep.subr.mxu0 0.0
      %846 = vmatpush2.msra.mxu0 0.0
      %847 = vmatprep.mubr.f32.mxu0 0.0
      %v848 = vand.u32 %v501, 4294901760
      %v849 = vsub.f32 %v501, %v848
      %v850 = vand.u32 %v849, 4294901760
      %851 = vmatmul.mubr.f32.gmra.mxu0 %v850
      %v852 = vpop.f32.mrf.mxu0
      %v853 = vadd.f32 %v769, %v852
      %v854 = vpop.f32.mrf.mxu0
      %855 = vmatprep.mubr.f32.mxu0 0.0
      %v856 = vand.u32 %v504, 4294901760
      %v857 = vsub.f32 %v504, %v856
      %v858 = vand.u32 %v857, 4294901760
      %859 = vmatmul.mubr.f32.gmra.mxu0 %v858
      %v860 = vpop.f32.mrf.mxu0
      %v861 = vadd.f32 %v776, %v860
      %v862 = vpop.f32.mrf.mxu0
      %863 = vdwg.mxu0
      %864 = vmatprep.subr.mxu0 0.0
      %865 = vmatpush1.msra.mxu0 0.0
      %866 = vmatprep.subr.mxu0 0.0
      %867 = vmatpush1.msra.mxu0 0.0
      %868 = vmatprep.subr.mxu0 0.0
      %869 = vmatpush1.msra.mxu0 0.0
      %870 = vmatprep.subr.mxu0 0.0
      %871 = vmatpush1.msra.mxu0 0.0
      %872 = vmatprep.subr.mxu0 0.0
      %873 = vmatpush1.msra.mxu0 0.0
      %874 = vmatprep.subr.mxu0 0.0
      %875 = vmatpush1.msra.mxu0 0.0
      %876 = vmatprep.subr.mxu0 0.0
      %877 = vmatpush1.msra.mxu0 0.0
      %878 = vmatprep.subr.mxu0 0.0
      %879 = vmatpush1.msra.mxu0 0.0
      %880 = vmatprep.subr.mxu0 0.0
      %881 = vmatpush1.msra.mxu0 0.0
      %882 = vmatprep.subr.mxu0 0.0
      %883 = vmatpush1.msra.mxu0 0.0
      %884 = vmatprep.subr.mxu0 0.0
      %885 = vmatpush1.msra.mxu0 0.0
      %886 = vmatprep.subr.mxu0 0.0
      %887 = vmatpush1.msra.mxu0 0.0
      %888 = vmatprep.subr.mxu0 0.0
      %v889 = vand.u32 %v492, 4294901760
      %v890 = vsub.f32 %v492, %v889
      %v891 = vand.u32 %v890, 4294901760
      %892 = vmatpush1.msra.mxu0 %v891
      %893 = vmatprep.subr.mxu0 0.0
      %v894 = vand.u32 %v491, 4294901760
      %v895 = vsub.f32 %v491, %v894
      %v896 = vand.u32 %v895, 4294901760
      %897 = vmatpush1.msra.mxu0 %v896
      %898 = vmatprep.subr.mxu0 0.0
      %v899 = vand.u32 %v490, 4294901760
      %v900 = vsub.f32 %v490, %v899
      %v901 = vand.u32 %v900, 4294901760
      %902 = vmatpush1.msra.mxu0 %v901
      %903 = vmatprep.subr.mxu0 0.0
      %v904 = vand.u32 %v489, 4294901760
      %v905 = vsub.f32 %v489, %v904
      %v906 = vand.u32 %v905, 4294901760
      %907 = vmatpush1.msra.mxu0 %v906
      %908 = vmatprep.subr.mxu0 0.0
      %909 = vmatpush2.msra.mxu0 0.0
      %910 = vmatprep.subr.mxu0 0.0
      %911 = vmatpush2.msra.mxu0 0.0
      %912 = vmatprep.subr.mxu0 0.0
      %913 = vmatpush2.msra.mxu0 0.0
      %914 = vmatprep.subr.mxu0 0.0
      %915 = vmatpush2.msra.mxu0 0.0
      %916 = vmatprep.subr.mxu0 0.0
      %917 = vmatpush2.msra.mxu0 0.0
      %918 = vmatprep.subr.mxu0 0.0
      %919 = vmatpush2.msra.mxu0 0.0
      %920 = vmatprep.subr.mxu0 0.0
      %921 = vmatpush2.msra.mxu0 0.0
      %922 = vmatprep.subr.mxu0 0.0
      %923 = vmatpush2.msra.mxu0 0.0
      %924 = vmatprep.subr.mxu0 0.0
      %925 = vmatpush2.msra.mxu0 0.0
      %926 = vmatprep.subr.mxu0 0.0
      %927 = vmatpush2.msra.mxu0 0.0
      %928 = vmatprep.subr.mxu0 0.0
      %929 = vmatpush2.msra.mxu0 0.0
      %930 = vmatprep.subr.mxu0 0.0
      %931 = vmatpush2.msra.mxu0 0.0
      %932 = vmatprep.subr.mxu0 0.0
      %933 = vmatpush2.msra.mxu0 0.0
      %934 = vmatprep.subr.mxu0 0.0
      %935 = vmatpush2.msra.mxu0 0.0
      %936 = vmatprep.subr.mxu0 0.0
      %937 = vmatpush2.msra.mxu0 0.0
      %938 = vmatprep.subr.mxu0 0.0
      %939 = vmatpush2.msra.mxu0 0.0
      %940 = vmatprep.mubr.f32.mxu0 0.0
      %v941 = vand.u32 %v501, 4294901760
      %942 = vmatmul.mubr.f32.gmra.mxu0 %v941
      %v943 = vpop.f32.mrf.mxu0
      %v944 = vadd.f32 %v853, %v943
      %v945 = vpop.f32.mrf.mxu0
      %946 = vmatprep.mubr.f32.mxu0 0.0
      %v947 = vand.u32 %v504, 4294901760
      %948 = vmatmul.mubr.f32.gmra.mxu0 %v947
      %v949 = vpop.f32.mrf.mxu0
      %v950 = vadd.f32 %v861, %v949
      %v951 = vpop.f32.mrf.mxu0
      %952 = vdwg.mxu0
      %953 = vmatprep.subr.mxu0 0.0
      %954 = vmatpush1.msra.mxu0 0.0
      %955 = vmatprep.subr.mxu0 0.0
      %956 = vmatpush1.msra.mxu0 0.0
      %957 = vmatprep.subr.mxu0 0.0
      %958 = vmatpush1.msra.mxu0 0.0
      %959 = vmatprep.subr.mxu0 0.0
      %960 = vmatpush1.msra.mxu0 0.0
      %961 = vmatprep.subr.mxu0 0.0
      %962 = vmatpush1.msra.mxu0 0.0
      %963 = vmatprep.subr.mxu0 0.0
      %964 = vmatpush1.msra.mxu0 0.0
      %965 = vmatprep.subr.mxu0 0.0
      %966 = vmatpush1.msra.mxu0 0.0
      %967 = vmatprep.subr.mxu0 0.0
      %968 = vmatpush1.msra.mxu0 0.0
      %969 = vmatprep.subr.mxu0 0.0
      %970 = vmatpush1.msra.mxu0 0.0
      %971 = vmatprep.subr.mxu0 0.0
      %972 = vmatpush1.msra.mxu0 0.0
      %973 = vmatprep.subr.mxu0 0.0
      %974 = vmatpush1.msra.mxu0 0.0
      %975 = vmatprep.subr.mxu0 0.0
      %976 = vmatpush1.msra.mxu0 0.0
      %977 = vmatprep.subr.mxu0 0.0
      %v978 = vand.u32 %v492, 4294901760
      %979 = vmatpush1.msra.mxu0 %v978
      %980 = vmatprep.subr.mxu0 0.0
      %v981 = vand.u32 %v491, 4294901760
      %982 = vmatpush1.msra.mxu0 %v981
      %983 = vmatprep.subr.mxu0 0.0
      %v984 = vand.u32 %v490, 4294901760
      %985 = vmatpush1.msra.mxu0 %v984
      %986 = vmatprep.subr.mxu0 0.0
      %v987 = vand.u32 %v489, 4294901760
      %988 = vmatpush1.msra.mxu0 %v987
      %989 = vmatprep.subr.mxu0 0.0
      %990 = vmatpush2.msra.mxu0 0.0
      %991 = vmatprep.subr.mxu0 0.0
      %992 = vmatpush2.msra.mxu0 0.0
      %993 = vmatprep.subr.mxu0 0.0
      %994 = vmatpush2.msra.mxu0 0.0
      %995 = vmatprep.subr.mxu0 0.0
      %996 = vmatpush2.msra.mxu0 0.0
      %997 = vmatprep.subr.mxu0 0.0
      %998 = vmatpush2.msra.mxu0 0.0
      %999 = vmatprep.subr.mxu0 0.0
      %1000 = vmatpush2.msra.mxu0 0.0
      %1001 = vmatprep.subr.mxu0 0.0
      %1002 = vmatpush2.msra.mxu0 0.0
      %1003 = vmatprep.subr.mxu0 0.0
      %1004 = vmatpush2.msra.mxu0 0.0
      %1005 = vmatprep.subr.mxu0 0.0
      %1006 = vmatpush2.msra.mxu0 0.0
      %1007 = vmatprep.subr.mxu0 0.0
      %1008 = vmatpush2.msra.mxu0 0.0
      %1009 = vmatprep.subr.mxu0 0.0
      %1010 = vmatpush2.msra.mxu0 0.0
      %1011 = vmatprep.subr.mxu0 0.0
      %1012 = vmatpush2.msra.mxu0 0.0
      %1013 = vmatprep.subr.mxu0 0.0
      %1014 = vmatpush2.msra.mxu0 0.0
      %1015 = vmatprep.subr.mxu0 0.0
      %1016 = vmatpush2.msra.mxu0 0.0
      %1017 = vmatprep.subr.mxu0 0.0
      %1018 = vmatpush2.msra.mxu0 0.0
      %1019 = vmatprep.subr.mxu0 0.0
      %1020 = vmatpush2.msra.mxu0 0.0
      %1021 = vmatprep.mubr.f32.mxu0 0.0
      %v1022 = vand.u32 %v501, 4294901760
      %1023 = vmatmul.mubr.f32.gmra.mxu0 %v1022
      %v1024 = vpop.f32.mrf.mxu0
      %v1025 = vadd.f32 %v944, %v1024
      %v1026 = vpop.f32.mrf.mxu0
      %1027 = vmatprep.mubr.f32.mxu0 0.0
      %v1028 = vand.u32 %v504, 4294901760
      %1029 = vmatmul.mubr.f32.gmra.mxu0 %v1028
      %v1030 = vpop.f32.mrf.mxu0
      %v1031 = vadd.f32 %v950, %v1030
      %v1032 = vpop.f32.mrf.mxu0
      %1033 = vdwg.mxu0
      %v1034 = vmul.f32 %v1025, 0.25
      %v1035 = vmul.f32 %v1031, 0.25
      %v1036 = vld [vmem:[%s435] sm:$0xff]
      %v1037 = vld [vmem:[%s435 + $0x8] sm:$0xff]
      %1040 = vrot.lane.b32.xlu0 %v1025, 96
      %v1041 = vpop.permute.xlu0 %1040
      %1042 = vrot.lane.b32.xlu0 %v1031, 96
      %v1043 = vpop.permute.xlu0 %1042
      %vm1044 = vcmask 130048
      %v1046 = vsel %vm1044, %v1034, 0
      %v1049 = vsel %vm1044, %v1035, 0
      %v1051 = vsel %vm1044, %v1041, 0
      %v1053 = vsel %vm1044, %v1043, 0
      %1055 = vmatprep.subr.mxu0 0.0
      %1056 = vmatpush1.xpose.msra.mxu0 0.0
      %1057 = vmatprep.subr.mxu0 0.0
      %1058 = vmatpush1.xpose.msra.mxu0 0.0
      %1059 = vmatprep.subr.mxu0 0.0
      %1060 = vmatpush1.xpose.msra.mxu0 0.0
      %1061 = vmatprep.subr.mxu0 0.0
      %1062 = vmatpush1.xpose.msra.mxu0 0.0
      %1063 = vmatprep.subr.mxu0 0.0
      %1064 = vmatpush1.xpose.msra.mxu0 0.0
      %1065 = vmatprep.subr.mxu0 0.0
      %1066 = vmatpush1.xpose.msra.mxu0 0.0
      %1067 = vmatprep.subr.mxu0 0.0
      %1068 = vmatpush1.xpose.msra.mxu0 0.0
      %1069 = vmatprep.subr.mxu0 0.0
      %1070 = vmatpush1.xpose.msra.mxu0 0.0
      %1071 = vmatprep.subr.mxu0 0.0
      %1072 = vmatpush1.xpose.msra.mxu0 0.0
      %1073 = vmatprep.subr.mxu0 0.0
      %1074 = vmatpush1.xpose.msra.mxu0 0.0
      %1075 = vmatprep.subr.mxu0 0.0
      %1076 = vmatpush1.xpose.msra.mxu0 0.0
      %1077 = vmatprep.subr.mxu0 0.0
      %1078 = vmatpush1.xpose.msra.mxu0 0.0
      %1079 = vmatprep.subr.mxu0 0.0
      %1080 = vmatpush1.xpose.msra.mxu0 0.0
      %1081 = vmatprep.subr.mxu0 0.0
      %1082 = vmatpush1.xpose.msra.mxu0 0.0
      %1083 = vmatprep.subr.mxu0 0.0
      %v1084 = vand.u32 %v1053, 4294901760
      %1085 = vmatpush1.xpose.msra.mxu0 %v1084
      %1086 = vmatprep.subr.mxu0 0.0
      %v1087 = vand.u32 %v1051, 4294901760
      %1088 = vmatpush1.xpose.msra.mxu0 %v1087
      %1089 = vmatprep.subr.mxu0 0.0
      %1090 = vmatpush2.xpose.msra.mxu0 0.0
      %1091 = vmatprep.subr.mxu0 0.0
      %1092 = vmatpush2.xpose.msra.mxu0 0.0
      %1093 = vmatprep.subr.mxu0 0.0
      %1094 = vmatpush2.xpose.msra.mxu0 0.0
      %1095 = vmatprep.subr.mxu0 0.0
      %1096 = vmatpush2.xpose.msra.mxu0 0.0
      %1097 = vmatprep.subr.mxu0 0.0
      %1098 = vmatpush2.xpose.msra.mxu0 0.0
      %1099 = vmatprep.subr.mxu0 0.0
      %1100 = vmatpush2.xpose.msra.mxu0 0.0
      %1101 = vmatprep.subr.mxu0 0.0
      %1102 = vmatpush2.xpose.msra.mxu0 0.0
      %1103 = vmatprep.subr.mxu0 0.0
      %1104 = vmatpush2.xpose.msra.mxu0 0.0
      %1105 = vmatprep.subr.mxu0 0.0
      %1106 = vmatpush2.xpose.msra.mxu0 0.0
      %1107 = vmatprep.subr.mxu0 0.0
      %1108 = vmatpush2.xpose.msra.mxu0 0.0
      %1109 = vmatprep.subr.mxu0 0.0
      %1110 = vmatpush2.xpose.msra.mxu0 0.0
      %1111 = vmatprep.subr.mxu0 0.0
      %1112 = vmatpush2.xpose.msra.mxu0 0.0
      %1113 = vmatprep.subr.mxu0 0.0
      %1114 = vmatpush2.xpose.msra.mxu0 0.0
      %1115 = vmatprep.subr.mxu0 0.0
      %1116 = vmatpush2.xpose.msra.mxu0 0.0
      %1117 = vmatprep.subr.mxu0 0.0
      %1118 = vmatpush2.xpose.msra.mxu0 0.0
      %1119 = vmatprep.subr.mxu0 0.0
      %1120 = vmatpush2.xpose.msra.mxu0 0.0
      %1121 = vmatprep.mubr.f32.mxu0 0.0
      %v1122 = vand.u32 %v1046, 4294901760
      %v1123 = vsub.f32 %v1046, %v1122
      %v1124 = vand.u32 %v1123, 4294901760
      %v1125 = vsub.f32 %v1123, %v1124
      %v1126 = vand.u32 %v1125, 4294901760
      %1127 = vmatmul.mubr.f32.gmra.mxu0 %v1126
      %v1128 = vpop.f32.mrf.mxu0
      %v1129 = vadd.f32 %v1036, %v1128
      %v1130 = vpop.f32.mrf.mxu0
      %1131 = vmatprep.mubr.f32.mxu0 0.0
      %v1132 = vand.u32 %v1049, 4294901760
      %v1133 = vsub.f32 %v1049, %v1132
      %v1134 = vand.u32 %v1133, 4294901760
      %v1135 = vsub.f32 %v1133, %v1134
      %v1136 = vand.u32 %v1135, 4294901760
      %1137 = vmatmul.mubr.f32.gmra.mxu0 %v1136
      %v1138 = vpop.f32.mrf.mxu0
      %v1139 = vadd.f32 %v1037, %v1138
      %v1140 = vpop.f32.mrf.mxu0
      %1141 = vdwg.mxu0
      %1142 = vmatprep.subr.mxu0 0.0
      %1143 = vmatpush1.xpose.msra.mxu0 0.0
      %1144 = vmatprep.subr.mxu0 0.0
      %1145 = vmatpush1.xpose.msra.mxu0 0.0
      %1146 = vmatprep.subr.mxu0 0.0
      %1147 = vmatpush1.xpose.msra.mxu0 0.0
      %1148 = vmatprep.subr.mxu0 0.0
      %1149 = vmatpush1.xpose.msra.mxu0 0.0
      %1150 = vmatprep.subr.mxu0 0.0
      %1151 = vmatpush1.xpose.msra.mxu0 0.0
      %1152 = vmatprep.subr.mxu0 0.0
      %1153 = vmatpush1.xpose.msra.mxu0 0.0
      %1154 = vmatprep.subr.mxu0 0.0
      %1155 = vmatpush1.xpose.msra.mxu0 0.0
      %1156 = vmatprep.subr.mxu0 0.0
      %1157 = vmatpush1.xpose.msra.mxu0 0.0
      %1158 = vmatprep.subr.mxu0 0.0
      %1159 = vmatpush1.xpose.msra.mxu0 0.0
      %1160 = vmatprep.subr.mxu0 0.0
      %1161 = vmatpush1.xpose.msra.mxu0 0.0
      %1162 = vmatprep.subr.mxu0 0.0
      %1163 = vmatpush1.xpose.msra.mxu0 0.0
      %1164 = vmatprep.subr.mxu0 0.0
      %1165 = vmatpush1.xpose.msra.mxu0 0.0
      %1166 = vmatprep.subr.mxu0 0.0
      %1167 = vmatpush1.xpose.msra.mxu0 0.0
      %1168 = vmatprep.subr.mxu0 0.0
      %1169 = vmatpush1.xpose.msra.mxu0 0.0
      %1170 = vmatprep.subr.mxu0 0.0
      %v1171 = vand.u32 %v1053, 4294901760
      %v1172 = vsub.f32 %v1053, %v1171
      %v1173 = vand.u32 %v1172, 4294901760
      %v1174 = vsub.f32 %v1172, %v1173
      %v1175 = vand.u32 %v1174, 4294901760
      %1176 = vmatpush1.xpose.msra.mxu0 %v1175
      %1177 = vmatprep.subr.mxu0 0.0
      %v1178 = vand.u32 %v1051, 4294901760
      %v1179 = vsub.f32 %v1051, %v1178
      %v1180 = vand.u32 %v1179, 4294901760
      %v1181 = vsub.f32 %v1179, %v1180
      %v1182 = vand.u32 %v1181, 4294901760
      %1183 = vmatpush1.xpose.msra.mxu0 %v1182
      %1184 = vmatprep.subr.mxu0 0.0
      %1185 = vmatpush2.xpose.msra.mxu0 0.0
      %1186 = vmatprep.subr.mxu0 0.0
      %1187 = vmatpush2.xpose.msra.mxu0 0.0
      %1188 = vmatprep.subr.mxu0 0.0
      %1189 = vmatpush2.xpose.msra.mxu0 0.0
      %1190 = vmatprep.subr.mxu0 0.0
      %1191 = vmatpush2.xpose.msra.mxu0 0.0
      %1192 = vmatprep.subr.mxu0 0.0
      %1193 = vmatpush2.xpose.msra.mxu0 0.0
      %1194 = vmatprep.subr.mxu0 0.0
      %1195 = vmatpush2.xpose.msra.mxu0 0.0
      %1196 = vmatprep.subr.mxu0 0.0
      %1197 = vmatpush2.xpose.msra.mxu0 0.0
      %1198 = vmatprep.subr.mxu0 0.0
      %1199 = vmatpush2.xpose.msra.mxu0 0.0
      %1200 = vmatprep.subr.mxu0 0.0
      %1201 = vmatpush2.xpose.msra.mxu0 0.0
      %1202 = vmatprep.subr.mxu0 0.0
      %1203 = vmatpush2.xpose.msra.mxu0 0.0
      %1204 = vmatprep.subr.mxu0 0.0
      %1205 = vmatpush2.xpose.msra.mxu0 0.0
      %1206 = vmatprep.subr.mxu0 0.0
      %1207 = vmatpush2.xpose.msra.mxu0 0.0
      %1208 = vmatprep.subr.mxu0 0.0
      %1209 = vmatpush2.xpose.msra.mxu0 0.0
      %1210 = vmatprep.subr.mxu0 0.0
      %1211 = vmatpush2.xpose.msra.mxu0 0.0
      %1212 = vmatprep.subr.mxu0 0.0
      %1213 = vmatpush2.xpose.msra.mxu0 0.0
      %1214 = vmatprep.subr.mxu0 0.0
      %1215 = vmatpush2.xpose.msra.mxu0 0.0
      %1216 = vmatprep.mubr.f32.mxu0 0.0
      %v1217 = vand.u32 %v1046, 4294901760
      %1218 = vmatmul.mubr.f32.gmra.mxu0 %v1217
      %v1219 = vpop.f32.mrf.mxu0
      %v1220 = vadd.f32 %v1129, %v1219
      %v1221 = vpop.f32.mrf.mxu0
      %1222 = vmatprep.mubr.f32.mxu0 0.0
      %v1223 = vand.u32 %v1049, 4294901760
      %1224 = vmatmul.mubr.f32.gmra.mxu0 %v1223
      %v1225 = vpop.f32.mrf.mxu0
      %v1226 = vadd.f32 %v1139, %v1225
      %v1227 = vpop.f32.mrf.mxu0
      %1228 = vdwg.mxu0
      %1229 = vmatprep.subr.mxu0 0.0
      %1230 = vmatpush1.xpose.msra.mxu0 0.0
      %1231 = vmatprep.subr.mxu0 0.0
      %1232 = vmatpush1.xpose.msra.mxu0 0.0
      %1233 = vmatprep.subr.mxu0 0.0
      %1234 = vmatpush1.xpose.msra.mxu0 0.0
      %1235 = vmatprep.subr.mxu0 0.0
      %1236 = vmatpush1.xpose.msra.mxu0 0.0
      %1237 = vmatprep.subr.mxu0 0.0
      %1238 = vmatpush1.xpose.msra.mxu0 0.0
      %1239 = vmatprep.subr.mxu0 0.0
      %1240 = vmatpush1.xpose.msra.mxu0 0.0
      %1241 = vmatprep.subr.mxu0 0.0
      %1242 = vmatpush1.xpose.msra.mxu0 0.0
      %1243 = vmatprep.subr.mxu0 0.0
      %1244 = vmatpush1.xpose.msra.mxu0 0.0
      %1245 = vmatprep.subr.mxu0 0.0
      %1246 = vmatpush1.xpose.msra.mxu0 0.0
      %1247 = vmatprep.subr.mxu0 0.0
      %1248 = vmatpush1.xpose.msra.mxu0 0.0
      %1249 = vmatprep.subr.mxu0 0.0
      %1250 = vmatpush1.xpose.msra.mxu0 0.0
      %1251 = vmatprep.subr.mxu0 0.0
      %1252 = vmatpush1.xpose.msra.mxu0 0.0
      %1253 = vmatprep.subr.mxu0 0.0
      %1254 = vmatpush1.xpose.msra.mxu0 0.0
      %1255 = vmatprep.subr.mxu0 0.0
      %1256 = vmatpush1.xpose.msra.mxu0 0.0
      %1257 = vmatprep.subr.mxu0 0.0
      %v1258 = vand.u32 %v1053, 4294901760
      %v1259 = vsub.f32 %v1053, %v1258
      %1260 = vmatpush1.xpose.msra.mxu0 %v1259
      %1261 = vmatprep.subr.mxu0 0.0
      %v1262 = vand.u32 %v1051, 4294901760
      %v1263 = vsub.f32 %v1051, %v1262
      %1264 = vmatpush1.xpose.msra.mxu0 %v1263
      %1265 = vmatprep.subr.mxu0 0.0
      %1266 = vmatpush2.xpose.msra.mxu0 0.0
      %1267 = vmatprep.subr.mxu0 0.0
      %1268 = vmatpush2.xpose.msra.mxu0 0.0
      %1269 = vmatprep.subr.mxu0 0.0
      %1270 = vmatpush2.xpose.msra.mxu0 0.0
      %1271 = vmatprep.subr.mxu0 0.0
      %1272 = vmatpush2.xpose.msra.mxu0 0.0
      %1273 = vmatprep.subr.mxu0 0.0
      %1274 = vmatpush2.xpose.msra.mxu0 0.0
      %1275 = vmatprep.subr.mxu0 0.0
      %1276 = vmatpush2.xpose.msra.mxu0 0.0
      %1277 = vmatprep.subr.mxu0 0.0
      %1278 = vmatpush2.xpose.msra.mxu0 0.0
      %1279 = vmatprep.subr.mxu0 0.0
      %1280 = vmatpush2.xpose.msra.mxu0 0.0
      %1281 = vmatprep.subr.mxu0 0.0
      %1282 = vmatpush2.xpose.msra.mxu0 0.0
      %1283 = vmatprep.subr.mxu0 0.0
      %1284 = vmatpush2.xpose.msra.mxu0 0.0
      %1285 = vmatprep.subr.mxu0 0.0
      %1286 = vmatpush2.xpose.msra.mxu0 0.0
      %1287 = vmatprep.subr.mxu0 0.0
      %1288 = vmatpush2.xpose.msra.mxu0 0.0
      %1289 = vmatprep.subr.mxu0 0.0
      %1290 = vmatpush2.xpose.msra.mxu0 0.0
      %1291 = vmatprep.subr.mxu0 0.0
      %1292 = vmatpush2.xpose.msra.mxu0 0.0
      %1293 = vmatprep.subr.mxu0 0.0
      %1294 = vmatpush2.xpose.msra.mxu0 0.0
      %1295 = vmatprep.subr.mxu0 0.0
      %1296 = vmatpush2.xpose.msra.mxu0 0.0
      %1297 = vmatprep.mubr.f32.mxu0 0.0
      %v1298 = vand.u32 %v1046, 4294901760
      %v1299 = vsub.f32 %v1046, %v1298
      %1300 = vmatmul.mubr.f32.gmra.mxu0 %v1299
      %v1301 = vpop.f32.mrf.mxu0
      %v1302 = vadd.f32 %v1220, %v1301
      %v1303 = vpop.f32.mrf.mxu0
      %1304 = vmatprep.mubr.f32.mxu0 0.0
      %v1305 = vand.u32 %v1049, 4294901760
      %v1306 = vsub.f32 %v1049, %v1305
      %1307 = vmatmul.mubr.f32.gmra.mxu0 %v1306
      %v1308 = vpop.f32.mrf.mxu0
      %v1309 = vadd.f32 %v1226, %v1308
      %v1310 = vpop.f32.mrf.mxu0
      %1311 = vdwg.mxu0
      %1312 = vmatprep.subr.mxu0 0.0
      %1313 = vmatpush1.xpose.msra.mxu0 0.0
      %1314 = vmatprep.subr.mxu0 0.0
      %1315 = vmatpush1.xpose.msra.mxu0 0.0
      %1316 = vmatprep.subr.mxu0 0.0
      %1317 = vmatpush1.xpose.msra.mxu0 0.0
      %1318 = vmatprep.subr.mxu0 0.0
      %1319 = vmatpush1.xpose.msra.mxu0 0.0
      %1320 = vmatprep.subr.mxu0 0.0
      %1321 = vmatpush1.xpose.msra.mxu0 0.0
      %1322 = vmatprep.subr.mxu0 0.0
      %1323 = vmatpush1.xpose.msra.mxu0 0.0
      %1324 = vmatprep.subr.mxu0 0.0
      %1325 = vmatpush1.xpose.msra.mxu0 0.0
      %1326 = vmatprep.subr.mxu0 0.0
      %1327 = vmatpush1.xpose.msra.mxu0 0.0
      %1328 = vmatprep.subr.mxu0 0.0
      %1329 = vmatpush1.xpose.msra.mxu0 0.0
      %1330 = vmatprep.subr.mxu0 0.0
      %1331 = vmatpush1.xpose.msra.mxu0 0.0
      %1332 = vmatprep.subr.mxu0 0.0
      %1333 = vmatpush1.xpose.msra.mxu0 0.0
      %1334 = vmatprep.subr.mxu0 0.0
      %1335 = vmatpush1.xpose.msra.mxu0 0.0
      %1336 = vmatprep.subr.mxu0 0.0
      %1337 = vmatpush1.xpose.msra.mxu0 0.0
      %1338 = vmatprep.subr.mxu0 0.0
      %1339 = vmatpush1.xpose.msra.mxu0 0.0
      %1340 = vmatprep.subr.mxu0 0.0
      %v1341 = vand.u32 %v1053, 4294901760
      %1342 = vmatpush1.xpose.msra.mxu0 %v1341
      %1343 = vmatprep.subr.mxu0 0.0
      %v1344 = vand.u32 %v1051, 4294901760
      %1345 = vmatpush1.xpose.msra.mxu0 %v1344
      %1346 = vmatprep.subr.mxu0 0.0
      %1347 = vmatpush2.xpose.msra.mxu0 0.0
      %1348 = vmatprep.subr.mxu0 0.0
      %1349 = vmatpush2.xpose.msra.mxu0 0.0
      %1350 = vmatprep.subr.mxu0 0.0
      %1351 = vmatpush2.xpose.msra.mxu0 0.0
      %1352 = vmatprep.subr.mxu0 0.0
      %1353 = vmatpush2.xpose.msra.mxu0 0.0
      %1354 = vmatprep.subr.mxu0 0.0
      %1355 = vmatpush2.xpose.msra.mxu0 0.0
      %1356 = vmatprep.subr.mxu0 0.0
      %1357 = vmatpush2.xpose.msra.mxu0 0.0
      %1358 = vmatprep.subr.mxu0 0.0
      %1359 = vmatpush2.xpose.msra.mxu0 0.0
      %1360 = vmatprep.subr.mxu0 0.0
      %1361 = vmatpush2.xpose.msra.mxu0 0.0
      %1362 = vmatprep.subr.mxu0 0.0
      %1363 = vmatpush2.xpose.msra.mxu0 0.0
      %1364 = vmatprep.subr.mxu0 0.0
      %1365 = vmatpush2.xpose.msra.mxu0 0.0
      %1366 = vmatprep.subr.mxu0 0.0
      %1367 = vmatpush2.xpose.msra.mxu0 0.0
      %1368 = vmatprep.subr.mxu0 0.0
      %1369 = vmatpush2.xpose.msra.mxu0 0.0
      %1370 = vmatprep.subr.mxu0 0.0
      %1371 = vmatpush2.xpose.msra.mxu0 0.0
      %1372 = vmatprep.subr.mxu0 0.0
      %1373 = vmatpush2.xpose.msra.mxu0 0.0
      %1374 = vmatprep.subr.mxu0 0.0
      %1375 = vmatpush2.xpose.msra.mxu0 0.0
      %1376 = vmatprep.subr.mxu0 0.0
      %1377 = vmatpush2.xpose.msra.mxu0 0.0
      %1378 = vmatprep.mubr.f32.mxu0 0.0
      %v1379 = vand.u32 %v1046, 4294901760
      %v1380 = vsub.f32 %v1046, %v1379
      %v1381 = vand.u32 %v1380, 4294901760
      %1382 = vmatmul.mubr.f32.gmra.mxu0 %v1381
      %v1383 = vpop.f32.mrf.mxu0
      %v1384 = vadd.f32 %v1302, %v1383
      %v1385 = vpop.f32.mrf.mxu0
      %1386 = vmatprep.mubr.f32.mxu0 0.0
      %v1387 = vand.u32 %v1049, 4294901760
      %v1388 = vsub.f32 %v1049, %v1387
      %v1389 = vand.u32 %v1388, 4294901760
      %1390 = vmatmul.mubr.f32.gmra.mxu0 %v1389
      %v1391 = vpop.f32.mrf.mxu0
      %v1392 = vadd.f32 %v1309, %v1391
      %v1393 = vpop.f32.mrf.mxu0
      %1394 = vdwg.mxu0
      %1395 = vmatprep.subr.mxu0 0.0
      %1396 = vmatpush1.xpose.msra.mxu0 0.0
      %1397 = vmatprep.subr.mxu0 0.0
      %1398 = vmatpush1.xpose.msra.mxu0 0.0
      %1399 = vmatprep.subr.mxu0 0.0
      %1400 = vmatpush1.xpose.msra.mxu0 0.0
      %1401 = vmatprep.subr.mxu0 0.0
      %1402 = vmatpush1.xpose.msra.mxu0 0.0
      %1403 = vmatprep.subr.mxu0 0.0
      %1404 = vmatpush1.xpose.msra.mxu0 0.0
      %1405 = vmatprep.subr.mxu0 0.0
      %1406 = vmatpush1.xpose.msra.mxu0 0.0
      %1407 = vmatprep.subr.mxu0 0.0
      %1408 = vmatpush1.xpose.msra.mxu0 0.0
      %1409 = vmatprep.subr.mxu0 0.0
      %1410 = vmatpush1.xpose.msra.mxu0 0.0
      %1411 = vmatprep.subr.mxu0 0.0
      %1412 = vmatpush1.xpose.msra.mxu0 0.0
      %1413 = vmatprep.subr.mxu0 0.0
      %1414 = vmatpush1.xpose.msra.mxu0 0.0
      %1415 = vmatprep.subr.mxu0 0.0
      %1416 = vmatpush1.xpose.msra.mxu0 0.0
      %1417 = vmatprep.subr.mxu0 0.0
      %1418 = vmatpush1.xpose.msra.mxu0 0.0
      %1419 = vmatprep.subr.mxu0 0.0
      %1420 = vmatpush1.xpose.msra.mxu0 0.0
      %1421 = vmatprep.subr.mxu0 0.0
      %1422 = vmatpush1.xpose.msra.mxu0 0.0
      %1423 = vmatprep.subr.mxu0 0.0
      %v1424 = vand.u32 %v1053, 4294901760
      %v1425 = vsub.f32 %v1053, %v1424
      %v1426 = vand.u32 %v1425, 4294901760
      %1427 = vmatpush1.xpose.msra.mxu0 %v1426
      %1428 = vmatprep.subr.mxu0 0.0
      %v1429 = vand.u32 %v1051, 4294901760
      %v1430 = vsub.f32 %v1051, %v1429
      %v1431 = vand.u32 %v1430, 4294901760
      %1432 = vmatpush1.xpose.msra.mxu0 %v1431
      %1433 = vmatprep.subr.mxu0 0.0
      %1434 = vmatpush2.xpose.msra.mxu0 0.0
      %1435 = vmatprep.subr.mxu0 0.0
      %1436 = vmatpush2.xpose.msra.mxu0 0.0
      %1437 = vmatprep.subr.mxu0 0.0
      %1438 = vmatpush2.xpose.msra.mxu0 0.0
      %1439 = vmatprep.subr.mxu0 0.0
      %1440 = vmatpush2.xpose.msra.mxu0 0.0
      %1441 = vmatprep.subr.mxu0 0.0
      %1442 = vmatpush2.xpose.msra.mxu0 0.0
      %1443 = vmatprep.subr.mxu0 0.0
      %1444 = vmatpush2.xpose.msra.mxu0 0.0
      %1445 = vmatprep.subr.mxu0 0.0
      %1446 = vmatpush2.xpose.msra.mxu0 0.0
      %1447 = vmatprep.subr.mxu0 0.0
      %1448 = vmatpush2.xpose.msra.mxu0 0.0
      %1449 = vmatprep.subr.mxu0 0.0
      %1450 = vmatpush2.xpose.msra.mxu0 0.0
      %1451 = vmatprep.subr.mxu0 0.0
      %1452 = vmatpush2.xpose.msra.mxu0 0.0
      %1453 = vmatprep.subr.mxu0 0.0
      %1454 = vmatpush2.xpose.msra.mxu0 0.0
      %1455 = vmatprep.subr.mxu0 0.0
      %1456 = vmatpush2.xpose.msra.mxu0 0.0
      %1457 = vmatprep.subr.mxu0 0.0
      %1458 = vmatpush2.xpose.msra.mxu0 0.0
      %1459 = vmatprep.subr.mxu0 0.0
      %1460 = vmatpush2.xpose.msra.mxu0 0.0
      %1461 = vmatprep.subr.mxu0 0.0
      %1462 = vmatpush2.xpose.msra.mxu0 0.0
      %1463 = vmatprep.subr.mxu0 0.0
      %1464 = vmatpush2.xpose.msra.mxu0 0.0
      %1465 = vmatprep.mubr.f32.mxu0 0.0
      %v1466 = vand.u32 %v1046, 4294901760
      %1467 = vmatmul.mubr.f32.gmra.mxu0 %v1466
      %v1468 = vpop.f32.mrf.mxu0
      %v1469 = vadd.f32 %v1384, %v1468
      %v1470 = vpop.f32.mrf.mxu0
      %1471 = vmatprep.mubr.f32.mxu0 0.0
      %v1472 = vand.u32 %v1049, 4294901760
      %1473 = vmatmul.mubr.f32.gmra.mxu0 %v1472
      %v1474 = vpop.f32.mrf.mxu0
      %v1475 = vadd.f32 %v1392, %v1474
      %v1476 = vpop.f32.mrf.mxu0
      %1477 = vdwg.mxu0
      %1478 = vmatprep.subr.mxu0 0.0
      %1479 = vmatpush1.xpose.msra.mxu0 0.0
      %1480 = vmatprep.subr.mxu0 0.0
      %1481 = vmatpush1.xpose.msra.mxu0 0.0
      %1482 = vmatprep.subr.mxu0 0.0
      %1483 = vmatpush1.xpose.msra.mxu0 0.0
      %1484 = vmatprep.subr.mxu0 0.0
      %1485 = vmatpush1.xpose.msra.mxu0 0.0
      %1486 = vmatprep.subr.mxu0 0.0
      %1487 = vmatpush1.xpose.msra.mxu0 0.0
      %1488 = vmatprep.subr.mxu0 0.0
      %1489 = vmatpush1.xpose.msra.mxu0 0.0
      %1490 = vmatprep.subr.mxu0 0.0
      %1491 = vmatpush1.xpose.msra.mxu0 0.0
      %1492 = vmatprep.subr.mxu0 0.0
      %1493 = vmatpush1.xpose.msra.mxu0 0.0
      %1494 = vmatprep.subr.mxu0 0.0
      %1495 = vmatpush1.xpose.msra.mxu0 0.0
      %1496 = vmatprep.subr.mxu0 0.0
      %1497 = vmatpush1.xpose.msra.mxu0 0.0
      %1498 = vmatprep.subr.mxu0 0.0
      %1499 = vmatpush1.xpose.msra.mxu0 0.0
      %1500 = vmatprep.subr.mxu0 0.0
      %1501 = vmatpush1.xpose.msra.mxu0 0.0
      %1502 = vmatprep.subr.mxu0 0.0
      %1503 = vmatpush1.xpose.msra.mxu0 0.0
      %1504 = vmatprep.subr.mxu0 0.0
      %1505 = vmatpush1.xpose.msra.mxu0 0.0
      %1506 = vmatprep.subr.mxu0 0.0
      %v1507 = vand.u32 %v1053, 4294901760
      %1508 = vmatpush1.xpose.msra.mxu0 %v1507
      %1509 = vmatprep.subr.mxu0 0.0
      %v1510 = vand.u32 %v1051, 4294901760
      %1511 = vmatpush1.xpose.msra.mxu0 %v1510
      %1512 = vmatprep.subr.mxu0 0.0
      %1513 = vmatpush2.xpose.msra.mxu0 0.0
      %1514 = vmatprep.subr.mxu0 0.0
      %1515 = vmatpush2.xpose.msra.mxu0 0.0
      %1516 = vmatprep.subr.mxu0 0.0
      %1517 = vmatpush2.xpose.msra.mxu0 0.0
      %1518 = vmatprep.subr.mxu0 0.0
      %1519 = vmatpush2.xpose.msra.mxu0 0.0
      %1520 = vmatprep.subr.mxu0 0.0
      %1521 = vmatpush2.xpose.msra.mxu0 0.0
      %1522 = vmatprep.subr.mxu0 0.0
      %1523 = vmatpush2.xpose.msra.mxu0 0.0
      %1524 = vmatprep.subr.mxu0 0.0
      %1525 = vmatpush2.xpose.msra.mxu0 0.0
      %1526 = vmatprep.subr.mxu0 0.0
      %1527 = vmatpush2.xpose.msra.mxu0 0.0
      %1528 = vmatprep.subr.mxu0 0.0
      %1529 = vmatpush2.xpose.msra.mxu0 0.0
      %1530 = vmatprep.subr.mxu0 0.0
      %1531 = vmatpush2.xpose.msra.mxu0 0.0
      %1532 = vmatprep.subr.mxu0 0.0
      %1533 = vmatpush2.xpose.msra.mxu0 0.0
      %1534 = vmatprep.subr.mxu0 0.0
      %1535 = vmatpush2.xpose.msra.mxu0 0.0
      %1536 = vmatprep.subr.mxu0 0.0
      %1537 = vmatpush2.xpose.msra.mxu0 0.0
      %1538 = vmatprep.subr.mxu0 0.0
      %1539 = vmatpush2.xpose.msra.mxu0 0.0
      %1540 = vmatprep.subr.mxu0 0.0
      %1541 = vmatpush2.xpose.msra.mxu0 0.0
      %1542 = vmatprep.subr.mxu0 0.0
      %1543 = vmatpush2.xpose.msra.mxu0 0.0
      %1544 = vmatprep.mubr.f32.mxu0 0.0
      %v1545 = vand.u32 %v1046, 4294901760
      %1546 = vmatmul.mubr.f32.gmra.mxu0 %v1545
      %v1547 = vpop.f32.mrf.mxu0
      %v1548 = vadd.f32 %v1469, %v1547
      %v1549 = vpop.f32.mrf.mxu0
      %1550 = vmatprep.mubr.f32.mxu0 0.0
      %v1551 = vand.u32 %v1049, 4294901760
      %1552 = vmatmul.mubr.f32.gmra.mxu0 %v1551
      %v1553 = vpop.f32.mrf.mxu0
      %v1554 = vadd.f32 %v1475, %v1553
      %v1555 = vpop.f32.mrf.mxu0
      %1556 = vdwg.mxu0
      %v1557 = vsel %vm1044, %v1548, -inf
      %1558 = vmax.xlane.f32.xlu0 %v1557
      %v1559 = vpop.xlane.xlu0 %1558
      %v1560 = vsel %vm1044, %v1554, -inf
      %1561 = vmax.xlane.f32.xlu0 %v1560
      %v1562 = vpop.xlane.xlu0 %1561
      %v1563 = vsub.f32 %v1548, %v1559
      %v1564 = vsub.f32 %v1554, %v1562
      %v1565 = vmul.f32 %v1563, 1.442695
      %v1566 = vpow.pop %v1565
      %v1567 = vmul.f32 %v1564, 1.442695
      %v1568 = vpow.pop %v1567
      %v1569 = vsel %vm1044, %v1566, 0.0
      %1570 = vadd.xlane.f32.xlu0 %v1569
      %v1571 = vpop.xlane.xlu0 %1570
      %v1572 = vsel %vm1044, %v1568, 0.0
      %1573 = vadd.xlane.f32.xlu0 %v1572
      %v1574 = vpop.xlane.xlu0 %1573
      %v1575 = vrcp.pop %v1571
      %v1576 = vmul.f32 %v1566, %v1575
      %v1577 = vrcp.pop %v1574
      %v1578 = vmul.f32 %v1568, %v1577
      %1579 = vrot.lane.b32.xlu0 %v1025, 64
      %v1580 = vpop.permute.xlu0 %1579
      %1581 = vrot.lane.b32.xlu0 %v1031, 64
      %v1582 = vpop.permute.xlu0 %1581
      %v1586 = vsel %vm1044, %v1576, 0
      %v1589 = vsel %vm1044, %v1578, 0
      %1591 = vmatprep.subr.mxu0 0.0
      %1592 = vmatpush1.msra.mxu0 0.0
      %1593 = vmatprep.subr.mxu0 0.0
      %1594 = vmatpush1.msra.mxu0 0.0
      %1595 = vmatprep.subr.mxu0 0.0
      %1596 = vmatpush1.msra.mxu0 0.0
      %1597 = vmatprep.subr.mxu0 0.0
      %1598 = vmatpush1.msra.mxu0 0.0
      %1599 = vmatprep.subr.mxu0 0.0
      %1600 = vmatpush1.msra.mxu0 0.0
      %1601 = vmatprep.subr.mxu0 0.0
      %1602 = vmatpush1.msra.mxu0 0.0
      %1603 = vmatprep.subr.mxu0 0.0
      %1604 = vmatpush1.msra.mxu0 0.0
      %1605 = vmatprep.subr.mxu0 0.0
      %1606 = vmatpush1.msra.mxu0 0.0
      %1607 = vmatprep.subr.mxu0 0.0
      %1608 = vmatpush1.msra.mxu0 0.0
      %1609 = vmatprep.subr.mxu0 0.0
      %1610 = vmatpush1.msra.mxu0 0.0
      %1611 = vmatprep.subr.mxu0 0.0
      %1612 = vmatpush1.msra.mxu0 0.0
      %1613 = vmatprep.subr.mxu0 0.0
      %1614 = vmatpush1.msra.mxu0 0.0
      %1615 = vmatprep.subr.mxu0 0.0
      %1616 = vmatpush1.msra.mxu0 0.0
      %1617 = vmatprep.subr.mxu0 0.0
      %1618 = vmatpush1.msra.mxu0 0.0
      %1619 = vmatprep.subr.mxu0 0.0
      %v1620 = vand.u32 %v1582, 4294901760
      %1621 = vmatpush1.msra.mxu0 %v1620
      %1622 = vmatprep.subr.mxu0 0.0
      %v1623 = vand.u32 %v1580, 4294901760
      %1624 = vmatpush1.msra.mxu0 %v1623
      %1625 = vmatprep.subr.mxu0 0.0
      %1626 = vmatpush2.msra.mxu0 0.0
      %1627 = vmatprep.subr.mxu0 0.0
      %1628 = vmatpush2.msra.mxu0 0.0
      %1629 = vmatprep.subr.mxu0 0.0
      %1630 = vmatpush2.msra.mxu0 0.0
      %1631 = vmatprep.subr.mxu0 0.0
      %1632 = vmatpush2.msra.mxu0 0.0
      %1633 = vmatprep.subr.mxu0 0.0
      %1634 = vmatpush2.msra.mxu0 0.0
      %1635 = vmatprep.subr.mxu0 0.0
      %1636 = vmatpush2.msra.mxu0 0.0
      %1637 = vmatprep.subr.mxu0 0.0
      %1638 = vmatpush2.msra.mxu0 0.0
      %1639 = vmatprep.subr.mxu0 0.0
      %1640 = vmatpush2.msra.mxu0 0.0
      %1641 = vmatprep.subr.mxu0 0.0
      %1642 = vmatpush2.msra.mxu0 0.0
      %1643 = vmatprep.subr.mxu0 0.0
      %1644 = vmatpush2.msra.mxu0 0.0
      %1645 = vmatprep.subr.mxu0 0.0
      %1646 = vmatpush2.msra.mxu0 0.0
      %1647 = vmatprep.subr.mxu0 0.0
      %1648 = vmatpush2.msra.mxu0 0.0
      %1649 = vmatprep.subr.mxu0 0.0
      %1650 = vmatpush2.msra.mxu0 0.0
      %1651 = vmatprep.subr.mxu0 0.0
      %1652 = vmatpush2.msra.mxu0 0.0
      %1653 = vmatprep.subr.mxu0 0.0
      %1654 = vmatpush2.msra.mxu0 0.0
      %1655 = vmatprep.subr.mxu0 0.0
      %1656 = vmatpush2.msra.mxu0 0.0
      %1657 = vmatprep.mubr.f32.mxu0 0.0
      %v1658 = vand.u32 %v1586, 4294901760
      %v1659 = vsub.f32 %v1586, %v1658
      %v1660 = vand.u32 %v1659, 4294901760
      %v1661 = vsub.f32 %v1659, %v1660
      %v1662 = vand.u32 %v1661, 4294901760
      %1663 = vmatmul.mubr.f32.gmra.mxu0 %v1662
      %v1664 = vpop.f32.mrf.mxu0
      %v1665 = vadd.f32 0.0, %v1664
      %v1666 = vpop.f32.mrf.mxu0
      %1667 = vmatprep.mubr.f32.mxu0 0.0
      %v1668 = vand.u32 %v1589, 4294901760
      %v1669 = vsub.f32 %v1589, %v1668
      %v1670 = vand.u32 %v1669, 4294901760
      %v1671 = vsub.f32 %v1669, %v1670
      %v1672 = vand.u32 %v1671, 4294901760
      %1673 = vmatmul.mubr.f32.gmra.mxu0 %v1672
      %v1674 = vpop.f32.mrf.mxu0
      %v1675 = vadd.f32 0.0, %v1674
      %v1676 = vpop.f32.mrf.mxu0
      %1677 = vdwg.mxu0
      %1678 = vmatprep.subr.mxu0 0.0
      %1679 = vmatpush1.msra.mxu0 0.0
      %1680 = vmatprep.subr.mxu0 0.0
      %1681 = vmatpush1.msra.mxu0 0.0
      %1682 = vmatprep.subr.mxu0 0.0
      %1683 = vmatpush1.msra.mxu0 0.0
      %1684 = vmatprep.subr.mxu0 0.0
      %1685 = vmatpush1.msra.mxu0 0.0
      %1686 = vmatprep.subr.mxu0 0.0
      %1687 = vmatpush1.msra.mxu0 0.0
      %1688 = vmatprep.subr.mxu0 0.0
      %1689 = vmatpush1.msra.mxu0 0.0
      %1690 = vmatprep.subr.mxu0 0.0
      %1691 = vmatpush1.msra.mxu0 0.0
      %1692 = vmatprep.subr.mxu0 0.0
      %1693 = vmatpush1.msra.mxu0 0.0
      %1694 = vmatprep.subr.mxu0 0.0
      %1695 = vmatpush1.msra.mxu0 0.0
      %1696 = vmatprep.subr.mxu0 0.0
      %1697 = vmatpush1.msra.mxu0 0.0
      %1698 = vmatprep.subr.mxu0 0.0
      %1699 = vmatpush1.msra.mxu0 0.0
      %1700 = vmatprep.subr.mxu0 0.0
      %1701 = vmatpush1.msra.mxu0 0.0
      %1702 = vmatprep.subr.mxu0 0.0
      %1703 = vmatpush1.msra.mxu0 0.0
      %1704 = vmatprep.subr.mxu0 0.0
      %1705 = vmatpush1.msra.mxu0 0.0
      %1706 = vmatprep.subr.mxu0 0.0
      %v1707 = vand.u32 %v1582, 4294901760
      %v1708 = vsub.f32 %v1582, %v1707
      %v1709 = vand.u32 %v1708, 4294901760
      %v1710 = vsub.f32 %v1708, %v1709
      %v1711 = vand.u32 %v1710, 4294901760
      %1712 = vmatpush1.msra.mxu0 %v1711
      %1713 = vmatprep.subr.mxu0 0.0
      %v1714 = vand.u32 %v1580, 4294901760
      %v1715 = vsub.f32 %v1580, %v1714
      %v1716 = vand.u32 %v1715, 4294901760
      %v1717 = vsub.f32 %v1715, %v1716
      %v1718 = vand.u32 %v1717, 4294901760
      %1719 = vmatpush1.msra.mxu0 %v1718
      %1720 = vmatprep.subr.mxu0 0.0
      %1721 = vmatpush2.msra.mxu0 0.0
      %1722 = vmatprep.subr.mxu0 0.0
      %1723 = vmatpush2.msra.mxu0 0.0
      %1724 = vmatprep.subr.mxu0 0.0
      %1725 = vmatpush2.msra.mxu0 0.0
      %1726 = vmatprep.subr.mxu0 0.0
      %1727 = vmatpush2.msra.mxu0 0.0
      %1728 = vmatprep.subr.mxu0 0.0
      %1729 = vmatpush2.msra.mxu0 0.0
      %1730 = vmatprep.subr.mxu0 0.0
      %1731 = vmatpush2.msra.mxu0 0.0
      %1732 = vmatprep.subr.mxu0 0.0
      %1733 = vmatpush2.msra.mxu0 0.0
      %1734 = vmatprep.subr.mxu0 0.0
      %1735 = vmatpush2.msra.mxu0 0.0
      %1736 = vmatprep.subr.mxu0 0.0
      %1737 = vmatpush2.msra.mxu0 0.0
      %1738 = vmatprep.subr.mxu0 0.0
      %1739 = vmatpush2.msra.mxu0 0.0
      %1740 = vmatprep.subr.mxu0 0.0
      %1741 = vmatpush2.msra.mxu0 0.0
      %1742 = vmatprep.subr.mxu0 0.0
      %1743 = vmatpush2.msra.mxu0 0.0
      %1744 = vmatprep.subr.mxu0 0.0
      %1745 = vmatpush2.msra.mxu0 0.0
      %1746 = vmatprep.subr.mxu0 0.0
      %1747 = vmatpush2.msra.mxu0 0.0
      %1748 = vmatprep.subr.mxu0 0.0
      %1749 = vmatpush2.msra.mxu0 0.0
      %1750 = vmatprep.subr.mxu0 0.0
      %1751 = vmatpush2.msra.mxu0 0.0
      %1752 = vmatprep.mubr.f32.mxu0 0.0
      %v1753 = vand.u32 %v1586, 4294901760
      %1754 = vmatmul.mubr.f32.gmra.mxu0 %v1753
      %v1755 = vpop.f32.mrf.mxu0
      %v1756 = vadd.f32 %v1665, %v1755
      %v1757 = vpop.f32.mrf.mxu0
      %1758 = vmatprep.mubr.f32.mxu0 0.0
      %v1759 = vand.u32 %v1589, 4294901760
      %1760 = vmatmul.mubr.f32.gmra.mxu0 %v1759
      %v1761 = vpop.f32.mrf.mxu0
      %v1762 = vadd.f32 %v1675, %v1761
      %v1763 = vpop.f32.mrf.mxu0
      %1764 = vdwg.mxu0
      %1765 = vmatprep.subr.mxu0 0.0
      %1766 = vmatpush1.msra.mxu0 0.0
      %1767 = vmatprep.subr.mxu0 0.0
      %1768 = vmatpush1.msra.mxu0 0.0
      %1769 = vmatprep.subr.mxu0 0.0
      %1770 = vmatpush1.msra.mxu0 0.0
      %1771 = vmatprep.subr.mxu0 0.0
      %1772 = vmatpush1.msra.mxu0 0.0
      %1773 = vmatprep.subr.mxu0 0.0
      %1774 = vmatpush1.msra.mxu0 0.0
      %1775 = vmatprep.subr.mxu0 0.0
      %1776 = vmatpush1.msra.mxu0 0.0
      %1777 = vmatprep.subr.mxu0 0.0
      %1778 = vmatpush1.msra.mxu0 0.0
      %1779 = vmatprep.subr.mxu0 0.0
      %1780 = vmatpush1.msra.mxu0 0.0
      %1781 = vmatprep.subr.mxu0 0.0
      %1782 = vmatpush1.msra.mxu0 0.0
      %1783 = vmatprep.subr.mxu0 0.0
      %1784 = vmatpush1.msra.mxu0 0.0
      %1785 = vmatprep.subr.mxu0 0.0
      %1786 = vmatpush1.msra.mxu0 0.0
      %1787 = vmatprep.subr.mxu0 0.0
      %1788 = vmatpush1.msra.mxu0 0.0
      %1789 = vmatprep.subr.mxu0 0.0
      %1790 = vmatpush1.msra.mxu0 0.0
      %1791 = vmatprep.subr.mxu0 0.0
      %1792 = vmatpush1.msra.mxu0 0.0
      %1793 = vmatprep.subr.mxu0 0.0
      %v1794 = vand.u32 %v1582, 4294901760
      %v1795 = vsub.f32 %v1582, %v1794
      %1796 = vmatpush1.msra.mxu0 %v1795
      %1797 = vmatprep.subr.mxu0 0.0
      %v1798 = vand.u32 %v1580, 4294901760
      %v1799 = vsub.f32 %v1580, %v1798
      %1800 = vmatpush1.msra.mxu0 %v1799
      %1801 = vmatprep.subr.mxu0 0.0
      %1802 = vmatpush2.msra.mxu0 0.0
      %1803 = vmatprep.subr.mxu0 0.0
      %1804 = vmatpush2.msra.mxu0 0.0
      %1805 = vmatprep.subr.mxu0 0.0
      %1806 = vmatpush2.msra.mxu0 0.0
      %1807 = vmatprep.subr.mxu0 0.0
      %1808 = vmatpush2.msra.mxu0 0.0
      %1809 = vmatprep.subr.mxu0 0.0
      %1810 = vmatpush2.msra.mxu0 0.0
      %1811 = vmatprep.subr.mxu0 0.0
      %1812 = vmatpush2.msra.mxu0 0.0
      %1813 = vmatprep.subr.mxu0 0.0
      %1814 = vmatpush2.msra.mxu0 0.0
      %1815 = vmatprep.subr.mxu0 0.0
      %1816 = vmatpush2.msra.mxu0 0.0
      %1817 = vmatprep.subr.mxu0 0.0
      %1818 = vmatpush2.msra.mxu0 0.0
      %1819 = vmatprep.subr.mxu0 0.0
      %1820 = vmatpush2.msra.mxu0 0.0
      %1821 = vmatprep.subr.mxu0 0.0
      %1822 = vmatpush2.msra.mxu0 0.0
      %1823 = vmatprep.subr.mxu0 0.0
      %1824 = vmatpush2.msra.mxu0 0.0
      %1825 = vmatprep.subr.mxu0 0.0
      %1826 = vmatpush2.msra.mxu0 0.0
      %1827 = vmatprep.subr.mxu0 0.0
      %1828 = vmatpush2.msra.mxu0 0.0
      %1829 = vmatprep.subr.mxu0 0.0
      %1830 = vmatpush2.msra.mxu0 0.0
      %1831 = vmatprep.subr.mxu0 0.0
      %1832 = vmatpush2.msra.mxu0 0.0
      %1833 = vmatprep.mubr.f32.mxu0 0.0
      %v1834 = vand.u32 %v1586, 4294901760
      %v1835 = vsub.f32 %v1586, %v1834
      %1836 = vmatmul.mubr.f32.gmra.mxu0 %v1835
      %v1837 = vpop.f32.mrf.mxu0
      %v1838 = vadd.f32 %v1756, %v1837
      %v1839 = vpop.f32.mrf.mxu0
      %1840 = vmatprep.mubr.f32.mxu0 0.0
      %v1841 = vand.u32 %v1589, 4294901760
      %v1842 = vsub.f32 %v1589, %v1841
      %1843 = vmatmul.mubr.f32.gmra.mxu0 %v1842
      %v1844 = vpop.f32.mrf.mxu0
      %v1845 = vadd.f32 %v1762, %v1844
      %v1846 = vpop.f32.mrf.mxu0
      %1847 = vdwg.mxu0
      %1848 = vmatprep.subr.mxu0 0.0
      %1849 = vmatpush1.msra.mxu0 0.0
      %1850 = vmatprep.subr.mxu0 0.0
      %1851 = vmatpush1.msra.mxu0 0.0
      %1852 = vmatprep.subr.mxu0 0.0
      %1853 = vmatpush1.msra.mxu0 0.0
      %1854 = vmatprep.subr.mxu0 0.0
      %1855 = vmatpush1.msra.mxu0 0.0
      %1856 = vmatprep.subr.mxu0 0.0
      %1857 = vmatpush1.msra.mxu0 0.0
      %1858 = vmatprep.subr.mxu0 0.0
      %1859 = vmatpush1.msra.mxu0 0.0
      %1860 = vmatprep.subr.mxu0 0.0
      %1861 = vmatpush1.msra.mxu0 0.0
      %1862 = vmatprep.subr.mxu0 0.0
      %1863 = vmatpush1.msra.mxu0 0.0
      %1864 = vmatprep.subr.mxu0 0.0
      %1865 = vmatpush1.msra.mxu0 0.0
      %1866 = vmatprep.subr.mxu0 0.0
      %1867 = vmatpush1.msra.mxu0 0.0
      %1868 = vmatprep.subr.mxu0 0.0
      %1869 = vmatpush1.msra.mxu0 0.0
      %1870 = vmatprep.subr.mxu0 0.0
      %1871 = vmatpush1.msra.mxu0 0.0
      %1872 = vmatprep.subr.mxu0 0.0
      %1873 = vmatpush1.msra.mxu0 0.0
      %1874 = vmatprep.subr.mxu0 0.0
      %1875 = vmatpush1.msra.mxu0 0.0
      %1876 = vmatprep.subr.mxu0 0.0
      %v1877 = vand.u32 %v1582, 4294901760
      %1878 = vmatpush1.msra.mxu0 %v1877
      %1879 = vmatprep.subr.mxu0 0.0
      %v1880 = vand.u32 %v1580, 4294901760
      %1881 = vmatpush1.msra.mxu0 %v1880
      %1882 = vmatprep.subr.mxu0 0.0
      %1883 = vmatpush2.msra.mxu0 0.0
      %1884 = vmatprep.subr.mxu0 0.0
      %1885 = vmatpush2.msra.mxu0 0.0
      %1886 = vmatprep.subr.mxu0 0.0
      %1887 = vmatpush2.msra.mxu0 0.0
      %1888 = vmatprep.subr.mxu0 0.0
      %1889 = vmatpush2.msra.mxu0 0.0
      %1890 = vmatprep.subr.mxu0 0.0
      %1891 = vmatpush2.msra.mxu0 0.0
      %1892 = vmatprep.subr.mxu0 0.0
      %1893 = vmatpush2.msra.mxu0 0.0
      %1894 = vmatprep.subr.mxu0 0.0
      %1895 = vmatpush2.msra.mxu0 0.0
      %1896 = vmatprep.subr.mxu0 0.0
      %1897 = vmatpush2.msra.mxu0 0.0
      %1898 = vmatprep.subr.mxu0 0.0
      %1899 = vmatpush2.msra.mxu0 0.0
      %1900 = vmatprep.subr.mxu0 0.0
      %1901 = vmatpush2.msra.mxu0 0.0
      %1902 = vmatprep.subr.mxu0 0.0
      %1903 = vmatpush2.msra.mxu0 0.0
      %1904 = vmatprep.subr.mxu0 0.0
      %1905 = vmatpush2.msra.mxu0 0.0
      %1906 = vmatprep.subr.mxu0 0.0
      %1907 = vmatpush2.msra.mxu0 0.0
      %1908 = vmatprep.subr.mxu0 0.0
      %1909 = vmatpush2.msra.mxu0 0.0
      %1910 = vmatprep.subr.mxu0 0.0
      %1911 = vmatpush2.msra.mxu0 0.0
      %1912 = vmatprep.subr.mxu0 0.0
      %1913 = vmatpush2.msra.mxu0 0.0
      %1914 = vmatprep.mubr.f32.mxu0 0.0
      %v1915 = vand.u32 %v1586, 4294901760
      %v1916 = vsub.f32 %v1586, %v1915
      %v1917 = vand.u32 %v1916, 4294901760
      %1918 = vmatmul.mubr.f32.gmra.mxu0 %v1917
      %v1919 = vpop.f32.mrf.mxu0
      %v1920 = vadd.f32 %v1838, %v1919
      %v1921 = vpop.f32.mrf.mxu0
      %1922 = vmatprep.mubr.f32.mxu0 0.0
      %v1923 = vand.u32 %v1589, 4294901760
      %v1924 = vsub.f32 %v1589, %v1923
      %v1925 = vand.u32 %v1924, 4294901760
      %1926 = vmatmul.mubr.f32.gmra.mxu0 %v1925
      %v1927 = vpop.f32.mrf.mxu0
      %v1928 = vadd.f32 %v1845, %v1927
      %v1929 = vpop.f32.mrf.mxu0
      %1930 = vdwg.mxu0
      %1931 = vmatprep.subr.mxu0 0.0
      %1932 = vmatpush1.msra.mxu0 0.0
      %1933 = vmatprep.subr.mxu0 0.0
      %1934 = vmatpush1.msra.mxu0 0.0
      %1935 = vmatprep.subr.mxu0 0.0
      %1936 = vmatpush1.msra.mxu0 0.0
      %1937 = vmatprep.subr.mxu0 0.0
      %1938 = vmatpush1.msra.mxu0 0.0
      %1939 = vmatprep.subr.mxu0 0.0
      %1940 = vmatpush1.msra.mxu0 0.0
      %1941 = vmatprep.subr.mxu0 0.0
      %1942 = vmatpush1.msra.mxu0 0.0
      %1943 = vmatprep.subr.mxu0 0.0
      %1944 = vmatpush1.msra.mxu0 0.0
      %1945 = vmatprep.subr.mxu0 0.0
      %1946 = vmatpush1.msra.mxu0 0.0
      %1947 = vmatprep.subr.mxu0 0.0
      %1948 = vmatpush1.msra.mxu0 0.0
      %1949 = vmatprep.subr.mxu0 0.0
      %1950 = vmatpush1.msra.mxu0 0.0
      %1951 = vmatprep.subr.mxu0 0.0
      %1952 = vmatpush1.msra.mxu0 0.0
      %1953 = vmatprep.subr.mxu0 0.0
      %1954 = vmatpush1.msra.mxu0 0.0
      %1955 = vmatprep.subr.mxu0 0.0
      %1956 = vmatpush1.msra.mxu0 0.0
      %1957 = vmatprep.subr.mxu0 0.0
      %1958 = vmatpush1.msra.mxu0 0.0
      %1959 = vmatprep.subr.mxu0 0.0
      %v1960 = vand.u32 %v1582, 4294901760
      %v1961 = vsub.f32 %v1582, %v1960
      %v1962 = vand.u32 %v1961, 4294901760
      %1963 = vmatpush1.msra.mxu0 %v1962
      %1964 = vmatprep.subr.mxu0 0.0
      %v1965 = vand.u32 %v1580, 4294901760
      %v1966 = vsub.f32 %v1580, %v1965
      %v1967 = vand.u32 %v1966, 4294901760
      %1968 = vmatpush1.msra.mxu0 %v1967
      %1969 = vmatprep.subr.mxu0 0.0
      %1970 = vmatpush2.msra.mxu0 0.0
      %1971 = vmatprep.subr.mxu0 0.0
      %1972 = vmatpush2.msra.mxu0 0.0
      %1973 = vmatprep.subr.mxu0 0.0
      %1974 = vmatpush2.msra.mxu0 0.0
      %1975 = vmatprep.subr.mxu0 0.0
      %1976 = vmatpush2.msra.mxu0 0.0
      %1977 = vmatprep.subr.mxu0 0.0
      %1978 = vmatpush2.msra.mxu0 0.0
      %1979 = vmatprep.subr.mxu0 0.0
      %1980 = vmatpush2.msra.mxu0 0.0
      %1981 = vmatprep.subr.mxu0 0.0
      %1982 = vmatpush2.msra.mxu0 0.0
      %1983 = vmatprep.subr.mxu0 0.0
      %1984 = vmatpush2.msra.mxu0 0.0
      %1985 = vmatprep.subr.mxu0 0.0
      %1986 = vmatpush2.msra.mxu0 0.0
      %1987 = vmatprep.subr.mxu0 0.0
      %1988 = vmatpush2.msra.mxu0 0.0
      %1989 = vmatprep.subr.mxu0 0.0
      %1990 = vmatpush2.msra.mxu0 0.0
      %1991 = vmatprep.subr.mxu0 0.0
      %1992 = vmatpush2.msra.mxu0 0.0
      %1993 = vmatprep.subr.mxu0 0.0
      %1994 = vmatpush2.msra.mxu0 0.0
      %1995 = vmatprep.subr.mxu0 0.0
      %1996 = vmatpush2.msra.mxu0 0.0
      %1997 = vmatprep.subr.mxu0 0.0
      %1998 = vmatpush2.msra.mxu0 0.0
      %1999 = vmatprep.subr.mxu0 0.0
      %2000 = vmatpush2.msra.mxu0 0.0
      %2001 = vmatprep.mubr.f32.mxu0 0.0
      %v2002 = vand.u32 %v1586, 4294901760
      %2003 = vmatmul.mubr.f32.gmra.mxu0 %v2002
      %v2004 = vpop.f32.mrf.mxu0
      %v2005 = vadd.f32 %v1920, %v2004
      %v2006 = vpop.f32.mrf.mxu0
      %2007 = vmatprep.mubr.f32.mxu0 0.0
      %v2008 = vand.u32 %v1589, 4294901760
      %2009 = vmatmul.mubr.f32.gmra.mxu0 %v2008
      %v2010 = vpop.f32.mrf.mxu0
      %v2011 = vadd.f32 %v1928, %v2010
      %v2012 = vpop.f32.mrf.mxu0
      %2013 = vdwg.mxu0
      %2014 = vmatprep.subr.mxu0 0.0
      %2015 = vmatpush1.msra.mxu0 0.0
      %2016 = vmatprep.subr.mxu0 0.0
      %2017 = vmatpush1.msra.mxu0 0.0
      %2018 = vmatprep.subr.mxu0 0.0
      %2019 = vmatpush1.msra.mxu0 0.0
      %2020 = vmatprep.subr.mxu0 0.0
      %2021 = vmatpush1.msra.mxu0 0.0
      %2022 = vmatprep.subr.mxu0 0.0
      %2023 = vmatpush1.msra.mxu0 0.0
      %2024 = vmatprep.subr.mxu0 0.0
      %2025 = vmatpush1.msra.mxu0 0.0
      %2026 = vmatprep.subr.mxu0 0.0
      %2027 = vmatpush1.msra.mxu0 0.0
      %2028 = vmatprep.subr.mxu0 0.0
      %2029 = vmatpush1.msra.mxu0 0.0
      %2030 = vmatprep.subr.mxu0 0.0
      %2031 = vmatpush1.msra.mxu0 0.0
      %2032 = vmatprep.subr.mxu0 0.0
      %2033 = vmatpush1.msra.mxu0 0.0
      %2034 = vmatprep.subr.mxu0 0.0
      %2035 = vmatpush1.msra.mxu0 0.0
      %2036 = vmatprep.subr.mxu0 0.0
      %2037 = vmatpush1.msra.mxu0 0.0
      %2038 = vmatprep.subr.mxu0 0.0
      %2039 = vmatpush1.msra.mxu0 0.0
      %2040 = vmatprep.subr.mxu0 0.0
      %2041 = vmatpush1.msra.mxu0 0.0
      %2042 = vmatprep.subr.mxu0 0.0
      %v2043 = vand.u32 %v1582, 4294901760
      %2044 = vmatpush1.msra.mxu0 %v2043
      %2045 = vmatprep.subr.mxu0 0.0
      %v2046 = vand.u32 %v1580, 4294901760
      %2047 = vmatpush1.msra.mxu0 %v2046
      %2048 = vmatprep.subr.mxu0 0.0
      %2049 = vmatpush2.msra.mxu0 0.0
      %2050 = vmatprep.subr.mxu0 0.0
      %2051 = vmatpush2.msra.mxu0 0.0
      %2052 = vmatprep.subr.mxu0 0.0
      %2053 = vmatpush2.msra.mxu0 0.0
      %2054 = vmatprep.subr.mxu0 0.0
      %2055 = vmatpush2.msra.mxu0 0.0
      %2056 = vmatprep.subr.mxu0 0.0
      %2057 = vmatpush2.msra.mxu0 0.0
      %2058 = vmatprep.subr.mxu0 0.0
      %2059 = vmatpush2.msra.mxu0 0.0
      %2060 = vmatprep.subr.mxu0 0.0
      %2061 = vmatpush2.msra.mxu0 0.0
      %2062 = vmatprep.subr.mxu0 0.0
      %2063 = vmatpush2.msra.mxu0 0.0
      %2064 = vmatprep.subr.mxu0 0.0
      %2065 = vmatpush2.msra.mxu0 0.0
      %2066 = vmatprep.subr.mxu0 0.0
      %2067 = vmatpush2.msra.mxu0 0.0
      %2068 = vmatprep.subr.mxu0 0.0
      %2069 = vmatpush2.msra.mxu0 0.0
      %2070 = vmatprep.subr.mxu0 0.0
      %2071 = vmatpush2.msra.mxu0 0.0
      %2072 = vmatprep.subr.mxu0 0.0
      %2073 = vmatpush2.msra.mxu0 0.0
      %2074 = vmatprep.subr.mxu0 0.0
      %2075 = vmatpush2.msra.mxu0 0.0
      %2076 = vmatprep.subr.mxu0 0.0
      %2077 = vmatpush2.msra.mxu0 0.0
      %2078 = vmatprep.subr.mxu0 0.0
      %2079 = vmatpush2.msra.mxu0 0.0
      %2080 = vmatprep.mubr.f32.mxu0 0.0
      %v2081 = vand.u32 %v1586, 4294901760
      %2082 = vmatmul.mubr.f32.gmra.mxu0 %v2081
      %v2083 = vpop.f32.mrf.mxu0
      %v2084 = vadd.f32 %v2005, %v2083
      %v2085 = vpop.f32.mrf.mxu0
      %2086 = vmatprep.mubr.f32.mxu0 0.0
      %v2087 = vand.u32 %v1589, 4294901760
      %2088 = vmatmul.mubr.f32.gmra.mxu0 %v2087
      %v2089 = vpop.f32.mrf.mxu0
      %v2090 = vadd.f32 %v2011, %v2089
      %v2091 = vpop.f32.mrf.mxu0
      %2092 = vdwg.mxu0
      %v2093 = vld [vmem:[%s5] sm:$0xff]
      %v2094 = vld [vmem:[%s5 + $0x8] sm:$0xff]
      %s2095 = scalar_lea.vmem %s435, 16
      %v2096 = vld [vmem:[%s2095] sm:$0xff]
      %v2097 = vld [vmem:[%s2095 + $0x8] sm:$0xff]
      %2098 = vrot.lane.b32.xlu0 %v1034, 112
      %v2099 = vpop.permute.xlu0 %2098
      %2100 = vrot.lane.b32.xlu0 %v1035, 112
      %v2101 = vpop.permute.xlu0 %2100
      %2102 = vrot.lane.b32.xlu0 %v1025, 80
      %v2103 = vpop.permute.xlu0 %2102
      %2104 = vrot.lane.b32.xlu0 %v1031, 80
      %v2105 = vpop.permute.xlu0 %2104
      %v2106 = vsel %vm1044, %v2099, 0
      %v2108 = vsel %vm1044, %v2101, 0
      %v2110 = vsel %vm1044, %v2103, 0
      %v2112 = vsel %vm1044, %v2105, 0
      %2114 = vmatprep.subr.mxu0 0.0
      %2115 = vmatpush1.xpose.msra.mxu0 0.0
      %2116 = vmatprep.subr.mxu0 0.0
      %2117 = vmatpush1.xpose.msra.mxu0 0.0
      %2118 = vmatprep.subr.mxu0 0.0
      %2119 = vmatpush1.xpose.msra.mxu0 0.0
      %2120 = vmatprep.subr.mxu0 0.0
      %2121 = vmatpush1.xpose.msra.mxu0 0.0
      %2122 = vmatprep.subr.mxu0 0.0
      %2123 = vmatpush1.xpose.msra.mxu0 0.0
      %2124 = vmatprep.subr.mxu0 0.0
      %2125 = vmatpush1.xpose.msra.mxu0 0.0
      %2126 = vmatprep.subr.mxu0 0.0
      %2127 = vmatpush1.xpose.msra.mxu0 0.0
      %2128 = vmatprep.subr.mxu0 0.0
      %2129 = vmatpush1.xpose.msra.mxu0 0.0
      %2130 = vmatprep.subr.mxu0 0.0
      %2131 = vmatpush1.xpose.msra.mxu0 0.0
      %2132 = vmatprep.subr.mxu0 0.0
      %2133 = vmatpush1.xpose.msra.mxu0 0.0
      %2134 = vmatprep.subr.mxu0 0.0
      %2135 = vmatpush1.xpose.msra.mxu0 0.0
      %2136 = vmatprep.subr.mxu0 0.0
      %2137 = vmatpush1.xpose.msra.mxu0 0.0
      %2138 = vmatprep.subr.mxu0 0.0
      %2139 = vmatpush1.xpose.msra.mxu0 0.0
      %2140 = vmatprep.subr.mxu0 0.0
      %2141 = vmatpush1.xpose.msra.mxu0 0.0
      %2142 = vmatprep.subr.mxu0 0.0
      %v2143 = vand.u32 %v2112, 4294901760
      %2144 = vmatpush1.xpose.msra.mxu0 %v2143
      %2145 = vmatprep.subr.mxu0 0.0
      %v2146 = vand.u32 %v2110, 4294901760
      %2147 = vmatpush1.xpose.msra.mxu0 %v2146
      %2148 = vmatprep.subr.mxu0 0.0
      %2149 = vmatpush2.xpose.msra.mxu0 0.0
      %2150 = vmatprep.subr.mxu0 0.0
      %2151 = vmatpush2.xpose.msra.mxu0 0.0
      %2152 = vmatprep.subr.mxu0 0.0
      %2153 = vmatpush2.xpose.msra.mxu0 0.0
      %2154 = vmatprep.subr.mxu0 0.0
      %2155 = vmatpush2.xpose.msra.mxu0 0.0
      %2156 = vmatprep.subr.mxu0 0.0
      %2157 = vmatpush2.xpose.msra.mxu0 0.0
      %2158 = vmatprep.subr.mxu0 0.0
      %2159 = vmatpush2.xpose.msra.mxu0 0.0
      %2160 = vmatprep.subr.mxu0 0.0
      %2161 = vmatpush2.xpose.msra.mxu0 0.0
      %2162 = vmatprep.subr.mxu0 0.0
      %2163 = vmatpush2.xpose.msra.mxu0 0.0
      %2164 = vmatprep.subr.mxu0 0.0
      %2165 = vmatpush2.xpose.msra.mxu0 0.0
      %2166 = vmatprep.subr.mxu0 0.0
      %2167 = vmatpush2.xpose.msra.mxu0 0.0
      %2168 = vmatprep.subr.mxu0 0.0
      %2169 = vmatpush2.xpose.msra.mxu0 0.0
      %2170 = vmatprep.subr.mxu0 0.0
      %2171 = vmatpush2.xpose.msra.mxu0 0.0
      %2172 = vmatprep.subr.mxu0 0.0
      %2173 = vmatpush2.xpose.msra.mxu0 0.0
      %2174 = vmatprep.subr.mxu0 0.0
      %2175 = vmatpush2.xpose.msra.mxu0 0.0
      %2176 = vmatprep.subr.mxu0 0.0
      %2177 = vmatpush2.xpose.msra.mxu0 0.0
      %2178 = vmatprep.subr.mxu0 0.0
      %2179 = vmatpush2.xpose.msra.mxu0 0.0
      %2180 = vmatprep.mubr.f32.mxu0 0.0
      %v2181 = vand.u32 %v2106, 4294901760
      %v2182 = vsub.f32 %v2106, %v2181
      %v2183 = vand.u32 %v2182, 4294901760
      %v2184 = vsub.f32 %v2182, %v2183
      %v2185 = vand.u32 %v2184, 4294901760
      %2186 = vmatmul.mubr.f32.gmra.mxu0 %v2185
      %v2187 = vpop.f32.mrf.mxu0
      %v2188 = vadd.f32 %v2096, %v2187
      %v2189 = vpop.f32.mrf.mxu0
      %2190 = vmatprep.mubr.f32.mxu0 0.0
      %v2191 = vand.u32 %v2108, 4294901760
      %v2192 = vsub.f32 %v2108, %v2191
      %v2193 = vand.u32 %v2192, 4294901760
      %v2194 = vsub.f32 %v2192, %v2193
      %v2195 = vand.u32 %v2194, 4294901760
      %2196 = vmatmul.mubr.f32.gmra.mxu0 %v2195
      %v2197 = vpop.f32.mrf.mxu0
      %v2198 = vadd.f32 %v2097, %v2197
      %v2199 = vpop.f32.mrf.mxu0
      %2200 = vdwg.mxu0
      %2201 = vmatprep.subr.mxu0 0.0
      %2202 = vmatpush1.xpose.msra.mxu0 0.0
      %2203 = vmatprep.subr.mxu0 0.0
      %2204 = vmatpush1.xpose.msra.mxu0 0.0
      %2205 = vmatprep.subr.mxu0 0.0
      %2206 = vmatpush1.xpose.msra.mxu0 0.0
      %2207 = vmatprep.subr.mxu0 0.0
      %2208 = vmatpush1.xpose.msra.mxu0 0.0
      %2209 = vmatprep.subr.mxu0 0.0
      %2210 = vmatpush1.xpose.msra.mxu0 0.0
      %2211 = vmatprep.subr.mxu0 0.0
      %2212 = vmatpush1.xpose.msra.mxu0 0.0
      %2213 = vmatprep.subr.mxu0 0.0
      %2214 = vmatpush1.xpose.msra.mxu0 0.0
      %2215 = vmatprep.subr.mxu0 0.0
      %2216 = vmatpush1.xpose.msra.mxu0 0.0
      %2217 = vmatprep.subr.mxu0 0.0
      %2218 = vmatpush1.xpose.msra.mxu0 0.0
      %2219 = vmatprep.subr.mxu0 0.0
      %2220 = vmatpush1.xpose.msra.mxu0 0.0
      %2221 = vmatprep.subr.mxu0 0.0
      %2222 = vmatpush1.xpose.msra.mxu0 0.0
      %2223 = vmatprep.subr.mxu0 0.0
      %2224 = vmatpush1.xpose.msra.mxu0 0.0
      %2225 = vmatprep.subr.mxu0 0.0
      %2226 = vmatpush1.xpose.msra.mxu0 0.0
      %2227 = vmatprep.subr.mxu0 0.0
      %2228 = vmatpush1.xpose.msra.mxu0 0.0
      %2229 = vmatprep.subr.mxu0 0.0
      %v2230 = vand.u32 %v2112, 4294901760
      %v2231 = vsub.f32 %v2112, %v2230
      %v2232 = vand.u32 %v2231, 4294901760
      %v2233 = vsub.f32 %v2231, %v2232
      %v2234 = vand.u32 %v2233, 4294901760
      %2235 = vmatpush1.xpose.msra.mxu0 %v2234
      %2236 = vmatprep.subr.mxu0 0.0
      %v2237 = vand.u32 %v2110, 4294901760
      %v2238 = vsub.f32 %v2110, %v2237
      %v2239 = vand.u32 %v2238, 4294901760
      %v2240 = vsub.f32 %v2238, %v2239
      %v2241 = vand.u32 %v2240, 4294901760
      %2242 = vmatpush1.xpose.msra.mxu0 %v2241
      %2243 = vmatprep.subr.mxu0 0.0
      %2244 = vmatpush2.xpose.msra.mxu0 0.0
      %2245 = vmatprep.subr.mxu0 0.0
      %2246 = vmatpush2.xpose.msra.mxu0 0.0
      %2247 = vmatprep.subr.mxu0 0.0
      %2248 = vmatpush2.xpose.msra.mxu0 0.0
      %2249 = vmatprep.subr.mxu0 0.0
      %2250 = vmatpush2.xpose.msra.mxu0 0.0
      %2251 = vmatprep.subr.mxu0 0.0
      %2252 = vmatpush2.xpose.msra.mxu0 0.0
      %2253 = vmatprep.subr.mxu0 0.0
      %2254 = vmatpush2.xpose.msra.mxu0 0.0
      %2255 = vmatprep.subr.mxu0 0.0
      %2256 = vmatpush2.xpose.msra.mxu0 0.0
      %2257 = vmatprep.subr.mxu0 0.0
      %2258 = vmatpush2.xpose.msra.mxu0 0.0
      %2259 = vmatprep.subr.mxu0 0.0
      %2260 = vmatpush2.xpose.msra.mxu0 0.0
      %2261 = vmatprep.subr.mxu0 0.0
      %2262 = vmatpush2.xpose.msra.mxu0 0.0
      %2263 = vmatprep.subr.mxu0 0.0
      %2264 = vmatpush2.xpose.msra.mxu0 0.0
      %2265 = vmatprep.subr.mxu0 0.0
      %2266 = vmatpush2.xpose.msra.mxu0 0.0
      %2267 = vmatprep.subr.mxu0 0.0
      %2268 = vmatpush2.xpose.msra.mxu0 0.0
      %2269 = vmatprep.subr.mxu0 0.0
      %2270 = vmatpush2.xpose.msra.mxu0 0.0
      %2271 = vmatprep.subr.mxu0 0.0
      %2272 = vmatpush2.xpose.msra.mxu0 0.0
      %2273 = vmatprep.subr.mxu0 0.0
      %2274 = vmatpush2.xpose.msra.mxu0 0.0
      %2275 = vmatprep.mubr.f32.mxu0 0.0
      %v2276 = vand.u32 %v2106, 4294901760
      %2277 = vmatmul.mubr.f32.gmra.mxu0 %v2276
      %v2278 = vpop.f32.mrf.mxu0
      %v2279 = vadd.f32 %v2188, %v2278
      %v2280 = vpop.f32.mrf.mxu0
      %2281 = vmatprep.mubr.f32.mxu0 0.0
      %v2282 = vand.u32 %v2108, 4294901760
      %2283 = vmatmul.mubr.f32.gmra.mxu0 %v2282
      %v2284 = vpop.f32.mrf.mxu0
      %v2285 = vadd.f32 %v2198, %v2284
      %v2286 = vpop.f32.mrf.mxu0
      %2287 = vdwg.mxu0
      %2288 = vmatprep.subr.mxu0 0.0
      %2289 = vmatpush1.xpose.msra.mxu0 0.0
      %2290 = vmatprep.subr.mxu0 0.0
      %2291 = vmatpush1.xpose.msra.mxu0 0.0
      %2292 = vmatprep.subr.mxu0 0.0
      %2293 = vmatpush1.xpose.msra.mxu0 0.0
      %2294 = vmatprep.subr.mxu0 0.0
      %2295 = vmatpush1.xpose.msra.mxu0 0.0
      %2296 = vmatprep.subr.mxu0 0.0
      %2297 = vmatpush1.xpose.msra.mxu0 0.0
      %2298 = vmatprep.subr.mxu0 0.0
      %2299 = vmatpush1.xpose.msra.mxu0 0.0
      %2300 = vmatprep.subr.mxu0 0.0
      %2301 = vmatpush1.xpose.msra.mxu0 0.0
      %2302 = vmatprep.subr.mxu0 0.0
      %2303 = vmatpush1.xpose.msra.mxu0 0.0
      %2304 = vmatprep.subr.mxu0 0.0
      %2305 = vmatpush1.xpose.msra.mxu0 0.0
      %2306 = vmatprep.subr.mxu0 0.0
      %2307 = vmatpush1.xpose.msra.mxu0 0.0
      %2308 = vmatprep.subr.mxu0 0.0
      %2309 = vmatpush1.xpose.msra.mxu0 0.0
      %2310 = vmatprep.subr.mxu0 0.0
      %2311 = vmatpush1.xpose.msra.mxu0 0.0
      %2312 = vmatprep.subr.mxu0 0.0
      %2313 = vmatpush1.xpose.msra.mxu0 0.0
      %2314 = vmatprep.subr.mxu0 0.0
      %2315 = vmatpush1.xpose.msra.mxu0 0.0
      %2316 = vmatprep.subr.mxu0 0.0
      %v2317 = vand.u32 %v2112, 4294901760
      %v2318 = vsub.f32 %v2112, %v2317
      %2319 = vmatpush1.xpose.msra.mxu0 %v2318
      %2320 = vmatprep.subr.mxu0 0.0
      %v2321 = vand.u32 %v2110, 4294901760
      %v2322 = vsub.f32 %v2110, %v2321
      %2323 = vmatpush1.xpose.msra.mxu0 %v2322
      %2324 = vmatprep.subr.mxu0 0.0
      %2325 = vmatpush2.xpose.msra.mxu0 0.0
      %2326 = vmatprep.subr.mxu0 0.0
      %2327 = vmatpush2.xpose.msra.mxu0 0.0
      %2328 = vmatprep.subr.mxu0 0.0
      %2329 = vmatpush2.xpose.msra.mxu0 0.0
      %2330 = vmatprep.subr.mxu0 0.0
      %2331 = vmatpush2.xpose.msra.mxu0 0.0
      %2332 = vmatprep.subr.mxu0 0.0
      %2333 = vmatpush2.xpose.msra.mxu0 0.0
      %2334 = vmatprep.subr.mxu0 0.0
      %2335 = vmatpush2.xpose.msra.mxu0 0.0
      %2336 = vmatprep.subr.mxu0 0.0
      %2337 = vmatpush2.xpose.msra.mxu0 0.0
      %2338 = vmatprep.subr.mxu0 0.0
      %2339 = vmatpush2.xpose.msra.mxu0 0.0
      %2340 = vmatprep.subr.mxu0 0.0
      %2341 = vmatpush2.xpose.msra.mxu0 0.0
      %2342 = vmatprep.subr.mxu0 0.0
      %2343 = vmatpush2.xpose.msra.mxu0 0.0
      %2344 = vmatprep.subr.mxu0 0.0
      %2345 = vmatpush2.xpose.msra.mxu0 0.0
      %2346 = vmatprep.subr.mxu0 0.0
      %2347 = vmatpush2.xpose.msra.mxu0 0.0
      %2348 = vmatprep.subr.mxu0 0.0
      %2349 = vmatpush2.xpose.msra.mxu0 0.0
      %2350 = vmatprep.subr.mxu0 0.0
      %2351 = vmatpush2.xpose.msra.mxu0 0.0
      %2352 = vmatprep.subr.mxu0 0.0
      %2353 = vmatpush2.xpose.msra.mxu0 0.0
      %2354 = vmatprep.subr.mxu0 0.0
      %2355 = vmatpush2.xpose.msra.mxu0 0.0
      %2356 = vmatprep.mubr.f32.mxu0 0.0
      %v2357 = vand.u32 %v2106, 4294901760
      %v2358 = vsub.f32 %v2106, %v2357
      %2359 = vmatmul.mubr.f32.gmra.mxu0 %v2358
      %v2360 = vpop.f32.mrf.mxu0
      %v2361 = vadd.f32 %v2279, %v2360
      %v2362 = vpop.f32.mrf.mxu0
      %2363 = vmatprep.mubr.f32.mxu0 0.0
      %v2364 = vand.u32 %v2108, 4294901760
      %v2365 = vsub.f32 %v2108, %v2364
      %2366 = vmatmul.mubr.f32.gmra.mxu0 %v2365
      %v2367 = vpop.f32.mrf.mxu0
      %v2368 = vadd.f32 %v2285, %v2367
      %v2369 = vpop.f32.mrf.mxu0
      %2370 = vdwg.mxu0
      %2371 = vmatprep.subr.mxu0 0.0
      %2372 = vmatpush1.xpose.msra.mxu0 0.0
      %2373 = vmatprep.subr.mxu0 0.0
      %2374 = vmatpush1.xpose.msra.mxu0 0.0
      %2375 = vmatprep.subr.mxu0 0.0
      %2376 = vmatpush1.xpose.msra.mxu0 0.0
      %2377 = vmatprep.subr.mxu0 0.0
      %2378 = vmatpush1.xpose.msra.mxu0 0.0
      %2379 = vmatprep.subr.mxu0 0.0
      %2380 = vmatpush1.xpose.msra.mxu0 0.0
      %2381 = vmatprep.subr.mxu0 0.0
      %2382 = vmatpush1.xpose.msra.mxu0 0.0
      %2383 = vmatprep.subr.mxu0 0.0
      %2384 = vmatpush1.xpose.msra.mxu0 0.0
      %2385 = vmatprep.subr.mxu0 0.0
      %2386 = vmatpush1.xpose.msra.mxu0 0.0
      %2387 = vmatprep.subr.mxu0 0.0
      %2388 = vmatpush1.xpose.msra.mxu0 0.0
      %2389 = vmatprep.subr.mxu0 0.0
      %2390 = vmatpush1.xpose.msra.mxu0 0.0
      %2391 = vmatprep.subr.mxu0 0.0
      %2392 = vmatpush1.xpose.msra.mxu0 0.0
      %2393 = vmatprep.subr.mxu0 0.0
      %2394 = vmatpush1.xpose.msra.mxu0 0.0
      %2395 = vmatprep.subr.mxu0 0.0
      %2396 = vmatpush1.xpose.msra.mxu0 0.0
      %2397 = vmatprep.subr.mxu0 0.0
      %2398 = vmatpush1.xpose.msra.mxu0 0.0
      %2399 = vmatprep.subr.mxu0 0.0
      %v2400 = vand.u32 %v2112, 4294901760
      %2401 = vmatpush1.xpose.msra.mxu0 %v2400
      %2402 = vmatprep.subr.mxu0 0.0
      %v2403 = vand.u32 %v2110, 4294901760
      %2404 = vmatpush1.xpose.msra.mxu0 %v2403
      %2405 = vmatprep.subr.mxu0 0.0
      %2406 = vmatpush2.xpose.msra.mxu0 0.0
      %2407 = vmatprep.subr.mxu0 0.0
      %2408 = vmatpush2.xpose.msra.mxu0 0.0
      %2409 = vmatprep.subr.mxu0 0.0
      %2410 = vmatpush2.xpose.msra.mxu0 0.0
      %2411 = vmatprep.subr.mxu0 0.0
      %2412 = vmatpush2.xpose.msra.mxu0 0.0
      %2413 = vmatprep.subr.mxu0 0.0
      %2414 = vmatpush2.xpose.msra.mxu0 0.0
      %2415 = vmatprep.subr.mxu0 0.0
      %2416 = vmatpush2.xpose.msra.mxu0 0.0
      %2417 = vmatprep.subr.mxu0 0.0
      %2418 = vmatpush2.xpose.msra.mxu0 0.0
      %2419 = vmatprep.subr.mxu0 0.0
      %2420 = vmatpush2.xpose.msra.mxu0 0.0
      %2421 = vmatprep.subr.mxu0 0.0
      %2422 = vmatpush2.xpose.msra.mxu0 0.0
      %2423 = vmatprep.subr.mxu0 0.0
      %2424 = vmatpush2.xpose.msra.mxu0 0.0
      %2425 = vmatprep.subr.mxu0 0.0
      %2426 = vmatpush2.xpose.msra.mxu0 0.0
      %2427 = vmatprep.subr.mxu0 0.0
      %2428 = vmatpush2.xpose.msra.mxu0 0.0
      %2429 = vmatprep.subr.mxu0 0.0
      %2430 = vmatpush2.xpose.msra.mxu0 0.0
      %2431 = vmatprep.subr.mxu0 0.0
      %2432 = vmatpush2.xpose.msra.mxu0 0.0
      %2433 = vmatprep.subr.mxu0 0.0
      %2434 = vmatpush2.xpose.msra.mxu0 0.0
      %2435 = vmatprep.subr.mxu0 0.0
      %2436 = vmatpush2.xpose.msra.mxu0 0.0
      %2437 = vmatprep.mubr.f32.mxu0 0.0
      %v2438 = vand.u32 %v2106, 4294901760
      %v2439 = vsub.f32 %v2106, %v2438
      %v2440 = vand.u32 %v2439, 4294901760
      %2441 = vmatmul.mubr.f32.gmra.mxu0 %v2440
      %v2442 = vpop.f32.mrf.mxu0
      %v2443 = vadd.f32 %v2361, %v2442
      %v2444 = vpop.f32.mrf.mxu0
      %2445 = vmatprep.mubr.f32.mxu0 0.0
      %v2446 = vand.u32 %v2108, 4294901760
      %v2447 = vsub.f32 %v2108, %v2446
      %v2448 = vand.u32 %v2447, 4294901760
      %2449 = vmatmul.mubr.f32.gmra.mxu0 %v2448
      %v2450 = vpop.f32.mrf.mxu0
      %v2451 = vadd.f32 %v2368, %v2450
      %v2452 = vpop.f32.mrf.mxu0
      %2453 = vdwg.mxu0
      %2454 = vmatprep.subr.mxu0 0.0
      %2455 = vmatpush1.xpose.msra.mxu0 0.0
      %2456 = vmatprep.subr.mxu0 0.0
      %2457 = vmatpush1.xpose.msra.mxu0 0.0
      %2458 = vmatprep.subr.mxu0 0.0
      %2459 = vmatpush1.xpose.msra.mxu0 0.0
      %2460 = vmatprep.subr.mxu0 0.0
      %2461 = vmatpush1.xpose.msra.mxu0 0.0
      %2462 = vmatprep.subr.mxu0 0.0
      %2463 = vmatpush1.xpose.msra.mxu0 0.0
      %2464 = vmatprep.subr.mxu0 0.0
      %2465 = vmatpush1.xpose.msra.mxu0 0.0
      %2466 = vmatprep.subr.mxu0 0.0
      %2467 = vmatpush1.xpose.msra.mxu0 0.0
      %2468 = vmatprep.subr.mxu0 0.0
      %2469 = vmatpush1.xpose.msra.mxu0 0.0
      %2470 = vmatprep.subr.mxu0 0.0
      %2471 = vmatpush1.xpose.msra.mxu0 0.0
      %2472 = vmatprep.subr.mxu0 0.0
      %2473 = vmatpush1.xpose.msra.mxu0 0.0
      %2474 = vmatprep.subr.mxu0 0.0
      %2475 = vmatpush1.xpose.msra.mxu0 0.0
      %2476 = vmatprep.subr.mxu0 0.0
      %2477 = vmatpush1.xpose.msra.mxu0 0.0
      %2478 = vmatprep.subr.mxu0 0.0
      %2479 = vmatpush1.xpose.msra.mxu0 0.0
      %2480 = vmatprep.subr.mxu0 0.0
      %2481 = vmatpush1.xpose.msra.mxu0 0.0
      %2482 = vmatprep.subr.mxu0 0.0
      %v2483 = vand.u32 %v2112, 4294901760
      %v2484 = vsub.f32 %v2112, %v2483
      %v2485 = vand.u32 %v2484, 4294901760
      %2486 = vmatpush1.xpose.msra.mxu0 %v2485
      %2487 = vmatprep.subr.mxu0 0.0
      %v2488 = vand.u32 %v2110, 4294901760
      %v2489 = vsub.f32 %v2110, %v2488
      %v2490 = vand.u32 %v2489, 4294901760
      %2491 = vmatpush1.xpose.msra.mxu0 %v2490
      %2492 = vmatprep.subr.mxu0 0.0
      %2493 = vmatpush2.xpose.msra.mxu0 0.0
      %2494 = vmatprep.subr.mxu0 0.0
      %2495 = vmatpush2.xpose.msra.mxu0 0.0
      %2496 = vmatprep.subr.mxu0 0.0
      %2497 = vmatpush2.xpose.msra.mxu0 0.0
      %2498 = vmatprep.subr.mxu0 0.0
      %2499 = vmatpush2.xpose.msra.mxu0 0.0
      %2500 = vmatprep.subr.mxu0 0.0
      %2501 = vmatpush2.xpose.msra.mxu0 0.0
      %2502 = vmatprep.subr.mxu0 0.0
      %2503 = vmatpush2.xpose.msra.mxu0 0.0
      %2504 = vmatprep.subr.mxu0 0.0
      %2505 = vmatpush2.xpose.msra.mxu0 0.0
      %2506 = vmatprep.subr.mxu0 0.0
      %2507 = vmatpush2.xpose.msra.mxu0 0.0
      %2508 = vmatprep.subr.mxu0 0.0
      %2509 = vmatpush2.xpose.msra.mxu0 0.0
      %2510 = vmatprep.subr.mxu0 0.0
      %2511 = vmatpush2.xpose.msra.mxu0 0.0
      %2512 = vmatprep.subr.mxu0 0.0
      %2513 = vmatpush2.xpose.msra.mxu0 0.0
      %2514 = vmatprep.subr.mxu0 0.0
      %2515 = vmatpush2.xpose.msra.mxu0 0.0
      %2516 = vmatprep.subr.mxu0 0.0
      %2517 = vmatpush2.xpose.msra.mxu0 0.0
      %2518 = vmatprep.subr.mxu0 0.0
      %2519 = vmatpush2.xpose.msra.mxu0 0.0
      %2520 = vmatprep.subr.mxu0 0.0
      %2521 = vmatpush2.xpose.msra.mxu0 0.0
      %2522 = vmatprep.subr.mxu0 0.0
      %2523 = vmatpush2.xpose.msra.mxu0 0.0
      %2524 = vmatprep.mubr.f32.mxu0 0.0
      %v2525 = vand.u32 %v2106, 4294901760
      %2526 = vmatmul.mubr.f32.gmra.mxu0 %v2525
      %v2527 = vpop.f32.mrf.mxu0
      %v2528 = vadd.f32 %v2443, %v2527
      %v2529 = vpop.f32.mrf.mxu0
      %2530 = vmatprep.mubr.f32.mxu0 0.0
      %v2531 = vand.u32 %v2108, 4294901760
      %2532 = vmatmul.mubr.f32.gmra.mxu0 %v2531
      %v2533 = vpop.f32.mrf.mxu0
      %v2534 = vadd.f32 %v2451, %v2533
      %v2535 = vpop.f32.mrf.mxu0
      %2536 = vdwg.mxu0
      %2537 = vmatprep.subr.mxu0 0.0
      %2538 = vmatpush1.xpose.msra.mxu0 0.0
      %2539 = vmatprep.subr.mxu0 0.0
      %2540 = vmatpush1.xpose.msra.mxu0 0.0
      %2541 = vmatprep.subr.mxu0 0.0
      %2542 = vmatpush1.xpose.msra.mxu0 0.0
      %2543 = vmatprep.subr.mxu0 0.0
      %2544 = vmatpush1.xpose.msra.mxu0 0.0
      %2545 = vmatprep.subr.mxu0 0.0
      %2546 = vmatpush1.xpose.msra.mxu0 0.0
      %2547 = vmatprep.subr.mxu0 0.0
      %2548 = vmatpush1.xpose.msra.mxu0 0.0
      %2549 = vmatprep.subr.mxu0 0.0
      %2550 = vmatpush1.xpose.msra.mxu0 0.0
      %2551 = vmatprep.subr.mxu0 0.0
      %2552 = vmatpush1.xpose.msra.mxu0 0.0
      %2553 = vmatprep.subr.mxu0 0.0
      %2554 = vmatpush1.xpose.msra.mxu0 0.0
      %2555 = vmatprep.subr.mxu0 0.0
      %2556 = vmatpush1.xpose.msra.mxu0 0.0
      %2557 = vmatprep.subr.mxu0 0.0
      %2558 = vmatpush1.xpose.msra.mxu0 0.0
      %2559 = vmatprep.subr.mxu0 0.0
      %2560 = vmatpush1.xpose.msra.mxu0 0.0
      %2561 = vmatprep.subr.mxu0 0.0
      %2562 = vmatpush1.xpose.msra.mxu0 0.0
      %2563 = vmatprep.subr.mxu0 0.0
      %2564 = vmatpush1.xpose.msra.mxu0 0.0
      %2565 = vmatprep.subr.mxu0 0.0
      %v2566 = vand.u32 %v2112, 4294901760
      %2567 = vmatpush1.xpose.msra.mxu0 %v2566
      %2568 = vmatprep.subr.mxu0 0.0
      %v2569 = vand.u32 %v2110, 4294901760
      %2570 = vmatpush1.xpose.msra.mxu0 %v2569
      %2571 = vmatprep.subr.mxu0 0.0
      %2572 = vmatpush2.xpose.msra.mxu0 0.0
      %2573 = vmatprep.subr.mxu0 0.0
      %2574 = vmatpush2.xpose.msra.mxu0 0.0
      %2575 = vmatprep.subr.mxu0 0.0
      %2576 = vmatpush2.xpose.msra.mxu0 0.0
      %2577 = vmatprep.subr.mxu0 0.0
      %2578 = vmatpush2.xpose.msra.mxu0 0.0
      %2579 = vmatprep.subr.mxu0 0.0
      %2580 = vmatpush2.xpose.msra.mxu0 0.0
      %2581 = vmatprep.subr.mxu0 0.0
      %2582 = vmatpush2.xpose.msra.mxu0 0.0
      %2583 = vmatprep.subr.mxu0 0.0
      %2584 = vmatpush2.xpose.msra.mxu0 0.0
      %2585 = vmatprep.subr.mxu0 0.0
      %2586 = vmatpush2.xpose.msra.mxu0 0.0
      %2587 = vmatprep.subr.mxu0 0.0
      %2588 = vmatpush2.xpose.msra.mxu0 0.0
      %2589 = vmatprep.subr.mxu0 0.0
      %2590 = vmatpush2.xpose.msra.mxu0 0.0
      %2591 = vmatprep.subr.mxu0 0.0
      %2592 = vmatpush2.xpose.msra.mxu0 0.0
      %2593 = vmatprep.subr.mxu0 0.0
      %2594 = vmatpush2.xpose.msra.mxu0 0.0
      %2595 = vmatprep.subr.mxu0 0.0
      %2596 = vmatpush2.xpose.msra.mxu0 0.0
      %2597 = vmatprep.subr.mxu0 0.0
      %2598 = vmatpush2.xpose.msra.mxu0 0.0
      %2599 = vmatprep.subr.mxu0 0.0
      %2600 = vmatpush2.xpose.msra.mxu0 0.0
      %2601 = vmatprep.subr.mxu0 0.0
      %2602 = vmatpush2.xpose.msra.mxu0 0.0
      %2603 = vmatprep.mubr.f32.mxu0 0.0
      %v2604 = vand.u32 %v2106, 4294901760
      %2605 = vmatmul.mubr.f32.gmra.mxu0 %v2604
      %v2606 = vpop.f32.mrf.mxu0
      %v2607 = vadd.f32 %v2528, %v2606
      %v2608 = vpop.f32.mrf.mxu0
      %2609 = vmatprep.mubr.f32.mxu0 0.0
      %v2610 = vand.u32 %v2108, 4294901760
      %2611 = vmatmul.mubr.f32.gmra.mxu0 %v2610
      %v2612 = vpop.f32.mrf.mxu0
      %v2613 = vadd.f32 %v2534, %v2612
      %v2614 = vpop.f32.mrf.mxu0
      %2615 = vdwg.mxu0
      %v2616 = vsel %vm1044, %v2607, -inf
      %2617 = vmax.xlane.f32.xlu0 %v2616
      %v2618 = vpop.xlane.xlu0 %2617
      %v2619 = vsel %vm1044, %v2613, -inf
      %2620 = vmax.xlane.f32.xlu0 %v2619
      %v2621 = vpop.xlane.xlu0 %2620
      %v2622 = vsub.f32 %v2607, %v2618
      %v2623 = vsub.f32 %v2613, %v2621
      %v2624 = vmul.f32 %v2622, 1.442695
      %v2625 = vpow.pop %v2624
      %v2626 = vmul.f32 %v2623, 1.442695
      %v2627 = vpow.pop %v2626
      %v2628 = vsel %vm1044, %v2625, 0.0
      %2629 = vadd.xlane.f32.xlu0 %v2628
      %v2630 = vpop.xlane.xlu0 %2629
      %v2631 = vsel %vm1044, %v2627, 0.0
      %2632 = vadd.xlane.f32.xlu0 %v2631
      %v2633 = vpop.xlane.xlu0 %2632
      %v2634 = vrcp.pop %v2630
      %v2635 = vmul.f32 %v2625, %v2634
      %v2636 = vrcp.pop %v2633
      %v2637 = vmul.f32 %v2627, %v2636
      %2638 = vrot.lane.b32.xlu0 %v1025, 48
      %v2639 = vpop.permute.xlu0 %2638
      %2640 = vrot.lane.b32.xlu0 %v1031, 48
      %v2641 = vpop.permute.xlu0 %2640
      %v2645 = vsel %vm1044, %v2635, 0
      %v2648 = vsel %vm1044, %v2637, 0
      %2650 = vmatprep.subr.mxu0 0.0
      %2651 = vmatpush1.msra.mxu0 0.0
      %2652 = vmatprep.subr.mxu0 0.0
      %2653 = vmatpush1.msra.mxu0 0.0
      %2654 = vmatprep.subr.mxu0 0.0
      %2655 = vmatpush1.msra.mxu0 0.0
      %2656 = vmatprep.subr.mxu0 0.0
      %2657 = vmatpush1.msra.mxu0 0.0
      %2658 = vmatprep.subr.mxu0 0.0
      %2659 = vmatpush1.msra.mxu0 0.0
      %2660 = vmatprep.subr.mxu0 0.0
      %2661 = vmatpush1.msra.mxu0 0.0
      %2662 = vmatprep.subr.mxu0 0.0
      %2663 = vmatpush1.msra.mxu0 0.0
      %2664 = vmatprep.subr.mxu0 0.0
      %2665 = vmatpush1.msra.mxu0 0.0
      %2666 = vmatprep.subr.mxu0 0.0
      %2667 = vmatpush1.msra.mxu0 0.0
      %2668 = vmatprep.subr.mxu0 0.0
      %2669 = vmatpush1.msra.mxu0 0.0
      %2670 = vmatprep.subr.mxu0 0.0
      %2671 = vmatpush1.msra.mxu0 0.0
      %2672 = vmatprep.subr.mxu0 0.0
      %2673 = vmatpush1.msra.mxu0 0.0
      %2674 = vmatprep.subr.mxu0 0.0
      %2675 = vmatpush1.msra.mxu0 0.0
      %2676 = vmatprep.subr.mxu0 0.0
      %2677 = vmatpush1.msra.mxu0 0.0
      %2678 = vmatprep.subr.mxu0 0.0
      %v2679 = vand.u32 %v2641, 4294901760
      %2680 = vmatpush1.msra.mxu0 %v2679
      %2681 = vmatprep.subr.mxu0 0.0
      %v2682 = vand.u32 %v2639, 4294901760
      %2683 = vmatpush1.msra.mxu0 %v2682
      %2684 = vmatprep.subr.mxu0 0.0
      %2685 = vmatpush2.msra.mxu0 0.0
      %2686 = vmatprep.subr.mxu0 0.0
      %2687 = vmatpush2.msra.mxu0 0.0
      %2688 = vmatprep.subr.mxu0 0.0
      %2689 = vmatpush2.msra.mxu0 0.0
      %2690 = vmatprep.subr.mxu0 0.0
      %2691 = vmatpush2.msra.mxu0 0.0
      %2692 = vmatprep.subr.mxu0 0.0
      %2693 = vmatpush2.msra.mxu0 0.0
      %2694 = vmatprep.subr.mxu0 0.0
      %2695 = vmatpush2.msra.mxu0 0.0
      %2696 = vmatprep.subr.mxu0 0.0
      %2697 = vmatpush2.msra.mxu0 0.0
      %2698 = vmatprep.subr.mxu0 0.0
      %2699 = vmatpush2.msra.mxu0 0.0
      %2700 = vmatprep.subr.mxu0 0.0
      %2701 = vmatpush2.msra.mxu0 0.0
      %2702 = vmatprep.subr.mxu0 0.0
      %2703 = vmatpush2.msra.mxu0 0.0
      %2704 = vmatprep.subr.mxu0 0.0
      %2705 = vmatpush2.msra.mxu0 0.0
      %2706 = vmatprep.subr.mxu0 0.0
      %2707 = vmatpush2.msra.mxu0 0.0
      %2708 = vmatprep.subr.mxu0 0.0
      %2709 = vmatpush2.msra.mxu0 0.0
      %2710 = vmatprep.subr.mxu0 0.0
      %2711 = vmatpush2.msra.mxu0 0.0
      %2712 = vmatprep.subr.mxu0 0.0
      %2713 = vmatpush2.msra.mxu0 0.0
      %2714 = vmatprep.subr.mxu0 0.0
      %2715 = vmatpush2.msra.mxu0 0.0
      %2716 = vmatprep.mubr.f32.mxu0 0.0
      %v2717 = vand.u32 %v2645, 4294901760
      %v2718 = vsub.f32 %v2645, %v2717
      %v2719 = vand.u32 %v2718, 4294901760
      %v2720 = vsub.f32 %v2718, %v2719
      %v2721 = vand.u32 %v2720, 4294901760
      %2722 = vmatmul.mubr.f32.gmra.mxu0 %v2721
      %v2723 = vpop.f32.mrf.mxu0
      %v2724 = vadd.f32 0.0, %v2723
      %v2725 = vpop.f32.mrf.mxu0
      %2726 = vmatprep.mubr.f32.mxu0 0.0
      %v2727 = vand.u32 %v2648, 4294901760
      %v2728 = vsub.f32 %v2648, %v2727
      %v2729 = vand.u32 %v2728, 4294901760
      %v2730 = vsub.f32 %v2728, %v2729
      %v2731 = vand.u32 %v2730, 4294901760
      %2732 = vmatmul.mubr.f32.gmra.mxu0 %v2731
      %v2733 = vpop.f32.mrf.mxu0
      %v2734 = vadd.f32 0.0, %v2733
      %v2735 = vpop.f32.mrf.mxu0
      %2736 = vdwg.mxu0
      %2737 = vmatprep.subr.mxu0 0.0
      %2738 = vmatpush1.msra.mxu0 0.0
      %2739 = vmatprep.subr.mxu0 0.0
      %2740 = vmatpush1.msra.mxu0 0.0
      %2741 = vmatprep.subr.mxu0 0.0
      %2742 = vmatpush1.msra.mxu0 0.0
      %2743 = vmatprep.subr.mxu0 0.0
      %2744 = vmatpush1.msra.mxu0 0.0
      %2745 = vmatprep.subr.mxu0 0.0
      %2746 = vmatpush1.msra.mxu0 0.0
      %2747 = vmatprep.subr.mxu0 0.0
      %2748 = vmatpush1.msra.mxu0 0.0
      %2749 = vmatprep.subr.mxu0 0.0
      %2750 = vmatpush1.msra.mxu0 0.0
      %2751 = vmatprep.subr.mxu0 0.0
      %2752 = vmatpush1.msra.mxu0 0.0
      %2753 = vmatprep.subr.mxu0 0.0
      %2754 = vmatpush1.msra.mxu0 0.0
      %2755 = vmatprep.subr.mxu0 0.0
      %2756 = vmatpush1.msra.mxu0 0.0
      %2757 = vmatprep.subr.mxu0 0.0
      %2758 = vmatpush1.msra.mxu0 0.0
      %2759 = vmatprep.subr.mxu0 0.0
      %2760 = vmatpush1.msra.mxu0 0.0
      %2761 = vmatprep.subr.mxu0 0.0
      %2762 = vmatpush1.msra.mxu0 0.0
      %2763 = vmatprep.subr.mxu0 0.0
      %2764 = vmatpush1.msra.mxu0 0.0
      %2765 = vmatprep.subr.mxu0 0.0
      %v2766 = vand.u32 %v2641, 4294901760
      %v2767 = vsub.f32 %v2641, %v2766
      %v2768 = vand.u32 %v2767, 4294901760
      %v2769 = vsub.f32 %v2767, %v2768
      %v2770 = vand.u32 %v2769, 4294901760
      %2771 = vmatpush1.msra.mxu0 %v2770
      %2772 = vmatprep.subr.mxu0 0.0
      %v2773 = vand.u32 %v2639, 4294901760
      %v2774 = vsub.f32 %v2639, %v2773
      %v2775 = vand.u32 %v2774, 4294901760
      %v2776 = vsub.f32 %v2774, %v2775
      %v2777 = vand.u32 %v2776, 4294901760
      %2778 = vmatpush1.msra.mxu0 %v2777
      %2779 = vmatprep.subr.mxu0 0.0
      %2780 = vmatpush2.msra.mxu0 0.0
      %2781 = vmatprep.subr.mxu0 0.0
      %2782 = vmatpush2.msra.mxu0 0.0
      %2783 = vmatprep.subr.mxu0 0.0
      %2784 = vmatpush2.msra.mxu0 0.0
      %2785 = vmatprep.subr.mxu0 0.0
      %2786 = vmatpush2.msra.mxu0 0.0
      %2787 = vmatprep.subr.mxu0 0.0
      %2788 = vmatpush2.msra.mxu0 0.0
      %2789 = vmatprep.subr.mxu0 0.0
      %2790 = vmatpush2.msra.mxu0 0.0
      %2791 = vmatprep.subr.mxu0 0.0
      %2792 = vmatpush2.msra.mxu0 0.0
      %2793 = vmatprep.subr.mxu0 0.0
      %2794 = vmatpush2.msra.mxu0 0.0
      %2795 = vmatprep.subr.mxu0 0.0
      %2796 = vmatpush2.msra.mxu0 0.0
      %2797 = vmatprep.subr.mxu0 0.0
      %2798 = vmatpush2.msra.mxu0 0.0
      %2799 = vmatprep.subr.mxu0 0.0
      %2800 = vmatpush2.msra.mxu0 0.0
      %2801 = vmatprep.subr.mxu0 0.0
      %2802 = vmatpush2.msra.mxu0 0.0
      %2803 = vmatprep.subr.mxu0 0.0
      %2804 = vmatpush2.msra.mxu0 0.0
      %2805 = vmatprep.subr.mxu0 0.0
      %2806 = vmatpush2.msra.mxu0 0.0
      %2807 = vmatprep.subr.mxu0 0.0
      %2808 = vmatpush2.msra.mxu0 0.0
      %2809 = vmatprep.subr.mxu0 0.0
      %2810 = vmatpush2.msra.mxu0 0.0
      %2811 = vmatprep.mubr.f32.mxu0 0.0
      %v2812 = vand.u32 %v2645, 4294901760
      %2813 = vmatmul.mubr.f32.gmra.mxu0 %v2812
      %v2814 = vpop.f32.mrf.mxu0
      %v2815 = vadd.f32 %v2724, %v2814
      %v2816 = vpop.f32.mrf.mxu0
      %2817 = vmatprep.mubr.f32.mxu0 0.0
      %v2818 = vand.u32 %v2648, 4294901760
      %2819 = vmatmul.mubr.f32.gmra.mxu0 %v2818
      %v2820 = vpop.f32.mrf.mxu0
      %v2821 = vadd.f32 %v2734, %v2820
      %v2822 = vpop.f32.mrf.mxu0
      %2823 = vdwg.mxu0
      %2824 = vmatprep.subr.mxu0 0.0
      %2825 = vmatpush1.msra.mxu0 0.0
      %2826 = vmatprep.subr.mxu0 0.0
      %2827 = vmatpush1.msra.mxu0 0.0
      %2828 = vmatprep.subr.mxu0 0.0
      %2829 = vmatpush1.msra.mxu0 0.0
      %2830 = vmatprep.subr.mxu0 0.0
      %2831 = vmatpush1.msra.mxu0 0.0
      %2832 = vmatprep.subr.mxu0 0.0
      %2833 = vmatpush1.msra.mxu0 0.0
      %2834 = vmatprep.subr.mxu0 0.0
      %2835 = vmatpush1.msra.mxu0 0.0
      %2836 = vmatprep.subr.mxu0 0.0
      %2837 = vmatpush1.msra.mxu0 0.0
      %2838 = vmatprep.subr.mxu0 0.0
      %2839 = vmatpush1.msra.mxu0 0.0
      %2840 = vmatprep.subr.mxu0 0.0
      %2841 = vmatpush1.msra.mxu0 0.0
      %2842 = vmatprep.subr.mxu0 0.0
      %2843 = vmatpush1.msra.mxu0 0.0
      %2844 = vmatprep.subr.mxu0 0.0
      %2845 = vmatpush1.msra.mxu0 0.0
      %2846 = vmatprep.subr.mxu0 0.0
      %2847 = vmatpush1.msra.mxu0 0.0
      %2848 = vmatprep.subr.mxu0 0.0
      %2849 = vmatpush1.msra.mxu0 0.0
      %2850 = vmatprep.subr.mxu0 0.0
      %2851 = vmatpush1.msra.mxu0 0.0
      %2852 = vmatprep.subr.mxu0 0.0
      %v2853 = vand.u32 %v2641, 4294901760
      %v2854 = vsub.f32 %v2641, %v2853
      %2855 = vmatpush1.msra.mxu0 %v2854
      %2856 = vmatprep.subr.mxu0 0.0
      %v2857 = vand.u32 %v2639, 4294901760
      %v2858 = vsub.f32 %v2639, %v2857
      %2859 = vmatpush1.msra.mxu0 %v2858
      %2860 = vmatprep.subr.mxu0 0.0
      %2861 = vmatpush2.msra.mxu0 0.0
      %2862 = vmatprep.subr.mxu0 0.0
      %2863 = vmatpush2.msra.mxu0 0.0
      %2864 = vmatprep.subr.mxu0 0.0
      %2865 = vmatpush2.msra.mxu0 0.0
      %2866 = vmatprep.subr.mxu0 0.0
      %2867 = vmatpush2.msra.mxu0 0.0
      %2868 = vmatprep.subr.mxu0 0.0
      %2869 = vmatpush2.msra.mxu0 0.0
      %2870 = vmatprep.subr.mxu0 0.0
      %2871 = vmatpush2.msra.mxu0 0.0
      %2872 = vmatprep.subr.mxu0 0.0
      %2873 = vmatpush2.msra.mxu0 0.0
      %2874 = vmatprep.subr.mxu0 0.0
      %2875 = vmatpush2.msra.mxu0 0.0
      %2876 = vmatprep.subr.mxu0 0.0
      %2877 = vmatpush2.msra.mxu0 0.0
      %2878 = vmatprep.subr.mxu0 0.0
      %2879 = vmatpush2.msra.mxu0 0.0
      %2880 = vmatprep.subr.mxu0 0.0
      %2881 = vmatpush2.msra.mxu0 0.0
      %2882 = vmatprep.subr.mxu0 0.0
      %2883 = vmatpush2.msra.mxu0 0.0
      %2884 = vmatprep.subr.mxu0 0.0
      %2885 = vmatpush2.msra.mxu0 0.0
      %2886 = vmatprep.subr.mxu0 0.0
      %2887 = vmatpush2.msra.mxu0 0.0
      %2888 = vmatprep.subr.mxu0 0.0
      %2889 = vmatpush2.msra.mxu0 0.0
      %2890 = vmatprep.subr.mxu0 0.0
      %2891 = vmatpush2.msra.mxu0 0.0
      %2892 = vmatprep.mubr.f32.mxu0 0.0
      %v2893 = vand.u32 %v2645, 4294901760
      %v2894 = vsub.f32 %v2645, %v2893
      %2895 = vmatmul.mubr.f32.gmra.mxu0 %v2894
      %v2896 = vpop.f32.mrf.mxu0
      %v2897 = vadd.f32 %v2815, %v2896
      %v2898 = vpop.f32.mrf.mxu0
      %2899 = vmatprep.mubr.f32.mxu0 0.0
      %v2900 = vand.u32 %v2648, 4294901760
      %v2901 = vsub.f32 %v2648, %v2900
      %2902 = vmatmul.mubr.f32.gmra.mxu0 %v2901
      %v2903 = vpop.f32.mrf.mxu0
      %v2904 = vadd.f32 %v2821, %v2903
      %v2905 = vpop.f32.mrf.mxu0
      %2906 = vdwg.mxu0
      %2907 = vmatprep.subr.mxu0 0.0
      %2908 = vmatpush1.msra.mxu0 0.0
      %2909 = vmatprep.subr.mxu0 0.0
      %2910 = vmatpush1.msra.mxu0 0.0
      %2911 = vmatprep.subr.mxu0 0.0
      %2912 = vmatpush1.msra.mxu0 0.0
      %2913 = vmatprep.subr.mxu0 0.0
      %2914 = vmatpush1.msra.mxu0 0.0
      %2915 = vmatprep.subr.mxu0 0.0
      %2916 = vmatpush1.msra.mxu0 0.0
      %2917 = vmatprep.subr.mxu0 0.0
      %2918 = vmatpush1.msra.mxu0 0.0
      %2919 = vmatprep.subr.mxu0 0.0
      %2920 = vmatpush1.msra.mxu0 0.0
      %2921 = vmatprep.subr.mxu0 0.0
      %2922 = vmatpush1.msra.mxu0 0.0
      %2923 = vmatprep.subr.mxu0 0.0
      %2924 = vmatpush1.msra.mxu0 0.0
      %2925 = vmatprep.subr.mxu0 0.0
      %2926 = vmatpush1.msra.mxu0 0.0
      %2927 = vmatprep.subr.mxu0 0.0
      %2928 = vmatpush1.msra.mxu0 0.0
      %2929 = vmatprep.subr.mxu0 0.0
      %2930 = vmatpush1.msra.mxu0 0.0
      %2931 = vmatprep.subr.mxu0 0.0
      %2932 = vmatpush1.msra.mxu0 0.0
      %2933 = vmatprep.subr.mxu0 0.0
      %2934 = vmatpush1.msra.mxu0 0.0
      %2935 = vmatprep.subr.mxu0 0.0
      %v2936 = vand.u32 %v2641, 4294901760
      %2937 = vmatpush1.msra.mxu0 %v2936
      %2938 = vmatprep.subr.mxu0 0.0
      %v2939 = vand.u32 %v2639, 4294901760
      %2940 = vmatpush1.msra.mxu0 %v2939
      %2941 = vmatprep.subr.mxu0 0.0
      %2942 = vmatpush2.msra.mxu0 0.0
      %2943 = vmatprep.subr.mxu0 0.0
      %2944 = vmatpush2.msra.mxu0 0.0
      %2945 = vmatprep.subr.mxu0 0.0
      %2946 = vmatpush2.msra.mxu0 0.0
      %2947 = vmatprep.subr.mxu0 0.0
      %2948 = vmatpush2.msra.mxu0 0.0
      %2949 = vmatprep.subr.mxu0 0.0
      %2950 = vmatpush2.msra.mxu0 0.0
      %2951 = vmatprep.subr.mxu0 0.0
      %2952 = vmatpush2.msra.mxu0 0.0
      %2953 = vmatprep.subr.mxu0 0.0
      %2954 = vmatpush2.msra.mxu0 0.0
      %2955 = vmatprep.subr.mxu0 0.0
      %2956 = vmatpush2.msra.mxu0 0.0
      %2957 = vmatprep.subr.mxu0 0.0
      %2958 = vmatpush2.msra.mxu0 0.0
      %2959 = vmatprep.subr.mxu0 0.0
      %2960 = vmatpush2.msra.mxu0 0.0
      %2961 = vmatprep.subr.mxu0 0.0
      %2962 = vmatpush2.msra.mxu0 0.0
      %2963 = vmatprep.subr.mxu0 0.0
      %2964 = vmatpush2.msra.mxu0 0.0
      %2965 = vmatprep.subr.mxu0 0.0
      %2966 = vmatpush2.msra.mxu0 0.0
      %2967 = vmatprep.subr.mxu0 0.0
      %2968 = vmatpush2.msra.mxu0 0.0
      %2969 = vmatprep.subr.mxu0 0.0
      %2970 = vmatpush2.msra.mxu0 0.0
      %2971 = vmatprep.subr.mxu0 0.0
      %2972 = vmatpush2.msra.mxu0 0.0
      %2973 = vmatprep.mubr.f32.mxu0 0.0
      %v2974 = vand.u32 %v2645, 4294901760
      %v2975 = vsub.f32 %v2645, %v2974
      %v2976 = vand.u32 %v2975, 4294901760
      %2977 = vmatmul.mubr.f32.gmra.mxu0 %v2976
      %v2978 = vpop.f32.mrf.mxu0
      %v2979 = vadd.f32 %v2897, %v2978
      %v2980 = vpop.f32.mrf.mxu0
      %2981 = vmatprep.mubr.f32.mxu0 0.0
      %v2982 = vand.u32 %v2648, 4294901760
      %v2983 = vsub.f32 %v2648, %v2982
      %v2984 = vand.u32 %v2983, 4294901760
      %2985 = vmatmul.mubr.f32.gmra.mxu0 %v2984
      %v2986 = vpop.f32.mrf.mxu0
      %v2987 = vadd.f32 %v2904, %v2986
      %v2988 = vpop.f32.mrf.mxu0
      %2989 = vdwg.mxu0
      %2990 = vmatprep.subr.mxu0 0.0
      %2991 = vmatpush1.msra.mxu0 0.0
      %2992 = vmatprep.subr.mxu0 0.0
      %2993 = vmatpush1.msra.mxu0 0.0
      %2994 = vmatprep.subr.mxu0 0.0
      %2995 = vmatpush1.msra.mxu0 0.0
      %2996 = vmatprep.subr.mxu0 0.0
      %2997 = vmatpush1.msra.mxu0 0.0
      %2998 = vmatprep.subr.mxu0 0.0
      %2999 = vmatpush1.msra.mxu0 0.0
      %3000 = vmatprep.subr.mxu0 0.0
      %3001 = vmatpush1.msra.mxu0 0.0
      %3002 = vmatprep.subr.mxu0 0.0
      %3003 = vmatpush1.msra.mxu0 0.0
      %3004 = vmatprep.subr.mxu0 0.0
      %3005 = vmatpush1.msra.mxu0 0.0
      %3006 = vmatprep.subr.mxu0 0.0
      %3007 = vmatpush1.msra.mxu0 0.0
      %3008 = vmatprep.subr.mxu0 0.0
      %3009 = vmatpush1.msra.mxu0 0.0
      %3010 = vmatprep.subr.mxu0 0.0
      %3011 = vmatpush1.msra.mxu0 0.0
      %3012 = vmatprep.subr.mxu0 0.0
      %3013 = vmatpush1.msra.mxu0 0.0
      %3014 = vmatprep.subr.mxu0 0.0
      %3015 = vmatpush1.msra.mxu0 0.0
      %3016 = vmatprep.subr.mxu0 0.0
      %3017 = vmatpush1.msra.mxu0 0.0
      %3018 = vmatprep.subr.mxu0 0.0
      %v3019 = vand.u32 %v2641, 4294901760
      %v3020 = vsub.f32 %v2641, %v3019
      %v3021 = vand.u32 %v3020, 4294901760
      %3022 = vmatpush1.msra.mxu0 %v3021
      %3023 = vmatprep.subr.mxu0 0.0
      %v3024 = vand.u32 %v2639, 4294901760
      %v3025 = vsub.f32 %v2639, %v3024
      %v3026 = vand.u32 %v3025, 4294901760
      %3027 = vmatpush1.msra.mxu0 %v3026
      %3028 = vmatprep.subr.mxu0 0.0
      %3029 = vmatpush2.msra.mxu0 0.0
      %3030 = vmatprep.subr.mxu0 0.0
      %3031 = vmatpush2.msra.mxu0 0.0
      %3032 = vmatprep.subr.mxu0 0.0
      %3033 = vmatpush2.msra.mxu0 0.0
      %3034 = vmatprep.subr.mxu0 0.0
      %3035 = vmatpush2.msra.mxu0 0.0
      %3036 = vmatprep.subr.mxu0 0.0
      %3037 = vmatpush2.msra.mxu0 0.0
      %3038 = vmatprep.subr.mxu0 0.0
      %3039 = vmatpush2.msra.mxu0 0.0
      %3040 = vmatprep.subr.mxu0 0.0
      %3041 = vmatpush2.msra.mxu0 0.0
      %3042 = vmatprep.subr.mxu0 0.0
      %3043 = vmatpush2.msra.mxu0 0.0
      %3044 = vmatprep.subr.mxu0 0.0
      %3045 = vmatpush2.msra.mxu0 0.0
      %3046 = vmatprep.subr.mxu0 0.0
      %3047 = vmatpush2.msra.mxu0 0.0
      %3048 = vmatprep.subr.mxu0 0.0
      %3049 = vmatpush2.msra.mxu0 0.0
      %3050 = vmatprep.subr.mxu0 0.0
      %3051 = vmatpush2.msra.mxu0 0.0
      %3052 = vmatprep.subr.mxu0 0.0
      %3053 = vmatpush2.msra.mxu0 0.0
      %3054 = vmatprep.subr.mxu0 0.0
      %3055 = vmatpush2.msra.mxu0 0.0
      %3056 = vmatprep.subr.mxu0 0.0
      %3057 = vmatpush2.msra.mxu0 0.0
      %3058 = vmatprep.subr.mxu0 0.0
      %3059 = vmatpush2.msra.mxu0 0.0
      %3060 = vmatprep.mubr.f32.mxu0 0.0
      %v3061 = vand.u32 %v2645, 4294901760
      %3062 = vmatmul.mubr.f32.gmra.mxu0 %v3061
      %v3063 = vpop.f32.mrf.mxu0
      %v3064 = vadd.f32 %v2979, %v3063
      %v3065 = vpop.f32.mrf.mxu0
      %3066 = vmatprep.mubr.f32.mxu0 0.0
      %v3067 = vand.u32 %v2648, 4294901760
      %3068 = vmatmul.mubr.f32.gmra.mxu0 %v3067
      %v3069 = vpop.f32.mrf.mxu0
      %v3070 = vadd.f32 %v2987, %v3069
      %v3071 = vpop.f32.mrf.mxu0
      %3072 = vdwg.mxu0
      %3073 = vmatprep.subr.mxu0 0.0
      %3074 = vmatpush1.msra.mxu0 0.0
      %3075 = vmatprep.subr.mxu0 0.0
      %3076 = vmatpush1.msra.mxu0 0.0
      %3077 = vmatprep.subr.mxu0 0.0
      %3078 = vmatpush1.msra.mxu0 0.0
      %3079 = vmatprep.subr.mxu0 0.0
      %3080 = vmatpush1.msra.mxu0 0.0
      %3081 = vmatprep.subr.mxu0 0.0
      %3082 = vmatpush1.msra.mxu0 0.0
      %3083 = vmatprep.subr.mxu0 0.0
      %3084 = vmatpush1.msra.mxu0 0.0
      %3085 = vmatprep.subr.mxu0 0.0
      %3086 = vmatpush1.msra.mxu0 0.0
      %3087 = vmatprep.subr.mxu0 0.0
      %3088 = vmatpush1.msra.mxu0 0.0
      %3089 = vmatprep.subr.mxu0 0.0
      %3090 = vmatpush1.msra.mxu0 0.0
      %3091 = vmatprep.subr.mxu0 0.0
      %3092 = vmatpush1.msra.mxu0 0.0
      %3093 = vmatprep.subr.mxu0 0.0
      %3094 = vmatpush1.msra.mxu0 0.0
      %3095 = vmatprep.subr.mxu0 0.0
      %3096 = vmatpush1.msra.mxu0 0.0
      %3097 = vmatprep.subr.mxu0 0.0
      %3098 = vmatpush1.msra.mxu0 0.0
      %3099 = vmatprep.subr.mxu0 0.0
      %3100 = vmatpush1.msra.mxu0 0.0
      %3101 = vmatprep.subr.mxu0 0.0
      %v3102 = vand.u32 %v2641, 4294901760
      %3103 = vmatpush1.msra.mxu0 %v3102
      %3104 = vmatprep.subr.mxu0 0.0
      %v3105 = vand.u32 %v2639, 4294901760
      %3106 = vmatpush1.msra.mxu0 %v3105
      %3107 = vmatprep.subr.mxu0 0.0
      %3108 = vmatpush2.msra.mxu0 0.0
      %3109 = vmatprep.subr.mxu0 0.0
      %3110 = vmatpush2.msra.mxu0 0.0
      %3111 = vmatprep.subr.mxu0 0.0
      %3112 = vmatpush2.msra.mxu0 0.0
      %3113 = vmatprep.subr.mxu0 0.0
      %3114 = vmatpush2.msra.mxu0 0.0
      %3115 = vmatprep.subr.mxu0 0.0
      %3116 = vmatpush2.msra.mxu0 0.0
      %3117 = vmatprep.subr.mxu0 0.0
      %3118 = vmatpush2.msra.mxu0 0.0
      %3119 = vmatprep.subr.mxu0 0.0
      %3120 = vmatpush2.msra.mxu0 0.0
      %3121 = vmatprep.subr.mxu0 0.0
      %3122 = vmatpush2.msra.mxu0 0.0
      %3123 = vmatprep.subr.mxu0 0.0
      %3124 = vmatpush2.msra.mxu0 0.0
      %3125 = vmatprep.subr.mxu0 0.0
      %3126 = vmatpush2.msra.mxu0 0.0
      %3127 = vmatprep.subr.mxu0 0.0
      %3128 = vmatpush2.msra.mxu0 0.0
      %3129 = vmatprep.subr.mxu0 0.0
      %3130 = vmatpush2.msra.mxu0 0.0
      %3131 = vmatprep.subr.mxu0 0.0
      %3132 = vmatpush2.msra.mxu0 0.0
      %3133 = vmatprep.subr.mxu0 0.0
      %3134 = vmatpush2.msra.mxu0 0.0
      %3135 = vmatprep.subr.mxu0 0.0
      %3136 = vmatpush2.msra.mxu0 0.0
      %3137 = vmatprep.subr.mxu0 0.0
      %3138 = vmatpush2.msra.mxu0 0.0
      %3139 = vmatprep.mubr.f32.mxu0 0.0
      %v3140 = vand.u32 %v2645, 4294901760
      %3141 = vmatmul.mubr.f32.gmra.mxu0 %v3140
      %v3142 = vpop.f32.mrf.mxu0
      %v3143 = vadd.f32 %v3064, %v3142
      %v3144 = vpop.f32.mrf.mxu0
      %3145 = vmatprep.mubr.f32.mxu0 0.0
      %v3146 = vand.u32 %v2648, 4294901760
      %3147 = vmatmul.mubr.f32.gmra.mxu0 %v3146
      %v3148 = vpop.f32.mrf.mxu0
      %v3149 = vadd.f32 %v3070, %v3148
      %v3150 = vpop.f32.mrf.mxu0
      %3151 = vdwg.mxu0
      %v3152 = vld [vmem:[%s5 + $0x10] sm:$0xff]
      %v3153 = vld [vmem:[%s5 + $0x18] sm:$0xff]
      %v3155 = vsel %vm1044, %v3143, 0
      %v3158 = vsel %vm1044, %v3149, 0
      %3160 = vmatprep.subr.mxu0 0.0
      %3161 = vmatpush1.msra.mxu0 0.0
      %3162 = vmatprep.subr.mxu0 0.0
      %3163 = vmatpush1.msra.mxu0 0.0
      %3164 = vmatprep.subr.mxu0 0.0
      %3165 = vmatpush1.msra.mxu0 0.0
      %3166 = vmatprep.subr.mxu0 0.0
      %3167 = vmatpush1.msra.mxu0 0.0
      %3168 = vmatprep.subr.mxu0 0.0
      %3169 = vmatpush1.msra.mxu0 0.0
      %3170 = vmatprep.subr.mxu0 0.0
      %3171 = vmatpush1.msra.mxu0 0.0
      %3172 = vmatprep.subr.mxu0 0.0
      %3173 = vmatpush1.msra.mxu0 0.0
      %3174 = vmatprep.subr.mxu0 0.0
      %3175 = vmatpush1.msra.mxu0 0.0
      %3176 = vmatprep.subr.mxu0 0.0
      %3177 = vmatpush1.msra.mxu0 0.0
      %3178 = vmatprep.subr.mxu0 0.0
      %3179 = vmatpush1.msra.mxu0 0.0
      %3180 = vmatprep.subr.mxu0 0.0
      %3181 = vmatpush1.msra.mxu0 0.0
      %3182 = vmatprep.subr.mxu0 0.0
      %3183 = vmatpush1.msra.mxu0 0.0
      %3184 = vmatprep.subr.mxu0 0.0
      %3185 = vmatpush1.msra.mxu0 0.0
      %3186 = vmatprep.subr.mxu0 0.0
      %3187 = vmatpush1.msra.mxu0 0.0
      %3188 = vmatprep.subr.mxu0 0.0
      %v3189 = vand.u32 %v3153, 4294901760
      %3190 = vmatpush1.msra.mxu0 %v3189
      %3191 = vmatprep.subr.mxu0 0.0
      %v3192 = vand.u32 %v3152, 4294901760
      %3193 = vmatpush1.msra.mxu0 %v3192
      %3194 = vmatprep.subr.mxu0 0.0
      %3195 = vmatpush2.msra.mxu0 0.0
      %3196 = vmatprep.subr.mxu0 0.0
      %3197 = vmatpush2.msra.mxu0 0.0
      %3198 = vmatprep.subr.mxu0 0.0
      %3199 = vmatpush2.msra.mxu0 0.0
      %3200 = vmatprep.subr.mxu0 0.0
      %3201 = vmatpush2.msra.mxu0 0.0
      %3202 = vmatprep.subr.mxu0 0.0
      %3203 = vmatpush2.msra.mxu0 0.0
      %3204 = vmatprep.subr.mxu0 0.0
      %3205 = vmatpush2.msra.mxu0 0.0
      %3206 = vmatprep.subr.mxu0 0.0
      %3207 = vmatpush2.msra.mxu0 0.0
      %3208 = vmatprep.subr.mxu0 0.0
      %3209 = vmatpush2.msra.mxu0 0.0
      %3210 = vmatprep.subr.mxu0 0.0
      %3211 = vmatpush2.msra.mxu0 0.0
      %3212 = vmatprep.subr.mxu0 0.0
      %3213 = vmatpush2.msra.mxu0 0.0
      %3214 = vmatprep.subr.mxu0 0.0
      %3215 = vmatpush2.msra.mxu0 0.0
      %3216 = vmatprep.subr.mxu0 0.0
      %3217 = vmatpush2.msra.mxu0 0.0
      %3218 = vmatprep.subr.mxu0 0.0
      %3219 = vmatpush2.msra.mxu0 0.0
      %3220 = vmatprep.subr.mxu0 0.0
      %3221 = vmatpush2.msra.mxu0 0.0
      %3222 = vmatprep.subr.mxu0 0.0
      %3223 = vmatpush2.msra.mxu0 0.0
      %3224 = vmatprep.subr.mxu0 0.0
      %3225 = vmatpush2.msra.mxu0 0.0
      %3226 = vmatprep.mubr.f32.mxu0 0.0
      %v3227 = vand.u32 %v3155, 4294901760
      %v3228 = vsub.f32 %v3155, %v3227
      %v3229 = vand.u32 %v3228, 4294901760
      %v3230 = vsub.f32 %v3228, %v3229
      %v3231 = vand.u32 %v3230, 4294901760
      %3232 = vmatmul.mubr.f32.gmra.mxu0 %v3231
      %v3233 = vpop.f32.mrf.mxu0
      %v3234 = vadd.f32 0.0, %v3233
      %v3235 = vpop.f32.mrf.mxu0
      %3236 = vmatprep.mubr.f32.mxu0 0.0
      %v3237 = vand.u32 %v3158, 4294901760
      %v3238 = vsub.f32 %v3158, %v3237
      %v3239 = vand.u32 %v3238, 4294901760
      %v3240 = vsub.f32 %v3238, %v3239
      %v3241 = vand.u32 %v3240, 4294901760
      %3242 = vmatmul.mubr.f32.gmra.mxu0 %v3241
      %v3243 = vpop.f32.mrf.mxu0
      %v3244 = vadd.f32 0.0, %v3243
      %v3245 = vpop.f32.mrf.mxu0
      %3246 = vdwg.mxu0
      %3247 = vmatprep.subr.mxu0 0.0
      %3248 = vmatpush1.msra.mxu0 0.0
      %3249 = vmatprep.subr.mxu0 0.0
      %3250 = vmatpush1.msra.mxu0 0.0
      %3251 = vmatprep.subr.mxu0 0.0
      %3252 = vmatpush1.msra.mxu0 0.0
      %3253 = vmatprep.subr.mxu0 0.0
      %3254 = vmatpush1.msra.mxu0 0.0
      %3255 = vmatprep.subr.mxu0 0.0
      %3256 = vmatpush1.msra.mxu0 0.0
      %3257 = vmatprep.subr.mxu0 0.0
      %3258 = vmatpush1.msra.mxu0 0.0
      %3259 = vmatprep.subr.mxu0 0.0
      %3260 = vmatpush1.msra.mxu0 0.0
      %3261 = vmatprep.subr.mxu0 0.0
      %3262 = vmatpush1.msra.mxu0 0.0
      %3263 = vmatprep.subr.mxu0 0.0
      %3264 = vmatpush1.msra.mxu0 0.0
      %3265 = vmatprep.subr.mxu0 0.0
      %3266 = vmatpush1.msra.mxu0 0.0
      %3267 = vmatprep.subr.mxu0 0.0
      %3268 = vmatpush1.msra.mxu0 0.0
      %3269 = vmatprep.subr.mxu0 0.0
      %3270 = vmatpush1.msra.mxu0 0.0
      %3271 = vmatprep.subr.mxu0 0.0
      %3272 = vmatpush1.msra.mxu0 0.0
      %3273 = vmatprep.subr.mxu0 0.0
      %3274 = vmatpush1.msra.mxu0 0.0
      %3275 = vmatprep.subr.mxu0 0.0
      %v3276 = vand.u32 %v3153, 4294901760
      %v3277 = vsub.f32 %v3153, %v3276
      %v3278 = vand.u32 %v3277, 4294901760
      %v3279 = vsub.f32 %v3277, %v3278
      %v3280 = vand.u32 %v3279, 4294901760
      %3281 = vmatpush1.msra.mxu0 %v3280
      %3282 = vmatprep.subr.mxu0 0.0
      %v3283 = vand.u32 %v3152, 4294901760
      %v3284 = vsub.f32 %v3152, %v3283
      %v3285 = vand.u32 %v3284, 4294901760
      %v3286 = vsub.f32 %v3284, %v3285
      %v3287 = vand.u32 %v3286, 4294901760
      %3288 = vmatpush1.msra.mxu0 %v3287
      %3289 = vmatprep.subr.mxu0 0.0
      %3290 = vmatpush2.msra.mxu0 0.0
      %3291 = vmatprep.subr.mxu0 0.0
      %3292 = vmatpush2.msra.mxu0 0.0
      %3293 = vmatprep.subr.mxu0 0.0
      %3294 = vmatpush2.msra.mxu0 0.0
      %3295 = vmatprep.subr.mxu0 0.0
      %3296 = vmatpush2.msra.mxu0 0.0
      %3297 = vmatprep.subr.mxu0 0.0
      %3298 = vmatpush2.msra.mxu0 0.0
      %3299 = vmatprep.subr.mxu0 0.0
      %3300 = vmatpush2.msra.mxu0 0.0
      %3301 = vmatprep.subr.mxu0 0.0
      %3302 = vmatpush2.msra.mxu0 0.0
      %3303 = vmatprep.subr.mxu0 0.0
      %3304 = vmatpush2.msra.mxu0 0.0
      %3305 = vmatprep.subr.mxu0 0.0
      %3306 = vmatpush2.msra.mxu0 0.0
      %3307 = vmatprep.subr.mxu0 0.0
      %3308 = vmatpush2.msra.mxu0 0.0
      %3309 = vmatprep.subr.mxu0 0.0
      %3310 = vmatpush2.msra.mxu0 0.0
      %3311 = vmatprep.subr.mxu0 0.0
      %3312 = vmatpush2.msra.mxu0 0.0
      %3313 = vmatprep.subr.mxu0 0.0
      %3314 = vmatpush2.msra.mxu0 0.0
      %3315 = vmatprep.subr.mxu0 0.0
      %3316 = vmatpush2.msra.mxu0 0.0
      %3317 = vmatprep.subr.mxu0 0.0
      %3318 = vmatpush2.msra.mxu0 0.0
      %3319 = vmatprep.subr.mxu0 0.0
      %3320 = vmatpush2.msra.mxu0 0.0
      %3321 = vmatprep.mubr.f32.mxu0 0.0
      %v3322 = vand.u32 %v3155, 4294901760
      %3323 = vmatmul.mubr.f32.gmra.mxu0 %v3322
      %v3324 = vpop.f32.mrf.mxu0
      %v3325 = vadd.f32 %v3234, %v3324
      %v3326 = vpop.f32.mrf.mxu0
      %3327 = vmatprep.mubr.f32.mxu0 0.0
      %v3328 = vand.u32 %v3158, 4294901760
      %3329 = vmatmul.mubr.f32.gmra.mxu0 %v3328
      %v3330 = vpop.f32.mrf.mxu0
      %v3331 = vadd.f32 %v3244, %v3330
      %v3332 = vpop.f32.mrf.mxu0
      %3333 = vdwg.mxu0
      %3334 = vmatprep.subr.mxu0 0.0
      %3335 = vmatpush1.msra.mxu0 0.0
      %3336 = vmatprep.subr.mxu0 0.0
      %3337 = vmatpush1.msra.mxu0 0.0
      %3338 = vmatprep.subr.mxu0 0.0
      %3339 = vmatpush1.msra.mxu0 0.0
      %3340 = vmatprep.subr.mxu0 0.0
      %3341 = vmatpush1.msra.mxu0 0.0
      %3342 = vmatprep.subr.mxu0 0.0
      %3343 = vmatpush1.msra.mxu0 0.0
      %3344 = vmatprep.subr.mxu0 0.0
      %3345 = vmatpush1.msra.mxu0 0.0
      %3346 = vmatprep.subr.mxu0 0.0
      %3347 = vmatpush1.msra.mxu0 0.0
      %3348 = vmatprep.subr.mxu0 0.0
      %3349 = vmatpush1.msra.mxu0 0.0
      %3350 = vmatprep.subr.mxu0 0.0
      %3351 = vmatpush1.msra.mxu0 0.0
      %3352 = vmatprep.subr.mxu0 0.0
      %3353 = vmatpush1.msra.mxu0 0.0
      %3354 = vmatprep.subr.mxu0 0.0
      %3355 = vmatpush1.msra.mxu0 0.0
      %3356 = vmatprep.subr.mxu0 0.0
      %3357 = vmatpush1.msra.mxu0 0.0
      %3358 = vmatprep.subr.mxu0 0.0
      %3359 = vmatpush1.msra.mxu0 0.0
      %3360 = vmatprep.subr.mxu0 0.0
      %3361 = vmatpush1.msra.mxu0 0.0
      %3362 = vmatprep.subr.mxu0 0.0
      %v3363 = vand.u32 %v3153, 4294901760
      %v3364 = vsub.f32 %v3153, %v3363
      %3365 = vmatpush1.msra.mxu0 %v3364
      %3366 = vmatprep.subr.mxu0 0.0
      %v3367 = vand.u32 %v3152, 4294901760
      %v3368 = vsub.f32 %v3152, %v3367
      %3369 = vmatpush1.msra.mxu0 %v3368
      %3370 = vmatprep.subr.mxu0 0.0
      %3371 = vmatpush2.msra.mxu0 0.0
      %3372 = vmatprep.subr.mxu0 0.0
      %3373 = vmatpush2.msra.mxu0 0.0
      %3374 = vmatprep.subr.mxu0 0.0
      %3375 = vmatpush2.msra.mxu0 0.0
      %3376 = vmatprep.subr.mxu0 0.0
      %3377 = vmatpush2.msra.mxu0 0.0
      %3378 = vmatprep.subr.mxu0 0.0
      %3379 = vmatpush2.msra.mxu0 0.0
      %3380 = vmatprep.subr.mxu0 0.0
      %3381 = vmatpush2.msra.mxu0 0.0
      %3382 = vmatprep.subr.mxu0 0.0
      %3383 = vmatpush2.msra.mxu0 0.0
      %3384 = vmatprep.subr.mxu0 0.0
      %3385 = vmatpush2.msra.mxu0 0.0
      %3386 = vmatprep.subr.mxu0 0.0
      %3387 = vmatpush2.msra.mxu0 0.0
      %3388 = vmatprep.subr.mxu0 0.0
      %3389 = vmatpush2.msra.mxu0 0.0
      %3390 = vmatprep.subr.mxu0 0.0
      %3391 = vmatpush2.msra.mxu0 0.0
      %3392 = vmatprep.subr.mxu0 0.0
      %3393 = vmatpush2.msra.mxu0 0.0
      %3394 = vmatprep.subr.mxu0 0.0
      %3395 = vmatpush2.msra.mxu0 0.0
      %3396 = vmatprep.subr.mxu0 0.0
      %3397 = vmatpush2.msra.mxu0 0.0
      %3398 = vmatprep.subr.mxu0 0.0
      %3399 = vmatpush2.msra.mxu0 0.0
      %3400 = vmatprep.subr.mxu0 0.0
      %3401 = vmatpush2.msra.mxu0 0.0
      %3402 = vmatprep.mubr.f32.mxu0 0.0
      %v3403 = vand.u32 %v3155, 4294901760
      %v3404 = vsub.f32 %v3155, %v3403
      %3405 = vmatmul.mubr.f32.gmra.mxu0 %v3404
      %v3406 = vpop.f32.mrf.mxu0
      %v3407 = vadd.f32 %v3325, %v3406
      %v3408 = vpop.f32.mrf.mxu0
      %3409 = vmatprep.mubr.f32.mxu0 0.0
      %v3410 = vand.u32 %v3158, 4294901760
      %v3411 = vsub.f32 %v3158, %v3410
      %3412 = vmatmul.mubr.f32.gmra.mxu0 %v3411
      %v3413 = vpop.f32.mrf.mxu0
      %v3414 = vadd.f32 %v3331, %v3413
      %v3415 = vpop.f32.mrf.mxu0
      %3416 = vdwg.mxu0
      %3417 = vmatprep.subr.mxu0 0.0
      %3418 = vmatpush1.msra.mxu0 0.0
      %3419 = vmatprep.subr.mxu0 0.0
      %3420 = vmatpush1.msra.mxu0 0.0
      %3421 = vmatprep.subr.mxu0 0.0
      %3422 = vmatpush1.msra.mxu0 0.0
      %3423 = vmatprep.subr.mxu0 0.0
      %3424 = vmatpush1.msra.mxu0 0.0
      %3425 = vmatprep.subr.mxu0 0.0
      %3426 = vmatpush1.msra.mxu0 0.0
      %3427 = vmatprep.subr.mxu0 0.0
      %3428 = vmatpush1.msra.mxu0 0.0
      %3429 = vmatprep.subr.mxu0 0.0
      %3430 = vmatpush1.msra.mxu0 0.0
      %3431 = vmatprep.subr.mxu0 0.0
      %3432 = vmatpush1.msra.mxu0 0.0
      %3433 = vmatprep.subr.mxu0 0.0
      %3434 = vmatpush1.msra.mxu0 0.0
      %3435 = vmatprep.subr.mxu0 0.0
      %3436 = vmatpush1.msra.mxu0 0.0
      %3437 = vmatprep.subr.mxu0 0.0
      %3438 = vmatpush1.msra.mxu0 0.0
      %3439 = vmatprep.subr.mxu0 0.0
      %3440 = vmatpush1.msra.mxu0 0.0
      %3441 = vmatprep.subr.mxu0 0.0
      %3442 = vmatpush1.msra.mxu0 0.0
      %3443 = vmatprep.subr.mxu0 0.0
      %3444 = vmatpush1.msra.mxu0 0.0
      %3445 = vmatprep.subr.mxu0 0.0
      %v3446 = vand.u32 %v3153, 4294901760
      %3447 = vmatpush1.msra.mxu0 %v3446
      %3448 = vmatprep.subr.mxu0 0.0
      %v3449 = vand.u32 %v3152, 4294901760
      %3450 = vmatpush1.msra.mxu0 %v3449
      %3451 = vmatprep.subr.mxu0 0.0
      %3452 = vmatpush2.msra.mxu0 0.0
      %3453 = vmatprep.subr.mxu0 0.0
      %3454 = vmatpush2.msra.mxu0 0.0
      %3455 = vmatprep.subr.mxu0 0.0
      %3456 = vmatpush2.msra.mxu0 0.0
      %3457 = vmatprep.subr.mxu0 0.0
      %3458 = vmatpush2.msra.mxu0 0.0
      %3459 = vmatprep.subr.mxu0 0.0
      %3460 = vmatpush2.msra.mxu0 0.0
      %3461 = vmatprep.subr.mxu0 0.0
      %3462 = vmatpush2.msra.mxu0 0.0
      %3463 = vmatprep.subr.mxu0 0.0
      %3464 = vmatpush2.msra.mxu0 0.0
      %3465 = vmatprep.subr.mxu0 0.0
      %3466 = vmatpush2.msra.mxu0 0.0
      %3467 = vmatprep.subr.mxu0 0.0
      %3468 = vmatpush2.msra.mxu0 0.0
      %3469 = vmatprep.subr.mxu0 0.0
      %3470 = vmatpush2.msra.mxu0 0.0
      %3471 = vmatprep.subr.mxu0 0.0
      %3472 = vmatpush2.msra.mxu0 0.0
      %3473 = vmatprep.subr.mxu0 0.0
      %3474 = vmatpush2.msra.mxu0 0.0
      %3475 = vmatprep.subr.mxu0 0.0
      %3476 = vmatpush2.msra.mxu0 0.0
      %3477 = vmatprep.subr.mxu0 0.0
      %3478 = vmatpush2.msra.mxu0 0.0
      %3479 = vmatprep.subr.mxu0 0.0
      %3480 = vmatpush2.msra.mxu0 0.0
      %3481 = vmatprep.subr.mxu0 0.0
      %3482 = vmatpush2.msra.mxu0 0.0
      %3483 = vmatprep.mubr.f32.mxu0 0.0
      %v3484 = vand.u32 %v3155, 4294901760
      %v3485 = vsub.f32 %v3155, %v3484
      %v3486 = vand.u32 %v3485, 4294901760
      %3487 = vmatmul.mubr.f32.gmra.mxu0 %v3486
      %v3488 = vpop.f32.mrf.mxu0
      %v3489 = vadd.f32 %v3407, %v3488
      %v3490 = vpop.f32.mrf.mxu0
      %3491 = vmatprep.mubr.f32.mxu0 0.0
      %v3492 = vand.u32 %v3158, 4294901760
      %v3493 = vsub.f32 %v3158, %v3492
      %v3494 = vand.u32 %v3493, 4294901760
      %3495 = vmatmul.mubr.f32.gmra.mxu0 %v3494
      %v3496 = vpop.f32.mrf.mxu0
      %v3497 = vadd.f32 %v3414, %v3496
      %v3498 = vpop.f32.mrf.mxu0
      %3499 = vdwg.mxu0
      %3500 = vmatprep.subr.mxu0 0.0
      %3501 = vmatpush1.msra.mxu0 0.0
      %3502 = vmatprep.subr.mxu0 0.0
      %3503 = vmatpush1.msra.mxu0 0.0
      %3504 = vmatprep.subr.mxu0 0.0
      %3505 = vmatpush1.msra.mxu0 0.0
      %3506 = vmatprep.subr.mxu0 0.0
      %3507 = vmatpush1.msra.mxu0 0.0
      %3508 = vmatprep.subr.mxu0 0.0
      %3509 = vmatpush1.msra.mxu0 0.0
      %3510 = vmatprep.subr.mxu0 0.0
      %3511 = vmatpush1.msra.mxu0 0.0
      %3512 = vmatprep.subr.mxu0 0.0
      %3513 = vmatpush1.msra.mxu0 0.0
      %3514 = vmatprep.subr.mxu0 0.0
      %3515 = vmatpush1.msra.mxu0 0.0
      %3516 = vmatprep.subr.mxu0 0.0
      %3517 = vmatpush1.msra.mxu0 0.0
      %3518 = vmatprep.subr.mxu0 0.0
      %3519 = vmatpush1.msra.mxu0 0.0
      %3520 = vmatprep.subr.mxu0 0.0
      %3521 = vmatpush1.msra.mxu0 0.0
      %3522 = vmatprep.subr.mxu0 0.0
      %3523 = vmatpush1.msra.mxu0 0.0
      %3524 = vmatprep.subr.mxu0 0.0
      %3525 = vmatpush1.msra.mxu0 0.0
      %3526 = vmatprep.subr.mxu0 0.0
      %3527 = vmatpush1.msra.mxu0 0.0
      %3528 = vmatprep.subr.mxu0 0.0
      %v3529 = vand.u32 %v3153, 4294901760
      %v3530 = vsub.f32 %v3153, %v3529
      %v3531 = vand.u32 %v3530, 4294901760
      %3532 = vmatpush1.msra.mxu0 %v3531
      %3533 = vmatprep.subr.mxu0 0.0
      %v3534 = vand.u32 %v3152, 4294901760
      %v3535 = vsub.f32 %v3152, %v3534
      %v3536 = vand.u32 %v3535, 4294901760
      %3537 = vmatpush1.msra.mxu0 %v3536
      %3538 = vmatprep.subr.mxu0 0.0
      %3539 = vmatpush2.msra.mxu0 0.0
      %3540 = vmatprep.subr.mxu0 0.0
      %3541 = vmatpush2.msra.mxu0 0.0
      %3542 = vmatprep.subr.mxu0 0.0
      %3543 = vmatpush2.msra.mxu0 0.0
      %3544 = vmatprep.subr.mxu0 0.0
      %3545 = vmatpush2.msra.mxu0 0.0
      %3546 = vmatprep.subr.mxu0 0.0
      %3547 = vmatpush2.msra.mxu0 0.0
      %3548 = vmatprep.subr.mxu0 0.0
      %3549 = vmatpush2.msra.mxu0 0.0
      %3550 = vmatprep.subr.mxu0 0.0
      %3551 = vmatpush2.msra.mxu0 0.0
      %3552 = vmatprep.subr.mxu0 0.0
      %3553 = vmatpush2.msra.mxu0 0.0
      %3554 = vmatprep.subr.mxu0 0.0
      %3555 = vmatpush2.msra.mxu0 0.0
      %3556 = vmatprep.subr.mxu0 0.0
      %3557 = vmatpush2.msra.mxu0 0.0
      %3558 = vmatprep.subr.mxu0 0.0
      %3559 = vmatpush2.msra.mxu0 0.0
      %3560 = vmatprep.subr.mxu0 0.0
      %3561 = vmatpush2.msra.mxu0 0.0
      %3562 = vmatprep.subr.mxu0 0.0
      %3563 = vmatpush2.msra.mxu0 0.0
      %3564 = vmatprep.subr.mxu0 0.0
      %3565 = vmatpush2.msra.mxu0 0.0
      %3566 = vmatprep.subr.mxu0 0.0
      %3567 = vmatpush2.msra.mxu0 0.0
      %3568 = vmatprep.subr.mxu0 0.0
      %3569 = vmatpush2.msra.mxu0 0.0
      %3570 = vmatprep.mubr.f32.mxu0 0.0
      %v3571 = vand.u32 %v3155, 4294901760
      %3572 = vmatmul.mubr.f32.gmra.mxu0 %v3571
      %v3573 = vpop.f32.mrf.mxu0
      %v3574 = vadd.f32 %v3489, %v3573
      %v3575 = vpop.f32.mrf.mxu0
      %3576 = vmatprep.mubr.f32.mxu0 0.0
      %v3577 = vand.u32 %v3158, 4294901760
      %3578 = vmatmul.mubr.f32.gmra.mxu0 %v3577
      %v3579 = vpop.f32.mrf.mxu0
      %v3580 = vadd.f32 %v3497, %v3579
      %v3581 = vpop.f32.mrf.mxu0
      %3582 = vdwg.mxu0
      %3583 = vmatprep.subr.mxu0 0.0
      %3584 = vmatpush1.msra.mxu0 0.0
      %3585 = vmatprep.subr.mxu0 0.0
      %3586 = vmatpush1.msra.mxu0 0.0
      %3587 = vmatprep.subr.mxu0 0.0
      %3588 = vmatpush1.msra.mxu0 0.0
      %3589 = vmatprep.subr.mxu0 0.0
      %3590 = vmatpush1.msra.mxu0 0.0
      %3591 = vmatprep.subr.mxu0 0.0
      %3592 = vmatpush1.msra.mxu0 0.0
      %3593 = vmatprep.subr.mxu0 0.0
      %3594 = vmatpush1.msra.mxu0 0.0
      %3595 = vmatprep.subr.mxu0 0.0
      %3596 = vmatpush1.msra.mxu0 0.0
      %3597 = vmatprep.subr.mxu0 0.0
      %3598 = vmatpush1.msra.mxu0 0.0
      %3599 = vmatprep.subr.mxu0 0.0
      %3600 = vmatpush1.msra.mxu0 0.0
      %3601 = vmatprep.subr.mxu0 0.0
      %3602 = vmatpush1.msra.mxu0 0.0
      %3603 = vmatprep.subr.mxu0 0.0
      %3604 = vmatpush1.msra.mxu0 0.0
      %3605 = vmatprep.subr.mxu0 0.0
      %3606 = vmatpush1.msra.mxu0 0.0
      %3607 = vmatprep.subr.mxu0 0.0
      %3608 = vmatpush1.msra.mxu0 0.0
      %3609 = vmatprep.subr.mxu0 0.0
      %3610 = vmatpush1.msra.mxu0 0.0
      %3611 = vmatprep.subr.mxu0 0.0
      %v3612 = vand.u32 %v3153, 4294901760
      %3613 = vmatpush1.msra.mxu0 %v3612
      %3614 = vmatprep.subr.mxu0 0.0
      %v3615 = vand.u32 %v3152, 4294901760
      %3616 = vmatpush1.msra.mxu0 %v3615
      %3617 = vmatprep.subr.mxu0 0.0
      %3618 = vmatpush2.msra.mxu0 0.0
      %3619 = vmatprep.subr.mxu0 0.0
      %3620 = vmatpush2.msra.mxu0 0.0
      %3621 = vmatprep.subr.mxu0 0.0
      %3622 = vmatpush2.msra.mxu0 0.0
      %3623 = vmatprep.subr.mxu0 0.0
      %3624 = vmatpush2.msra.mxu0 0.0
      %3625 = vmatprep.subr.mxu0 0.0
      %3626 = vmatpush2.msra.mxu0 0.0
      %3627 = vmatprep.subr.mxu0 0.0
      %3628 = vmatpush2.msra.mxu0 0.0
      %3629 = vmatprep.subr.mxu0 0.0
      %3630 = vmatpush2.msra.mxu0 0.0
      %3631 = vmatprep.subr.mxu0 0.0
      %3632 = vmatpush2.msra.mxu0 0.0
      %3633 = vmatprep.subr.mxu0 0.0
      %3634 = vmatpush2.msra.mxu0 0.0
      %3635 = vmatprep.subr.mxu0 0.0
      %3636 = vmatpush2.msra.mxu0 0.0
      %3637 = vmatprep.subr.mxu0 0.0
      %3638 = vmatpush2.msra.mxu0 0.0
      %3639 = vmatprep.subr.mxu0 0.0
      %3640 = vmatpush2.msra.mxu0 0.0
      %3641 = vmatprep.subr.mxu0 0.0
      %3642 = vmatpush2.msra.mxu0 0.0
      %3643 = vmatprep.subr.mxu0 0.0
      %3644 = vmatpush2.msra.mxu0 0.0
      %3645 = vmatprep.subr.mxu0 0.0
      %3646 = vmatpush2.msra.mxu0 0.0
      %3647 = vmatprep.subr.mxu0 0.0
      %3648 = vmatpush2.msra.mxu0 0.0
      %3649 = vmatprep.mubr.f32.mxu0 0.0
      %v3650 = vand.u32 %v3155, 4294901760
      %3651 = vmatmul.mubr.f32.gmra.mxu0 %v3650
      %v3652 = vpop.f32.mrf.mxu0
      %v3653 = vadd.f32 %v3574, %v3652
      %v3654 = vpop.f32.mrf.mxu0
      %3655 = vmatprep.mubr.f32.mxu0 0.0
      %v3656 = vand.u32 %v3158, 4294901760
      %3657 = vmatmul.mubr.f32.gmra.mxu0 %v3656
      %v3658 = vpop.f32.mrf.mxu0
      %v3659 = vadd.f32 %v3580, %v3658
      %v3660 = vpop.f32.mrf.mxu0
      %3661 = vdwg.mxu0
      %v3663 = vsel %vm1044, %v2084, 0
      %v3666 = vsel %vm1044, %v2090, 0
      %3668 = vmatprep.subr.mxu0 0.0
      %3669 = vmatpush1.msra.mxu0 0.0
      %3670 = vmatprep.subr.mxu0 0.0
      %3671 = vmatpush1.msra.mxu0 0.0
      %3672 = vmatprep.subr.mxu0 0.0
      %3673 = vmatpush1.msra.mxu0 0.0
      %3674 = vmatprep.subr.mxu0 0.0
      %3675 = vmatpush1.msra.mxu0 0.0
      %3676 = vmatprep.subr.mxu0 0.0
      %3677 = vmatpush1.msra.mxu0 0.0
      %3678 = vmatprep.subr.mxu0 0.0
      %3679 = vmatpush1.msra.mxu0 0.0
      %3680 = vmatprep.subr.mxu0 0.0
      %3681 = vmatpush1.msra.mxu0 0.0
      %3682 = vmatprep.subr.mxu0 0.0
      %3683 = vmatpush1.msra.mxu0 0.0
      %3684 = vmatprep.subr.mxu0 0.0
      %3685 = vmatpush1.msra.mxu0 0.0
      %3686 = vmatprep.subr.mxu0 0.0
      %3687 = vmatpush1.msra.mxu0 0.0
      %3688 = vmatprep.subr.mxu0 0.0
      %3689 = vmatpush1.msra.mxu0 0.0
      %3690 = vmatprep.subr.mxu0 0.0
      %3691 = vmatpush1.msra.mxu0 0.0
      %3692 = vmatprep.subr.mxu0 0.0
      %3693 = vmatpush1.msra.mxu0 0.0
      %3694 = vmatprep.subr.mxu0 0.0
      %3695 = vmatpush1.msra.mxu0 0.0
      %3696 = vmatprep.subr.mxu0 0.0
      %v3697 = vand.u32 %v2094, 4294901760
      %3698 = vmatpush1.msra.mxu0 %v3697
      %3699 = vmatprep.subr.mxu0 0.0
      %v3700 = vand.u32 %v2093, 4294901760
      %3701 = vmatpush1.msra.mxu0 %v3700
      %3702 = vmatprep.subr.mxu0 0.0
      %3703 = vmatpush2.msra.mxu0 0.0
      %3704 = vmatprep.subr.mxu0 0.0
      %3705 = vmatpush2.msra.mxu0 0.0
      %3706 = vmatprep.subr.mxu0 0.0
      %3707 = vmatpush2.msra.mxu0 0.0
      %3708 = vmatprep.subr.mxu0 0.0
      %3709 = vmatpush2.msra.mxu0 0.0
      %3710 = vmatprep.subr.mxu0 0.0
      %3711 = vmatpush2.msra.mxu0 0.0
      %3712 = vmatprep.subr.mxu0 0.0
      %3713 = vmatpush2.msra.mxu0 0.0
      %3714 = vmatprep.subr.mxu0 0.0
      %3715 = vmatpush2.msra.mxu0 0.0
      %3716 = vmatprep.subr.mxu0 0.0
      %3717 = vmatpush2.msra.mxu0 0.0
      %3718 = vmatprep.subr.mxu0 0.0
      %3719 = vmatpush2.msra.mxu0 0.0
      %3720 = vmatprep.subr.mxu0 0.0
      %3721 = vmatpush2.msra.mxu0 0.0
      %3722 = vmatprep.subr.mxu0 0.0
      %3723 = vmatpush2.msra.mxu0 0.0
      %3724 = vmatprep.subr.mxu0 0.0
      %3725 = vmatpush2.msra.mxu0 0.0
      %3726 = vmatprep.subr.mxu0 0.0
      %3727 = vmatpush2.msra.mxu0 0.0
      %3728 = vmatprep.subr.mxu0 0.0
      %3729 = vmatpush2.msra.mxu0 0.0
      %3730 = vmatprep.subr.mxu0 0.0
      %3731 = vmatpush2.msra.mxu0 0.0
      %3732 = vmatprep.subr.mxu0 0.0
      %3733 = vmatpush2.msra.mxu0 0.0
      %3734 = vmatprep.mubr.f32.mxu0 0.0
      %v3735 = vand.u32 %v3663, 4294901760
      %v3736 = vsub.f32 %v3663, %v3735
      %v3737 = vand.u32 %v3736, 4294901760
      %v3738 = vsub.f32 %v3736, %v3737
      %v3739 = vand.u32 %v3738, 4294901760
      %3740 = vmatmul.mubr.f32.gmra.mxu0 %v3739
      %v3741 = vpop.f32.mrf.mxu0
      %v3742 = vadd.f32 %v3653, %v3741
      %v3743 = vpop.f32.mrf.mxu0
      %3744 = vmatprep.mubr.f32.mxu0 0.0
      %v3745 = vand.u32 %v3666, 4294901760
      %v3746 = vsub.f32 %v3666, %v3745
      %v3747 = vand.u32 %v3746, 4294901760
      %v3748 = vsub.f32 %v3746, %v3747
      %v3749 = vand.u32 %v3748, 4294901760
      %3750 = vmatmul.mubr.f32.gmra.mxu0 %v3749
      %v3751 = vpop.f32.mrf.mxu0
      %v3752 = vadd.f32 %v3659, %v3751
      %v3753 = vpop.f32.mrf.mxu0
      %3754 = vdwg.mxu0
      %3755 = vmatprep.subr.mxu0 0.0
      %3756 = vmatpush1.msra.mxu0 0.0
      %3757 = vmatprep.subr.mxu0 0.0
      %3758 = vmatpush1.msra.mxu0 0.0
      %3759 = vmatprep.subr.mxu0 0.0
      %3760 = vmatpush1.msra.mxu0 0.0
      %3761 = vmatprep.subr.mxu0 0.0
      %3762 = vmatpush1.msra.mxu0 0.0
      %3763 = vmatprep.subr.mxu0 0.0
      %3764 = vmatpush1.msra.mxu0 0.0
      %3765 = vmatprep.subr.mxu0 0.0
      %3766 = vmatpush1.msra.mxu0 0.0
      %3767 = vmatprep.subr.mxu0 0.0
      %3768 = vmatpush1.msra.mxu0 0.0
      %3769 = vmatprep.subr.mxu0 0.0
      %3770 = vmatpush1.msra.mxu0 0.0
      %3771 = vmatprep.subr.mxu0 0.0
      %3772 = vmatpush1.msra.mxu0 0.0
      %3773 = vmatprep.subr.mxu0 0.0
      %3774 = vmatpush1.msra.mxu0 0.0
      %3775 = vmatprep.subr.mxu0 0.0
      %3776 = vmatpush1.msra.mxu0 0.0
      %3777 = vmatprep.subr.mxu0 0.0
      %3778 = vmatpush1.msra.mxu0 0.0
      %3779 = vmatprep.subr.mxu0 0.0
      %3780 = vmatpush1.msra.mxu0 0.0
      %3781 = vmatprep.subr.mxu0 0.0
      %3782 = vmatpush1.msra.mxu0 0.0
      %3783 = vmatprep.subr.mxu0 0.0
      %v3784 = vand.u32 %v2094, 4294901760
      %v3785 = vsub.f32 %v2094, %v3784
      %v3786 = vand.u32 %v3785, 4294901760
      %v3787 = vsub.f32 %v3785, %v3786
      %v3788 = vand.u32 %v3787, 4294901760
      %3789 = vmatpush1.msra.mxu0 %v3788
      %3790 = vmatprep.subr.mxu0 0.0
      %v3791 = vand.u32 %v2093, 4294901760
      %v3792 = vsub.f32 %v2093, %v3791
      %v3793 = vand.u32 %v3792, 4294901760
      %v3794 = vsub.f32 %v3792, %v3793
      %v3795 = vand.u32 %v3794, 4294901760
      %3796 = vmatpush1.msra.mxu0 %v3795
      %3797 = vmatprep.subr.mxu0 0.0
      %3798 = vmatpush2.msra.mxu0 0.0
      %3799 = vmatprep.subr.mxu0 0.0
      %3800 = vmatpush2.msra.mxu0 0.0
      %3801 = vmatprep.subr.mxu0 0.0
      %3802 = vmatpush2.msra.mxu0 0.0
      %3803 = vmatprep.subr.mxu0 0.0
      %3804 = vmatpush2.msra.mxu0 0.0
      %3805 = vmatprep.subr.mxu0 0.0
      %3806 = vmatpush2.msra.mxu0 0.0
      %3807 = vmatprep.subr.mxu0 0.0
      %3808 = vmatpush2.msra.mxu0 0.0
      %3809 = vmatprep.subr.mxu0 0.0
      %3810 = vmatpush2.msra.mxu0 0.0
      %3811 = vmatprep.subr.mxu0 0.0
      %3812 = vmatpush2.msra.mxu0 0.0
      %3813 = vmatprep.subr.mxu0 0.0
      %3814 = vmatpush2.msra.mxu0 0.0
      %3815 = vmatprep.subr.mxu0 0.0
      %3816 = vmatpush2.msra.mxu0 0.0
      %3817 = vmatprep.subr.mxu0 0.0
      %3818 = vmatpush2.msra.mxu0 0.0
      %3819 = vmatprep.subr.mxu0 0.0
      %3820 = vmatpush2.msra.mxu0 0.0
      %3821 = vmatprep.subr.mxu0 0.0
      %3822 = vmatpush2.msra.mxu0 0.0
      %3823 = vmatprep.subr.mxu0 0.0
      %3824 = vmatpush2.msra.mxu0 0.0
      %3825 = vmatprep.subr.mxu0 0.0
      %3826 = vmatpush2.msra.mxu0 0.0
      %3827 = vmatprep.subr.mxu0 0.0
      %3828 = vmatpush2.msra.mxu0 0.0
      %3829 = vmatprep.mubr.f32.mxu0 0.0
      %v3830 = vand.u32 %v3663, 4294901760
      %3831 = vmatmul.mubr.f32.gmra.mxu0 %v3830
      %v3832 = vpop.f32.mrf.mxu0
      %v3833 = vadd.f32 %v3742, %v3832
      %v3834 = vpop.f32.mrf.mxu0
      %3835 = vmatprep.mubr.f32.mxu0 0.0
      %v3836 = vand.u32 %v3666, 4294901760
      %3837 = vmatmul.mubr.f32.gmra.mxu0 %v3836
      %v3838 = vpop.f32.mrf.mxu0
      %v3839 = vadd.f32 %v3752, %v3838
      %v3840 = vpop.f32.mrf.mxu0
      %3841 = vdwg.mxu0
      %3842 = vmatprep.subr.mxu0 0.0
      %3843 = vmatpush1.msra.mxu0 0.0
      %3844 = vmatprep.subr.mxu0 0.0
      %3845 = vmatpush1.msra.mxu0 0.0
      %3846 = vmatprep.subr.mxu0 0.0
      %3847 = vmatpush1.msra.mxu0 0.0
      %3848 = vmatprep.subr.mxu0 0.0
      %3849 = vmatpush1.msra.mxu0 0.0
      %3850 = vmatprep.subr.mxu0 0.0
      %3851 = vmatpush1.msra.mxu0 0.0
      %3852 = vmatprep.subr.mxu0 0.0
      %3853 = vmatpush1.msra.mxu0 0.0
      %3854 = vmatprep.subr.mxu0 0.0
      %3855 = vmatpush1.msra.mxu0 0.0
      %3856 = vmatprep.subr.mxu0 0.0
      %3857 = vmatpush1.msra.mxu0 0.0
      %3858 = vmatprep.subr.mxu0 0.0
      %3859 = vmatpush1.msra.mxu0 0.0
      %3860 = vmatprep.subr.mxu0 0.0
      %3861 = vmatpush1.msra.mxu0 0.0
      %3862 = vmatprep.subr.mxu0 0.0
      %3863 = vmatpush1.msra.mxu0 0.0
      %3864 = vmatprep.subr.mxu0 0.0
      %3865 = vmatpush1.msra.mxu0 0.0
      %3866 = vmatprep.subr.mxu0 0.0
      %3867 = vmatpush1.msra.mxu0 0.0
      %3868 = vmatprep.subr.mxu0 0.0
      %3869 = vmatpush1.msra.mxu0 0.0
      %3870 = vmatprep.subr.mxu0 0.0
      %v3871 = vand.u32 %v2094, 4294901760
      %v3872 = vsub.f32 %v2094, %v3871
      %3873 = vmatpush1.msra.mxu0 %v3872
      %3874 = vmatprep.subr.mxu0 0.0
      %v3875 = vand.u32 %v2093, 4294901760
      %v3876 = vsub.f32 %v2093, %v3875
      %3877 = vmatpush1.msra.mxu0 %v3876
      %3878 = vmatprep.subr.mxu0 0.0
      %3879 = vmatpush2.msra.mxu0 0.0
      %3880 = vmatprep.subr.mxu0 0.0
      %3881 = vmatpush2.msra.mxu0 0.0
      %3882 = vmatprep.subr.mxu0 0.0
      %3883 = vmatpush2.msra.mxu0 0.0
      %3884 = vmatprep.subr.mxu0 0.0
      %3885 = vmatpush2.msra.mxu0 0.0
      %3886 = vmatprep.subr.mxu0 0.0
      %3887 = vmatpush2.msra.mxu0 0.0
      %3888 = vmatprep.subr.mxu0 0.0
      %3889 = vmatpush2.msra.mxu0 0.0
      %3890 = vmatprep.subr.mxu0 0.0
      %3891 = vmatpush2.msra.mxu0 0.0
      %3892 = vmatprep.subr.mxu0 0.0
      %3893 = vmatpush2.msra.mxu0 0.0
      %3894 = vmatprep.subr.mxu0 0.0
      %3895 = vmatpush2.msra.mxu0 0.0
      %3896 = vmatprep.subr.mxu0 0.0
      %3897 = vmatpush2.msra.mxu0 0.0
      %3898 = vmatprep.subr.mxu0 0.0
      %3899 = vmatpush2.msra.mxu0 0.0
      %3900 = vmatprep.subr.mxu0 0.0
      %3901 = vmatpush2.msra.mxu0 0.0
      %3902 = vmatprep.subr.mxu0 0.0
      %3903 = vmatpush2.msra.mxu0 0.0
      %3904 = vmatprep.subr.mxu0 0.0
      %3905 = vmatpush2.msra.mxu0 0.0
      %3906 = vmatprep.subr.mxu0 0.0
      %3907 = vmatpush2.msra.mxu0 0.0
      %3908 = vmatprep.subr.mxu0 0.0
      %3909 = vmatpush2.msra.mxu0 0.0
      %3910 = vmatprep.mubr.f32.mxu0 0.0
      %v3911 = vand.u32 %v3663, 4294901760
      %v3912 = vsub.f32 %v3663, %v3911
      %3913 = vmatmul.mubr.f32.gmra.mxu0 %v3912
      %v3914 = vpop.f32.mrf.mxu0
      %v3915 = vadd.f32 %v3833, %v3914
      %v3916 = vpop.f32.mrf.mxu0
      %3917 = vmatprep.mubr.f32.mxu0 0.0
      %v3918 = vand.u32 %v3666, 4294901760
      %v3919 = vsub.f32 %v3666, %v3918
      %3920 = vmatmul.mubr.f32.gmra.mxu0 %v3919
      %v3921 = vpop.f32.mrf.mxu0
      %v3922 = vadd.f32 %v3839, %v3921
      %v3923 = vpop.f32.mrf.mxu0
      %3924 = vdwg.mxu0
      %3925 = vmatprep.subr.mxu0 0.0
      %3926 = vmatpush1.msra.mxu0 0.0
      %3927 = vmatprep.subr.mxu0 0.0
      %3928 = vmatpush1.msra.mxu0 0.0
      %3929 = vmatprep.subr.mxu0 0.0
      %3930 = vmatpush1.msra.mxu0 0.0
      %3931 = vmatprep.subr.mxu0 0.0
      %3932 = vmatpush1.msra.mxu0 0.0
      %3933 = vmatprep.subr.mxu0 0.0
      %3934 = vmatpush1.msra.mxu0 0.0
      %3935 = vmatprep.subr.mxu0 0.0
      %3936 = vmatpush1.msra.mxu0 0.0
      %3937 = vmatprep.subr.mxu0 0.0
      %3938 = vmatpush1.msra.mxu0 0.0
      %3939 = vmatprep.subr.mxu0 0.0
      %3940 = vmatpush1.msra.mxu0 0.0
      %3941 = vmatprep.subr.mxu0 0.0
      %3942 = vmatpush1.msra.mxu0 0.0
      %3943 = vmatprep.subr.mxu0 0.0
      %3944 = vmatpush1.msra.mxu0 0.0
      %3945 = vmatprep.subr.mxu0 0.0
      %3946 = vmatpush1.msra.mxu0 0.0
      %3947 = vmatprep.subr.mxu0 0.0
      %3948 = vmatpush1.msra.mxu0 0.0
      %3949 = vmatprep.subr.mxu0 0.0
      %3950 = vmatpush1.msra.mxu0 0.0
      %3951 = vmatprep.subr.mxu0 0.0
      %3952 = vmatpush1.msra.mxu0 0.0
      %3953 = vmatprep.subr.mxu0 0.0
      %v3954 = vand.u32 %v2094, 4294901760
      %3955 = vmatpush1.msra.mxu0 %v3954
      %3956 = vmatprep.subr.mxu0 0.0
      %v3957 = vand.u32 %v2093, 4294901760
      %3958 = vmatpush1.msra.mxu0 %v3957
      %3959 = vmatprep.subr.mxu0 0.0
      %3960 = vmatpush2.msra.mxu0 0.0
      %3961 = vmatprep.subr.mxu0 0.0
      %3962 = vmatpush2.msra.mxu0 0.0
      %3963 = vmatprep.subr.mxu0 0.0
      %3964 = vmatpush2.msra.mxu0 0.0
      %3965 = vmatprep.subr.mxu0 0.0
      %3966 = vmatpush2.msra.mxu0 0.0
      %3967 = vmatprep.subr.mxu0 0.0
      %3968 = vmatpush2.msra.mxu0 0.0
      %3969 = vmatprep.subr.mxu0 0.0
      %3970 = vmatpush2.msra.mxu0 0.0
      %3971 = vmatprep.subr.mxu0 0.0
      %3972 = vmatpush2.msra.mxu0 0.0
      %3973 = vmatprep.subr.mxu0 0.0
      %3974 = vmatpush2.msra.mxu0 0.0
      %3975 = vmatprep.subr.mxu0 0.0
      %3976 = vmatpush2.msra.mxu0 0.0
      %3977 = vmatprep.subr.mxu0 0.0
      %3978 = vmatpush2.msra.mxu0 0.0
      %3979 = vmatprep.subr.mxu0 0.0
      %3980 = vmatpush2.msra.mxu0 0.0
      %3981 = vmatprep.subr.mxu0 0.0
      %3982 = vmatpush2.msra.mxu0 0.0
      %3983 = vmatprep.subr.mxu0 0.0
      %3984 = vmatpush2.msra.mxu0 0.0
      %3985 = vmatprep.subr.mxu0 0.0
      %3986 = vmatpush2.msra.mxu0 0.0
      %3987 = vmatprep.subr.mxu0 0.0
      %3988 = vmatpush2.msra.mxu0 0.0
      %3989 = vmatprep.subr.mxu0 0.0
      %3990 = vmatpush2.msra.mxu0 0.0
      %3991 = vmatprep.mubr.f32.mxu0 0.0
      %v3992 = vand.u32 %v3663, 4294901760
      %v3993 = vsub.f32 %v3663, %v3992
      %v3994 = vand.u32 %v3993, 4294901760
      %3995 = vmatmul.mubr.f32.gmra.mxu0 %v3994
      %v3996 = vpop.f32.mrf.mxu0
      %v3997 = vadd.f32 %v3915, %v3996
      %v3998 = vpop.f32.mrf.mxu0
      %3999 = vmatprep.mubr.f32.mxu0 0.0
      %v4000 = vand.u32 %v3666, 4294901760
      %v4001 = vsub.f32 %v3666, %v4000
      %v4002 = vand.u32 %v4001, 4294901760
      %4003 = vmatmul.mubr.f32.gmra.mxu0 %v4002
      %v4004 = vpop.f32.mrf.mxu0
      %v4005 = vadd.f32 %v3922, %v4004
      %v4006 = vpop.f32.mrf.mxu0
      %4007 = vdwg.mxu0
      %4008 = vmatprep.subr.mxu0 0.0
      %4009 = vmatpush1.msra.mxu0 0.0
      %4010 = vmatprep.subr.mxu0 0.0
      %4011 = vmatpush1.msra.mxu0 0.0
      %4012 = vmatprep.subr.mxu0 0.0
      %4013 = vmatpush1.msra.mxu0 0.0
      %4014 = vmatprep.subr.mxu0 0.0
      %4015 = vmatpush1.msra.mxu0 0.0
      %4016 = vmatprep.subr.mxu0 0.0
      %4017 = vmatpush1.msra.mxu0 0.0
      %4018 = vmatprep.subr.mxu0 0.0
      %4019 = vmatpush1.msra.mxu0 0.0
      %4020 = vmatprep.subr.mxu0 0.0
      %4021 = vmatpush1.msra.mxu0 0.0
      %4022 = vmatprep.subr.mxu0 0.0
      %4023 = vmatpush1.msra.mxu0 0.0
      %4024 = vmatprep.subr.mxu0 0.0
      %4025 = vmatpush1.msra.mxu0 0.0
      %4026 = vmatprep.subr.mxu0 0.0
      %4027 = vmatpush1.msra.mxu0 0.0
      %4028 = vmatprep.subr.mxu0 0.0
      %4029 = vmatpush1.msra.mxu0 0.0
      %4030 = vmatprep.subr.mxu0 0.0
      %4031 = vmatpush1.msra.mxu0 0.0
      %4032 = vmatprep.subr.mxu0 0.0
      %4033 = vmatpush1.msra.mxu0 0.0
      %4034 = vmatprep.subr.mxu0 0.0
      %4035 = vmatpush1.msra.mxu0 0.0
      %4036 = vmatprep.subr.mxu0 0.0
      %v4037 = vand.u32 %v2094, 4294901760
      %v4038 = vsub.f32 %v2094, %v4037
      %v4039 = vand.u32 %v4038, 4294901760
      %4040 = vmatpush1.msra.mxu0 %v4039
      %4041 = vmatprep.subr.mxu0 0.0
      %v4042 = vand.u32 %v2093, 4294901760
      %v4043 = vsub.f32 %v2093, %v4042
      %v4044 = vand.u32 %v4043, 4294901760
      %4045 = vmatpush1.msra.mxu0 %v4044
      %4046 = vmatprep.subr.mxu0 0.0
      %4047 = vmatpush2.msra.mxu0 0.0
      %4048 = vmatprep.subr.mxu0 0.0
      %4049 = vmatpush2.msra.mxu0 0.0
      %4050 = vmatprep.subr.mxu0 0.0
      %4051 = vmatpush2.msra.mxu0 0.0
      %4052 = vmatprep.subr.mxu0 0.0
      %4053 = vmatpush2.msra.mxu0 0.0
      %4054 = vmatprep.subr.mxu0 0.0
      %4055 = vmatpush2.msra.mxu0 0.0
      %4056 = vmatprep.subr.mxu0 0.0
      %4057 = vmatpush2.msra.mxu0 0.0
      %4058 = vmatprep.subr.mxu0 0.0
      %4059 = vmatpush2.msra.mxu0 0.0
      %4060 = vmatprep.subr.mxu0 0.0
      %4061 = vmatpush2.msra.mxu0 0.0
      %4062 = vmatprep.subr.mxu0 0.0
      %4063 = vmatpush2.msra.mxu0 0.0
      %4064 = vmatprep.subr.mxu0 0.0
      %4065 = vmatpush2.msra.mxu0 0.0
      %4066 = vmatprep.subr.mxu0 0.0
      %4067 = vmatpush2.msra.mxu0 0.0
      %4068 = vmatprep.subr.mxu0 0.0
      %4069 = vmatpush2.msra.mxu0 0.0
      %4070 = vmatprep.subr.mxu0 0.0
      %4071 = vmatpush2.msra.mxu0 0.0
      %4072 = vmatprep.subr.mxu0 0.0
      %4073 = vmatpush2.msra.mxu0 0.0
      %4074 = vmatprep.subr.mxu0 0.0
      %4075 = vmatpush2.msra.mxu0 0.0
      %4076 = vmatprep.subr.mxu0 0.0
      %4077 = vmatpush2.msra.mxu0 0.0
      %4078 = vmatprep.mubr.f32.mxu0 0.0
      %v4079 = vand.u32 %v3663, 4294901760
      %4080 = vmatmul.mubr.f32.gmra.mxu0 %v4079
      %v4081 = vpop.f32.mrf.mxu0
      %v4082 = vadd.f32 %v3997, %v4081
      %v4083 = vpop.f32.mrf.mxu0
      %4084 = vmatprep.mubr.f32.mxu0 0.0
      %v4085 = vand.u32 %v3666, 4294901760
      %4086 = vmatmul.mubr.f32.gmra.mxu0 %v4085
      %v4087 = vpop.f32.mrf.mxu0
      %v4088 = vadd.f32 %v4005, %v4087
      %v4089 = vpop.f32.mrf.mxu0
      %4090 = vdwg.mxu0
      %4091 = vmatprep.subr.mxu0 0.0
      %4092 = vmatpush1.msra.mxu0 0.0
      %4093 = vmatprep.subr.mxu0 0.0
      %4094 = vmatpush1.msra.mxu0 0.0
      %4095 = vmatprep.subr.mxu0 0.0
      %4096 = vmatpush1.msra.mxu0 0.0
      %4097 = vmatprep.subr.mxu0 0.0
      %4098 = vmatpush1.msra.mxu0 0.0
      %4099 = vmatprep.subr.mxu0 0.0
      %4100 = vmatpush1.msra.mxu0 0.0
      %4101 = vmatprep.subr.mxu0 0.0
      %4102 = vmatpush1.msra.mxu0 0.0
      %4103 = vmatprep.subr.mxu0 0.0
      %4104 = vmatpush1.msra.mxu0 0.0
      %4105 = vmatprep.subr.mxu0 0.0
      %4106 = vmatpush1.msra.mxu0 0.0
      %4107 = vmatprep.subr.mxu0 0.0
      %4108 = vmatpush1.msra.mxu0 0.0
      %4109 = vmatprep.subr.mxu0 0.0
      %4110 = vmatpush1.msra.mxu0 0.0
      %4111 = vmatprep.subr.mxu0 0.0
      %4112 = vmatpush1.msra.mxu0 0.0
      %4113 = vmatprep.subr.mxu0 0.0
      %4114 = vmatpush1.msra.mxu0 0.0
      %4115 = vmatprep.subr.mxu0 0.0
      %4116 = vmatpush1.msra.mxu0 0.0
      %4117 = vmatprep.subr.mxu0 0.0
      %4118 = vmatpush1.msra.mxu0 0.0
      %4119 = vmatprep.subr.mxu0 0.0
      %v4120 = vand.u32 %v2094, 4294901760
      %4121 = vmatpush1.msra.mxu0 %v4120
      %4122 = vmatprep.subr.mxu0 0.0
      %v4123 = vand.u32 %v2093, 4294901760
      %4124 = vmatpush1.msra.mxu0 %v4123
      %4125 = vmatprep.subr.mxu0 0.0
      %4126 = vmatpush2.msra.mxu0 0.0
      %4127 = vmatprep.subr.mxu0 0.0
      %4128 = vmatpush2.msra.mxu0 0.0
      %4129 = vmatprep.subr.mxu0 0.0
      %4130 = vmatpush2.msra.mxu0 0.0
      %4131 = vmatprep.subr.mxu0 0.0
      %4132 = vmatpush2.msra.mxu0 0.0
      %4133 = vmatprep.subr.mxu0 0.0
      %4134 = vmatpush2.msra.mxu0 0.0
      %4135 = vmatprep.subr.mxu0 0.0
      %4136 = vmatpush2.msra.mxu0 0.0
      %4137 = vmatprep.subr.mxu0 0.0
      %4138 = vmatpush2.msra.mxu0 0.0
      %4139 = vmatprep.subr.mxu0 0.0
      %4140 = vmatpush2.msra.mxu0 0.0
      %4141 = vmatprep.subr.mxu0 0.0
      %4142 = vmatpush2.msra.mxu0 0.0
      %4143 = vmatprep.subr.mxu0 0.0
      %4144 = vmatpush2.msra.mxu0 0.0
      %4145 = vmatprep.subr.mxu0 0.0
      %4146 = vmatpush2.msra.mxu0 0.0
      %4147 = vmatprep.subr.mxu0 0.0
      %4148 = vmatpush2.msra.mxu0 0.0
      %4149 = vmatprep.subr.mxu0 0.0
      %4150 = vmatpush2.msra.mxu0 0.0
      %4151 = vmatprep.subr.mxu0 0.0
      %4152 = vmatpush2.msra.mxu0 0.0
      %4153 = vmatprep.subr.mxu0 0.0
      %4154 = vmatpush2.msra.mxu0 0.0
      %4155 = vmatprep.subr.mxu0 0.0
      %4156 = vmatpush2.msra.mxu0 0.0
      %4157 = vmatprep.mubr.f32.mxu0 0.0
      %v4158 = vand.u32 %v3663, 4294901760
      %4159 = vmatmul.mubr.f32.gmra.mxu0 %v4158
      %v4160 = vpop.f32.mrf.mxu0
      %v4161 = vadd.f32 %v4082, %v4160
      %v4162 = vpop.f32.mrf.mxu0
      %4163 = vmatprep.mubr.f32.mxu0 0.0
      %v4164 = vand.u32 %v3666, 4294901760
      %4165 = vmatmul.mubr.f32.gmra.mxu0 %v4164
      %v4166 = vpop.f32.mrf.mxu0
      %v4167 = vadd.f32 %v4088, %v4166
      %v4168 = vpop.f32.mrf.mxu0
      %4169 = vdwg.mxu0
      %v4170 = vadd.f32 %v446, %v4161
      %v4171 = vadd.f32 %v447, %v4167
      %v4172 = vld [vmem:[%s6] sm:$0x1]
      %v4174 = vlaneseq
      %v4175 = vshrl.u32 %v4174, 7
      %v4176 = vsub.s32 0, %v4175
      %v4177 = vrot.slane %v4172, %v4176
      %v4179 = vadd.f32 %v4170, %v4177
      %v4180 = vadd.f32 %v4171, %v4177
      %v4181 = vsel %vm449, %v4179, 0.0
      %4182 = vadd.xlane.f32.xlu0 %v4181
      %v4183 = vpop.xlane.xlu0 %4182
      %v4184 = vsel %vm449, %v4180, 0.0
      %4185 = vadd.xlane.f32.xlu0 %v4184
      %v4186 = vpop.xlane.xlu0 %4185
      %v4187 = vmul.f32 %v4183, %v456
      %v4188 = vmul.f32 %v4186, %v456
      %v4189 = vsub.f32 %v4179, %v4187
      %v4190 = vsub.f32 %v4180, %v4188
      %v4191 = vmul.f32 %v4189, %v4189
      %v4192 = vmul.f32 %v4190, %v4190
      %v4193 = vsel %vm449, %v4191, 0.0
      %4194 = vadd.xlane.f32.xlu0 %v4193
      %v4195 = vpop.xlane.xlu0 %4194
      %v4196 = vsel %vm449, %v4192, 0.0
      %4197 = vadd.xlane.f32.xlu0 %v4196
      %v4198 = vpop.xlane.xlu0 %4197
      %v4199 = vmul.f32 %v4195, %v456
      %v4200 = vmul.f32 %v4198, %v456
      %v4201 = vadd.f32 %v4199, 1e-05
      %v4202 = vadd.f32 %v4200, 1e-05
      %v4203 = vrsqrt.pop %v4201
      %v4204 = vrsqrt.pop %v4202
      %v4205 = vmul.f32 %v4189, %v4203
      %v4206 = vmul.f32 %v4190, %v4204
      %v4207 = vlaneseq
      %v4208 = vshrl.u32 %v4207, 7
      %v4209 = vsub.s32 2, %v4208
      %v4210 = vrot.slane %v448, %v4209
      %v4211 = vmul.f32 %v4205, %v4210
      %v4212 = vmul.f32 %v4206, %v4210
      %v4213 = vlaneseq
      %v4214 = vshrl.u32 %v4213, 7
      %v4215 = vsub.s32 3, %v4214
      %v4216 = vrot.slane %v448, %v4215
      %v4217 = vadd.f32 %v4211, %v4216
      %v4218 = vadd.f32 %v4212, %v4216
      %v4219 = vld [vmem:[%s7] sm:$0xff]
      %v4220 = vld [vmem:[%s7 + $0x8] sm:$0xff]
      %v4221 = vld [vmem:[%s7 + $0x10] sm:$0xff]
      %v4222 = vld [vmem:[%s7 + $0x18] sm:$0xff]
      %v4223 = vld [vmem:[%s8] sm:$0x1]
      %v4225 = vlaneseq
      %v4226 = vshrl.u32 %v4225, 7
      %v4227 = vsub.s32 0, %v4226
      %v4228 = vrot.slane %v4223, %v4227
      %v4231 = vsel %vm449, %v4217, 0
      %v4234 = vsel %vm449, %v4218, 0
      %4236 = vmatprep.subr.mxu0 0.0
      %4237 = vmatpush1.msra.mxu0 0.0
      %4238 = vmatprep.subr.mxu0 0.0
      %4239 = vmatpush1.msra.mxu0 0.0
      %4240 = vmatprep.subr.mxu0 0.0
      %4241 = vmatpush1.msra.mxu0 0.0
      %4242 = vmatprep.subr.mxu0 0.0
      %4243 = vmatpush1.msra.mxu0 0.0
      %4244 = vmatprep.subr.mxu0 0.0
      %4245 = vmatpush1.msra.mxu0 0.0
      %4246 = vmatprep.subr.mxu0 0.0
      %4247 = vmatpush1.msra.mxu0 0.0
      %4248 = vmatprep.subr.mxu0 0.0
      %4249 = vmatpush1.msra.mxu0 0.0
      %4250 = vmatprep.subr.mxu0 0.0
      %4251 = vmatpush1.msra.mxu0 0.0
      %4252 = vmatprep.subr.mxu0 0.0
      %4253 = vmatpush1.msra.mxu0 0.0
      %4254 = vmatprep.subr.mxu0 0.0
      %4255 = vmatpush1.msra.mxu0 0.0
      %4256 = vmatprep.subr.mxu0 0.0
      %4257 = vmatpush1.msra.mxu0 0.0
      %4258 = vmatprep.subr.mxu0 0.0
      %4259 = vmatpush1.msra.mxu0 0.0
      %4260 = vmatprep.subr.mxu0 0.0
      %v4261 = vand.u32 %v4222, 4294901760
      %4262 = vmatpush1.msra.mxu0 %v4261
      %4263 = vmatprep.subr.mxu0 0.0
      %v4264 = vand.u32 %v4221, 4294901760
      %4265 = vmatpush1.msra.mxu0 %v4264
      %4266 = vmatprep.subr.mxu0 0.0
      %v4267 = vand.u32 %v4220, 4294901760
      %4268 = vmatpush1.msra.mxu0 %v4267
      %4269 = vmatprep.subr.mxu0 0.0
      %v4270 = vand.u32 %v4219, 4294901760
      %4271 = vmatpush1.msra.mxu0 %v4270
      %4272 = vmatprep.subr.mxu0 0.0
      %4273 = vmatpush2.msra.mxu0 0.0
      %4274 = vmatprep.subr.mxu0 0.0
      %4275 = vmatpush2.msra.mxu0 0.0
      %4276 = vmatprep.subr.mxu0 0.0
      %4277 = vmatpush2.msra.mxu0 0.0
      %4278 = vmatprep.subr.mxu0 0.0
      %4279 = vmatpush2.msra.mxu0 0.0
      %4280 = vmatprep.subr.mxu0 0.0
      %4281 = vmatpush2.msra.mxu0 0.0
      %4282 = vmatprep.subr.mxu0 0.0
      %4283 = vmatpush2.msra.mxu0 0.0
      %4284 = vmatprep.subr.mxu0 0.0
      %4285 = vmatpush2.msra.mxu0 0.0
      %4286 = vmatprep.subr.mxu0 0.0
      %4287 = vmatpush2.msra.mxu0 0.0
      %4288 = vmatprep.subr.mxu0 0.0
      %4289 = vmatpush2.msra.mxu0 0.0
      %4290 = vmatprep.subr.mxu0 0.0
      %4291 = vmatpush2.msra.mxu0 0.0
      %4292 = vmatprep.subr.mxu0 0.0
      %4293 = vmatpush2.msra.mxu0 0.0
      %4294 = vmatprep.subr.mxu0 0.0
      %4295 = vmatpush2.msra.mxu0 0.0
      %4296 = vmatprep.subr.mxu0 0.0
      %4297 = vmatpush2.msra.mxu0 0.0
      %4298 = vmatprep.subr.mxu0 0.0
      %4299 = vmatpush2.msra.mxu0 0.0
      %4300 = vmatprep.subr.mxu0 0.0
      %4301 = vmatpush2.msra.mxu0 0.0
      %4302 = vmatprep.subr.mxu0 0.0
      %4303 = vmatpush2.msra.mxu0 0.0
      %4304 = vmatprep.mubr.f32.mxu0 0.0
      %v4305 = vand.u32 %v4231, 4294901760
      %v4306 = vsub.f32 %v4231, %v4305
      %v4307 = vand.u32 %v4306, 4294901760
      %v4308 = vsub.f32 %v4306, %v4307
      %v4309 = vand.u32 %v4308, 4294901760
      %4310 = vmatmul.mubr.f32.gmra.mxu0 %v4309
      %v4311 = vpop.f32.mrf.mxu0
      %v4312 = vadd.f32 %v4228, %v4311
      %v4313 = vpop.f32.mrf.mxu0
      %4314 = vmatprep.mubr.f32.mxu0 0.0
      %v4315 = vand.u32 %v4234, 4294901760
      %v4316 = vsub.f32 %v4234, %v4315
      %v4317 = vand.u32 %v4316, 4294901760
      %v4318 = vsub.f32 %v4316, %v4317
      %v4319 = vand.u32 %v4318, 4294901760
      %4320 = vmatmul.mubr.f32.gmra.mxu0 %v4319
      %v4321 = vpop.f32.mrf.mxu0
      %v4322 = vadd.f32 %v4228, %v4321
      %v4323 = vpop.f32.mrf.mxu0
      %4324 = vdwg.mxu0
      %4325 = vmatprep.subr.mxu0 0.0
      %4326 = vmatpush1.msra.mxu0 0.0
      %4327 = vmatprep.subr.mxu0 0.0
      %4328 = vmatpush1.msra.mxu0 0.0
      %4329 = vmatprep.subr.mxu0 0.0
      %4330 = vmatpush1.msra.mxu0 0.0
      %4331 = vmatprep.subr.mxu0 0.0
      %4332 = vmatpush1.msra.mxu0 0.0
      %4333 = vmatprep.subr.mxu0 0.0
      %4334 = vmatpush1.msra.mxu0 0.0
      %4335 = vmatprep.subr.mxu0 0.0
      %4336 = vmatpush1.msra.mxu0 0.0
      %4337 = vmatprep.subr.mxu0 0.0
      %4338 = vmatpush1.msra.mxu0 0.0
      %4339 = vmatprep.subr.mxu0 0.0
      %4340 = vmatpush1.msra.mxu0 0.0
      %4341 = vmatprep.subr.mxu0 0.0
      %4342 = vmatpush1.msra.mxu0 0.0
      %4343 = vmatprep.subr.mxu0 0.0
      %4344 = vmatpush1.msra.mxu0 0.0
      %4345 = vmatprep.subr.mxu0 0.0
      %4346 = vmatpush1.msra.mxu0 0.0
      %4347 = vmatprep.subr.mxu0 0.0
      %4348 = vmatpush1.msra.mxu0 0.0
      %4349 = vmatprep.subr.mxu0 0.0
      %v4350 = vand.u32 %v4222, 4294901760
      %v4351 = vsub.f32 %v4222, %v4350
      %v4352 = vand.u32 %v4351, 4294901760
      %v4353 = vsub.f32 %v4351, %v4352
      %v4354 = vand.u32 %v4353, 4294901760
      %4355 = vmatpush1.msra.mxu0 %v4354
      %4356 = vmatprep.subr.mxu0 0.0
      %v4357 = vand.u32 %v4221, 4294901760
      %v4358 = vsub.f32 %v4221, %v4357
      %v4359 = vand.u32 %v4358, 4294901760
      %v4360 = vsub.f32 %v4358, %v4359
      %v4361 = vand.u32 %v4360, 4294901760
      %4362 = vmatpush1.msra.mxu0 %v4361
      %4363 = vmatprep.subr.mxu0 0.0
      %v4364 = vand.u32 %v4220, 4294901760
      %v4365 = vsub.f32 %v4220, %v4364
      %v4366 = vand.u32 %v4365, 4294901760
      %v4367 = vsub.f32 %v4365, %v4366
      %v4368 = vand.u32 %v4367, 4294901760
      %4369 = vmatpush1.msra.mxu0 %v4368
      %4370 = vmatprep.subr.mxu0 0.0
      %v4371 = vand.u32 %v4219, 4294901760
      %v4372 = vsub.f32 %v4219, %v4371
      %v4373 = vand.u32 %v4372, 4294901760
      %v4374 = vsub.f32 %v4372, %v4373
      %v4375 = vand.u32 %v4374, 4294901760
      %4376 = vmatpush1.msra.mxu0 %v4375
      %4377 = vmatprep.subr.mxu0 0.0
      %4378 = vmatpush2.msra.mxu0 0.0
      %4379 = vmatprep.subr.mxu0 0.0
      %4380 = vmatpush2.msra.mxu0 0.0
      %4381 = vmatprep.subr.mxu0 0.0
      %4382 = vmatpush2.msra.mxu0 0.0
      %4383 = vmatprep.subr.mxu0 0.0
      %4384 = vmatpush2.msra.mxu0 0.0
      %4385 = vmatprep.subr.mxu0 0.0
      %4386 = vmatpush2.msra.mxu0 0.0
      %4387 = vmatprep.subr.mxu0 0.0
      %4388 = vmatpush2.msra.mxu0 0.0
      %4389 = vmatprep.subr.mxu0 0.0
      %4390 = vmatpush2.msra.mxu0 0.0
      %4391 = vmatprep.subr.mxu0 0.0
      %4392 = vmatpush2.msra.mxu0 0.0
      %4393 = vmatprep.subr.mxu0 0.0
      %4394 = vmatpush2.msra.mxu0 0.0
      %4395 = vmatprep.subr.mxu0 0.0
      %4396 = vmatpush2.msra.mxu0 0.0
      %4397 = vmatprep.subr.mxu0 0.0
      %4398 = vmatpush2.msra.mxu0 0.0
      %4399 = vmatprep.subr.mxu0 0.0
      %4400 = vmatpush2.msra.mxu0 0.0
      %4401 = vmatprep.subr.mxu0 0.0
      %4402 = vmatpush2.msra.mxu0 0.0
      %4403 = vmatprep.subr.mxu0 0.0
      %4404 = vmatpush2.msra.mxu0 0.0
      %4405 = vmatprep.subr.mxu0 0.0
      %4406 = vmatpush2.msra.mxu0 0.0
      %4407 = vmatprep.subr.mxu0 0.0
      %4408 = vmatpush2.msra.mxu0 0.0
      %4409 = vmatprep.mubr.f32.mxu0 0.0
      %v4410 = vand.u32 %v4231, 4294901760
      %4411 = vmatmul.mubr.f32.gmra.mxu0 %v4410
      %v4412 = vpop.f32.mrf.mxu0
      %v4413 = vadd.f32 %v4312, %v4412
      %v4414 = vpop.f32.mrf.mxu0
      %4415 = vmatprep.mubr.f32.mxu0 0.0
      %v4416 = vand.u32 %v4234, 4294901760
      %4417 = vmatmul.mubr.f32.gmra.mxu0 %v4416
      %v4418 = vpop.f32.mrf.mxu0
      %v4419 = vadd.f32 %v4322, %v4418
      %v4420 = vpop.f32.mrf.mxu0
      %4421 = vdwg.mxu0
      %4422 = vmatprep.subr.mxu0 0.0
      %4423 = vmatpush1.msra.mxu0 0.0
      %4424 = vmatprep.subr.mxu0 0.0
      %4425 = vmatpush1.msra.mxu0 0.0
      %4426 = vmatprep.subr.mxu0 0.0
      %4427 = vmatpush1.msra.mxu0 0.0
      %4428 = vmatprep.subr.mxu0 0.0
      %4429 = vmatpush1.msra.mxu0 0.0
      %4430 = vmatprep.subr.mxu0 0.0
      %4431 = vmatpush1.msra.mxu0 0.0
      %4432 = vmatprep.subr.mxu0 0.0
      %4433 = vmatpush1.msra.mxu0 0.0
      %4434 = vmatprep.subr.mxu0 0.0
      %4435 = vmatpush1.msra.mxu0 0.0
      %4436 = vmatprep.subr.mxu0 0.0
      %4437 = vmatpush1.msra.mxu0 0.0
      %4438 = vmatprep.subr.mxu0 0.0
      %4439 = vmatpush1.msra.mxu0 0.0
      %4440 = vmatprep.subr.mxu0 0.0
      %4441 = vmatpush1.msra.mxu0 0.0
      %4442 = vmatprep.subr.mxu0 0.0
      %4443 = vmatpush1.msra.mxu0 0.0
      %4444 = vmatprep.subr.mxu0 0.0
      %4445 = vmatpush1.msra.mxu0 0.0
      %4446 = vmatprep.subr.mxu0 0.0
      %v4447 = vand.u32 %v4222, 4294901760
      %v4448 = vsub.f32 %v4222, %v4447
      %4449 = vmatpush1.msra.mxu0 %v4448
      %4450 = vmatprep.subr.mxu0 0.0
      %v4451 = vand.u32 %v4221, 4294901760
      %v4452 = vsub.f32 %v4221, %v4451
      %4453 = vmatpush1.msra.mxu0 %v4452
      %4454 = vmatprep.subr.mxu0 0.0
      %v4455 = vand.u32 %v4220, 4294901760
      %v4456 = vsub.f32 %v4220, %v4455
      %4457 = vmatpush1.msra.mxu0 %v4456
      %4458 = vmatprep.subr.mxu0 0.0
      %v4459 = vand.u32 %v4219, 4294901760
      %v4460 = vsub.f32 %v4219, %v4459
      %4461 = vmatpush1.msra.mxu0 %v4460
      %4462 = vmatprep.subr.mxu0 0.0
      %4463 = vmatpush2.msra.mxu0 0.0
      %4464 = vmatprep.subr.mxu0 0.0
      %4465 = vmatpush2.msra.mxu0 0.0
      %4466 = vmatprep.subr.mxu0 0.0
      %4467 = vmatpush2.msra.mxu0 0.0
      %4468 = vmatprep.subr.mxu0 0.0
      %4469 = vmatpush2.msra.mxu0 0.0
      %4470 = vmatprep.subr.mxu0 0.0
      %4471 = vmatpush2.msra.mxu0 0.0
      %4472 = vmatprep.subr.mxu0 0.0
      %4473 = vmatpush2.msra.mxu0 0.0
      %4474 = vmatprep.subr.mxu0 0.0
      %4475 = vmatpush2.msra.mxu0 0.0
      %4476 = vmatprep.subr.mxu0 0.0
      %4477 = vmatpush2.msra.mxu0 0.0
      %4478 = vmatprep.subr.mxu0 0.0
      %4479 = vmatpush2.msra.mxu0 0.0
      %4480 = vmatprep.subr.mxu0 0.0
      %4481 = vmatpush2.msra.mxu0 0.0
      %4482 = vmatprep.subr.mxu0 0.0
      %4483 = vmatpush2.msra.mxu0 0.0
      %4484 = vmatprep.subr.mxu0 0.0
      %4485 = vmatpush2.msra.mxu0 0.0
      %4486 = vmatprep.subr.mxu0 0.0
      %4487 = vmatpush2.msra.mxu0 0.0
      %4488 = vmatprep.subr.mxu0 0.0
      %4489 = vmatpush2.msra.mxu0 0.0
      %4490 = vmatprep.subr.mxu0 0.0
      %4491 = vmatpush2.msra.mxu0 0.0
      %4492 = vmatprep.subr.mxu0 0.0
      %4493 = vmatpush2.msra.mxu0 0.0
      %4494 = vmatprep.mubr.f32.mxu0 0.0
      %v4495 = vand.u32 %v4231, 4294901760
      %v4496 = vsub.f32 %v4231, %v4495
      %4497 = vmatmul.mubr.f32.gmra.mxu0 %v4496
      %v4498 = vpop.f32.mrf.mxu0
      %v4499 = vadd.f32 %v4413, %v4498
      %v4500 = vpop.f32.mrf.mxu0
      %4501 = vmatprep.mubr.f32.mxu0 0.0
      %v4502 = vand.u32 %v4234, 4294901760
      %v4503 = vsub.f32 %v4234, %v4502
      %4504 = vmatmul.mubr.f32.gmra.mxu0 %v4503
      %v4505 = vpop.f32.mrf.mxu0
      %v4506 = vadd.f32 %v4419, %v4505
      %v4507 = vpop.f32.mrf.mxu0
      %4508 = vdwg.mxu0
      %4509 = vmatprep.subr.mxu0 0.0
      %4510 = vmatpush1.msra.mxu0 0.0
      %4511 = vmatprep.subr.mxu0 0.0
      %4512 = vmatpush1.msra.mxu0 0.0
      %4513 = vmatprep.subr.mxu0 0.0
      %4514 = vmatpush1.msra.mxu0 0.0
      %4515 = vmatprep.subr.mxu0 0.0
      %4516 = vmatpush1.msra.mxu0 0.0
      %4517 = vmatprep.subr.mxu0 0.0
      %4518 = vmatpush1.msra.mxu0 0.0
      %4519 = vmatprep.subr.mxu0 0.0
      %4520 = vmatpush1.msra.mxu0 0.0
      %4521 = vmatprep.subr.mxu0 0.0
      %4522 = vmatpush1.msra.mxu0 0.0
      %4523 = vmatprep.subr.mxu0 0.0
      %4524 = vmatpush1.msra.mxu0 0.0
      %4525 = vmatprep.subr.mxu0 0.0
      %4526 = vmatpush1.msra.mxu0 0.0
      %4527 = vmatprep.subr.mxu0 0.0
      %4528 = vmatpush1.msra.mxu0 0.0
      %4529 = vmatprep.subr.mxu0 0.0
      %4530 = vmatpush1.msra.mxu0 0.0
      %4531 = vmatprep.subr.mxu0 0.0
      %4532 = vmatpush1.msra.mxu0 0.0
      %4533 = vmatprep.subr.mxu0 0.0
      %v4534 = vand.u32 %v4222, 4294901760
      %4535 = vmatpush1.msra.mxu0 %v4534
      %4536 = vmatprep.subr.mxu0 0.0
      %v4537 = vand.u32 %v4221, 4294901760
      %4538 = vmatpush1.msra.mxu0 %v4537
      %4539 = vmatprep.subr.mxu0 0.0
      %v4540 = vand.u32 %v4220, 4294901760
      %4541 = vmatpush1.msra.mxu0 %v4540
      %4542 = vmatprep.subr.mxu0 0.0
      %v4543 = vand.u32 %v4219, 4294901760
      %4544 = vmatpush1.msra.mxu0 %v4543
      %4545 = vmatprep.subr.mxu0 0.0
      %4546 = vmatpush2.msra.mxu0 0.0
      %4547 = vmatprep.subr.mxu0 0.0
      %4548 = vmatpush2.msra.mxu0 0.0
      %4549 = vmatprep.subr.mxu0 0.0
      %4550 = vmatpush2.msra.mxu0 0.0
      %4551 = vmatprep.subr.mxu0 0.0
      %4552 = vmatpush2.msra.mxu0 0.0
      %4553 = vmatprep.subr.mxu0 0.0
      %4554 = vmatpush2.msra.mxu0 0.0
      %4555 = vmatprep.subr.mxu0 0.0
      %4556 = vmatpush2.msra.mxu0 0.0
      %4557 = vmatprep.subr.mxu0 0.0
      %4558 = vmatpush2.msra.mxu0 0.0
      %4559 = vmatprep.subr.mxu0 0.0
      %4560 = vmatpush2.msra.mxu0 0.0
      %4561 = vmatprep.subr.mxu0 0.0
      %4562 = vmatpush2.msra.mxu0 0.0
      %4563 = vmatprep.subr.mxu0 0.0
      %4564 = vmatpush2.msra.mxu0 0.0
      %4565 = vmatprep.subr.mxu0 0.0
      %4566 = vmatpush2.msra.mxu0 0.0
      %4567 = vmatprep.subr.mxu0 0.0
      %4568 = vmatpush2.msra.mxu0 0.0
      %4569 = vmatprep.subr.mxu0 0.0
      %4570 = vmatpush2.msra.mxu0 0.0
      %4571 = vmatprep.subr.mxu0 0.0
      %4572 = vmatpush2.msra.mxu0 0.0
      %4573 = vmatprep.subr.mxu0 0.0
      %4574 = vmatpush2.msra.mxu0 0.0
      %4575 = vmatprep.subr.mxu0 0.0
      %4576 = vmatpush2.msra.mxu0 0.0
      %4577 = vmatprep.mubr.f32.mxu0 0.0
      %v4578 = vand.u32 %v4231, 4294901760
      %v4579 = vsub.f32 %v4231, %v4578
      %v4580 = vand.u32 %v4579, 4294901760
      %4581 = vmatmul.mubr.f32.gmra.mxu0 %v4580
      %v4582 = vpop.f32.mrf.mxu0
      %v4583 = vadd.f32 %v4499, %v4582
      %v4584 = vpop.f32.mrf.mxu0
      %4585 = vmatprep.mubr.f32.mxu0 0.0
      %v4586 = vand.u32 %v4234, 4294901760
      %v4587 = vsub.f32 %v4234, %v4586
      %v4588 = vand.u32 %v4587, 4294901760
      %4589 = vmatmul.mubr.f32.gmra.mxu0 %v4588
      %v4590 = vpop.f32.mrf.mxu0
      %v4591 = vadd.f32 %v4506, %v4590
      %v4592 = vpop.f32.mrf.mxu0
      %4593 = vdwg.mxu0
      %4594 = vmatprep.subr.mxu0 0.0
      %4595 = vmatpush1.msra.mxu0 0.0
      %4596 = vmatprep.subr.mxu0 0.0
      %4597 = vmatpush1.msra.mxu0 0.0
      %4598 = vmatprep.subr.mxu0 0.0
      %4599 = vmatpush1.msra.mxu0 0.0
      %4600 = vmatprep.subr.mxu0 0.0
      %4601 = vmatpush1.msra.mxu0 0.0
      %4602 = vmatprep.subr.mxu0 0.0
      %4603 = vmatpush1.msra.mxu0 0.0
      %4604 = vmatprep.subr.mxu0 0.0
      %4605 = vmatpush1.msra.mxu0 0.0
      %4606 = vmatprep.subr.mxu0 0.0
      %4607 = vmatpush1.msra.mxu0 0.0
      %4608 = vmatprep.subr.mxu0 0.0
      %4609 = vmatpush1.msra.mxu0 0.0
      %4610 = vmatprep.subr.mxu0 0.0
      %4611 = vmatpush1.msra.mxu0 0.0
      %4612 = vmatprep.subr.mxu0 0.0
      %4613 = vmatpush1.msra.mxu0 0.0
      %4614 = vmatprep.subr.mxu0 0.0
      %4615 = vmatpush1.msra.mxu0 0.0
      %4616 = vmatprep.subr.mxu0 0.0
      %4617 = vmatpush1.msra.mxu0 0.0
      %4618 = vmatprep.subr.mxu0 0.0
      %v4619 = vand.u32 %v4222, 4294901760
      %v4620 = vsub.f32 %v4222, %v4619
      %v4621 = vand.u32 %v4620, 4294901760
      %4622 = vmatpush1.msra.mxu0 %v4621
      %4623 = vmatprep.subr.mxu0 0.0
      %v4624 = vand.u32 %v4221, 4294901760
      %v4625 = vsub.f32 %v4221, %v4624
      %v4626 = vand.u32 %v4625, 4294901760
      %4627 = vmatpush1.msra.mxu0 %v4626
      %4628 = vmatprep.subr.mxu0 0.0
      %v4629 = vand.u32 %v4220, 4294901760
      %v4630 = vsub.f32 %v4220, %v4629
      %v4631 = vand.u32 %v4630, 4294901760
      %4632 = vmatpush1.msra.mxu0 %v4631
      %4633 = vmatprep.subr.mxu0 0.0
      %v4634 = vand.u32 %v4219, 4294901760
      %v4635 = vsub.f32 %v4219, %v4634
      %v4636 = vand.u32 %v4635, 4294901760
      %4637 = vmatpush1.msra.mxu0 %v4636
      %4638 = vmatprep.subr.mxu0 0.0
      %4639 = vmatpush2.msra.mxu0 0.0
      %4640 = vmatprep.subr.mxu0 0.0
      %4641 = vmatpush2.msra.mxu0 0.0
      %4642 = vmatprep.subr.mxu0 0.0
      %4643 = vmatpush2.msra.mxu0 0.0
      %4644 = vmatprep.subr.mxu0 0.0
      %4645 = vmatpush2.msra.mxu0 0.0
      %4646 = vmatprep.subr.mxu0 0.0
      %4647 = vmatpush2.msra.mxu0 0.0
      %4648 = vmatprep.subr.mxu0 0.0
      %4649 = vmatpush2.msra.mxu0 0.0
      %4650 = vmatprep.subr.mxu0 0.0
      %4651 = vmatpush2.msra.mxu0 0.0
      %4652 = vmatprep.subr.mxu0 0.0
      %4653 = vmatpush2.msra.mxu0 0.0
      %4654 = vmatprep.subr.mxu0 0.0
      %4655 = vmatpush2.msra.mxu0 0.0
      %4656 = vmatprep.subr.mxu0 0.0
      %4657 = vmatpush2.msra.mxu0 0.0
      %4658 = vmatprep.subr.mxu0 0.0
      %4659 = vmatpush2.msra.mxu0 0.0
      %4660 = vmatprep.subr.mxu0 0.0
      %4661 = vmatpush2.msra.mxu0 0.0
      %4662 = vmatprep.subr.mxu0 0.0
      %4663 = vmatpush2.msra.mxu0 0.0
      %4664 = vmatprep.subr.mxu0 0.0
      %4665 = vmatpush2.msra.mxu0 0.0
      %4666 = vmatprep.subr.mxu0 0.0
      %4667 = vmatpush2.msra.mxu0 0.0
      %4668 = vmatprep.subr.mxu0 0.0
      %4669 = vmatpush2.msra.mxu0 0.0
      %4670 = vmatprep.mubr.f32.mxu0 0.0
      %v4671 = vand.u32 %v4231, 4294901760
      %4672 = vmatmul.mubr.f32.gmra.mxu0 %v4671
      %v4673 = vpop.f32.mrf.mxu0
      %v4674 = vadd.f32 %v4583, %v4673
      %v4675 = vpop.f32.mrf.mxu0
      %4676 = vmatprep.mubr.f32.mxu0 0.0
      %v4677 = vand.u32 %v4234, 4294901760
      %4678 = vmatmul.mubr.f32.gmra.mxu0 %v4677
      %v4679 = vpop.f32.mrf.mxu0
      %v4680 = vadd.f32 %v4591, %v4679
      %v4681 = vpop.f32.mrf.mxu0
      %4682 = vdwg.mxu0
      %4683 = vmatprep.subr.mxu0 0.0
      %4684 = vmatpush1.msra.mxu0 0.0
      %4685 = vmatprep.subr.mxu0 0.0
      %4686 = vmatpush1.msra.mxu0 0.0
      %4687 = vmatprep.subr.mxu0 0.0
      %4688 = vmatpush1.msra.mxu0 0.0
      %4689 = vmatprep.subr.mxu0 0.0
      %4690 = vmatpush1.msra.mxu0 0.0
      %4691 = vmatprep.subr.mxu0 0.0
      %4692 = vmatpush1.msra.mxu0 0.0
      %4693 = vmatprep.subr.mxu0 0.0
      %4694 = vmatpush1.msra.mxu0 0.0
      %4695 = vmatprep.subr.mxu0 0.0
      %4696 = vmatpush1.msra.mxu0 0.0
      %4697 = vmatprep.subr.mxu0 0.0
      %4698 = vmatpush1.msra.mxu0 0.0
      %4699 = vmatprep.subr.mxu0 0.0
      %4700 = vmatpush1.msra.mxu0 0.0
      %4701 = vmatprep.subr.mxu0 0.0
      %4702 = vmatpush1.msra.mxu0 0.0
      %4703 = vmatprep.subr.mxu0 0.0
      %4704 = vmatpush1.msra.mxu0 0.0
      %4705 = vmatprep.subr.mxu0 0.0
      %4706 = vmatpush1.msra.mxu0 0.0
      %4707 = vmatprep.subr.mxu0 0.0
      %v4708 = vand.u32 %v4222, 4294901760
      %4709 = vmatpush1.msra.mxu0 %v4708
      %4710 = vmatprep.subr.mxu0 0.0
      %v4711 = vand.u32 %v4221, 4294901760
      %4712 = vmatpush1.msra.mxu0 %v4711
      %4713 = vmatprep.subr.mxu0 0.0
      %v4714 = vand.u32 %v4220, 4294901760
      %4715 = vmatpush1.msra.mxu0 %v4714
      %4716 = vmatprep.subr.mxu0 0.0
      %v4717 = vand.u32 %v4219, 4294901760
      %4718 = vmatpush1.msra.mxu0 %v4717
      %4719 = vmatprep.subr.mxu0 0.0
      %4720 = vmatpush2.msra.mxu0 0.0
      %4721 = vmatprep.subr.mxu0 0.0
      %4722 = vmatpush2.msra.mxu0 0.0
      %4723 = vmatprep.subr.mxu0 0.0
      %4724 = vmatpush2.msra.mxu0 0.0
      %4725 = vmatprep.subr.mxu0 0.0
      %4726 = vmatpush2.msra.mxu0 0.0
      %4727 = vmatprep.subr.mxu0 0.0
      %4728 = vmatpush2.msra.mxu0 0.0
      %4729 = vmatprep.subr.mxu0 0.0
      %4730 = vmatpush2.msra.mxu0 0.0
      %4731 = vmatprep.subr.mxu0 0.0
      %4732 = vmatpush2.msra.mxu0 0.0
      %4733 = vmatprep.subr.mxu0 0.0
      %4734 = vmatpush2.msra.mxu0 0.0
      %4735 = vmatprep.subr.mxu0 0.0
      %4736 = vmatpush2.msra.mxu0 0.0
      %4737 = vmatprep.subr.mxu0 0.0
      %4738 = vmatpush2.msra.mxu0 0.0
      %4739 = vmatprep.subr.mxu0 0.0
      %4740 = vmatpush2.msra.mxu0 0.0
      %4741 = vmatprep.subr.mxu0 0.0
      %4742 = vmatpush2.msra.mxu0 0.0
      %4743 = vmatprep.subr.mxu0 0.0
      %4744 = vmatpush2.msra.mxu0 0.0
      %4745 = vmatprep.subr.mxu0 0.0
      %4746 = vmatpush2.msra.mxu0 0.0
      %4747 = vmatprep.subr.mxu0 0.0
      %4748 = vmatpush2.msra.mxu0 0.0
      %4749 = vmatprep.subr.mxu0 0.0
      %4750 = vmatpush2.msra.mxu0 0.0
      %4751 = vmatprep.mubr.f32.mxu0 0.0
      %v4752 = vand.u32 %v4231, 4294901760
      %4753 = vmatmul.mubr.f32.gmra.mxu0 %v4752
      %v4754 = vpop.f32.mrf.mxu0
      %v4755 = vadd.f32 %v4674, %v4754
      %v4756 = vpop.f32.mrf.mxu0
      %4757 = vmatprep.mubr.f32.mxu0 0.0
      %v4758 = vand.u32 %v4234, 4294901760
      %4759 = vmatmul.mubr.f32.gmra.mxu0 %v4758
      %v4760 = vpop.f32.mrf.mxu0
      %v4761 = vadd.f32 %v4680, %v4760
      %v4762 = vpop.f32.mrf.mxu0
      %4763 = vdwg.mxu0
      %v4764 = vmul.f32 %v4755, %v4755
      %v4765 = vmul.f32 %v4761, %v4761
      %v4766 = vmul.f32 %v4755, %v4764
      %v4767 = vmul.f32 %v4761, %v4765
      %v4768 = vmul.f32 %v4766, 0.044715
      %v4769 = vmul.f32 %v4767, 0.044715
      %v4770 = vadd.f32 %v4755, %v4768
      %v4771 = vadd.f32 %v4761, %v4769
      %v4772 = vmul.f32 %v4770, 0.7978846
      %v4773 = vmul.f32 %v4771, 0.7978846
      %v4774 = vtanh.pop %v4772
      %v4775 = vtanh.pop %v4773
      %v4776 = vadd.f32 %v4774, 1.0
      %v4777 = vadd.f32 %v4775, 1.0
      %v4778 = vmul.f32 %v4776, 0.5
      %v4779 = vmul.f32 %v4777, 0.5
      %v4780 = vmul.f32 %v4755, %v4778
      %v4781 = vmul.f32 %v4761, %v4779
      %v4782 = vld [vmem:[%s9] sm:$0xff]
      %v4783 = vld [vmem:[%s9 + $0x8] sm:$0xff]
      %v4784 = vld [vmem:[%s9 + $0x10] sm:$0xff]
      %v4785 = vld [vmem:[%s9 + $0x18] sm:$0xff]
      %v4786 = vld [vmem:[%s9 + $0x20] sm:$0xff]
      %v4787 = vld [vmem:[%s9 + $0x28] sm:$0xff]
      %v4788 = vld [vmem:[%s9 + $0x30] sm:$0xff]
      %v4789 = vld [vmem:[%s9 + $0x38] sm:$0xff]
      %v4790 = vld [vmem:[%s9 + $0x40] sm:$0xff]
      %v4791 = vld [vmem:[%s9 + $0x48] sm:$0xff]
      %v4792 = vld [vmem:[%s9 + $0x50] sm:$0xff]
      %v4793 = vld [vmem:[%s9 + $0x58] sm:$0xff]
      %v4794 = vld [vmem:[%s9 + $0x60] sm:$0xff]
      %v4795 = vld [vmem:[%s9 + $0x68] sm:$0xff]
      %v4796 = vld [vmem:[%s9 + $0x70] sm:$0xff]
      %v4797 = vld [vmem:[%s9 + $0x78] sm:$0xff]
      %v4798 = vld [vmem:[%s10] sm:$0x1]
      %v4800 = vlaneseq
      %v4801 = vshrl.u32 %v4800, 7
      %v4802 = vsub.s32 0, %v4801
      %v4803 = vrot.slane %v4798, %v4802
      %4805 = vmatprep.subr.mxu0 0.0
      %v4806 = vand.u32 %v4797, 4294901760
      %4807 = vmatpush1.msra.mxu0 %v4806
      %4808 = vmatprep.subr.mxu0 0.0
      %v4809 = vand.u32 %v4796, 4294901760
      %4810 = vmatpush1.msra.mxu0 %v4809
      %4811 = vmatprep.subr.mxu0 0.0
      %v4812 = vand.u32 %v4795, 4294901760
      %4813 = vmatpush1.msra.mxu0 %v4812
      %4814 = vmatprep.subr.mxu0 0.0
      %v4815 = vand.u32 %v4794, 4294901760
      %4816 = vmatpush1.msra.mxu0 %v4815
      %4817 = vmatprep.subr.mxu0 0.0
      %v4818 = vand.u32 %v4793, 4294901760
      %4819 = vmatpush1.msra.mxu0 %v4818
      %4820 = vmatprep.subr.mxu0 0.0
      %v4821 = vand.u32 %v4792, 4294901760
      %4822 = vmatpush1.msra.mxu0 %v4821
      %4823 = vmatprep.subr.mxu0 0.0
      %v4824 = vand.u32 %v4791, 4294901760
      %4825 = vmatpush1.msra.mxu0 %v4824
      %4826 = vmatprep.subr.mxu0 0.0
      %v4827 = vand.u32 %v4790, 4294901760
      %4828 = vmatpush1.msra.mxu0 %v4827
      %4829 = vmatprep.subr.mxu0 0.0
      %v4830 = vand.u32 %v4789, 4294901760
      %4831 = vmatpush1.msra.mxu0 %v4830
      %4832 = vmatprep.subr.mxu0 0.0
      %v4833 = vand.u32 %v4788, 4294901760
      %4834 = vmatpush1.msra.mxu0 %v4833
      %4835 = vmatprep.subr.mxu0 0.0
      %v4836 = vand.u32 %v4787, 4294901760
      %4837 = vmatpush1.msra.mxu0 %v4836
      %4838 = vmatprep.subr.mxu0 0.0
      %v4839 = vand.u32 %v4786, 4294901760
      %4840 = vmatpush1.msra.mxu0 %v4839
      %4841 = vmatprep.subr.mxu0 0.0
      %v4842 = vand.u32 %v4785, 4294901760
      %4843 = vmatpush1.msra.mxu0 %v4842
      %4844 = vmatprep.subr.mxu0 0.0
      %v4845 = vand.u32 %v4784, 4294901760
      %4846 = vmatpush1.msra.mxu0 %v4845
      %4847 = vmatprep.subr.mxu0 0.0
      %v4848 = vand.u32 %v4783, 4294901760
      %4849 = vmatpush1.msra.mxu0 %v4848
      %4850 = vmatprep.subr.mxu0 0.0
      %v4851 = vand.u32 %v4782, 4294901760
      %4852 = vmatpush1.msra.mxu0 %v4851
      %4853 = vmatprep.subr.mxu0 0.0
      %4854 = vmatpush2.msra.mxu0 0.0
      %4855 = vmatprep.subr.mxu0 0.0
      %4856 = vmatpush2.msra.mxu0 0.0
      %4857 = vmatprep.subr.mxu0 0.0
      %4858 = vmatpush2.msra.mxu0 0.0
      %4859 = vmatprep.subr.mxu0 0.0
      %4860 = vmatpush2.msra.mxu0 0.0
      %4861 = vmatprep.subr.mxu0 0.0
      %4862 = vmatpush2.msra.mxu0 0.0
      %4863 = vmatprep.subr.mxu0 0.0
      %4864 = vmatpush2.msra.mxu0 0.0
      %4865 = vmatprep.subr.mxu0 0.0
      %4866 = vmatpush2.msra.mxu0 0.0
      %4867 = vmatprep.subr.mxu0 0.0
      %4868 = vmatpush2.msra.mxu0 0.0
      %4869 = vmatprep.subr.mxu0 0.0
      %4870 = vmatpush2.msra.mxu0 0.0
      %4871 = vmatprep.subr.mxu0 0.0
      %4872 = vmatpush2.msra.mxu0 0.0
      %4873 = vmatprep.subr.mxu0 0.0
      %4874 = vmatpush2.msra.mxu0 0.0
      %4875 = vmatprep.subr.mxu0 0.0
      %4876 = vmatpush2.msra.mxu0 0.0
      %4877 = vmatprep.subr.mxu0 0.0
      %4878 = vmatpush2.msra.mxu0 0.0
      %4879 = vmatprep.subr.mxu0 0.0
      %4880 = vmatpush2.msra.mxu0 0.0
      %4881 = vmatprep.subr.mxu0 0.0
      %4882 = vmatpush2.msra.mxu0 0.0
      %4883 = vmatprep.subr.mxu0 0.0
      %4884 = vmatpush2.msra.mxu0 0.0
      %4885 = vmatprep.mubr.f32.mxu0 0.0
      %v4886 = vand.u32 %v4780, 4294901760
      %v4887 = vsub.f32 %v4780, %v4886
      %v4888 = vand.u32 %v4887, 4294901760
      %v4889 = vsub.f32 %v4887, %v4888
      %v4890 = vand.u32 %v4889, 4294901760
      %4891 = vmatmul.mubr.f32.gmra.mxu0 %v4890
      %v4892 = vpop.f32.mrf.mxu0
      %v4893 = vadd.f32 %v4803, %v4892
      %v4894 = vpop.f32.mrf.mxu0
      %4895 = vmatprep.mubr.f32.mxu0 0.0
      %v4896 = vand.u32 %v4781, 4294901760
      %v4897 = vsub.f32 %v4781, %v4896
      %v4898 = vand.u32 %v4897, 4294901760
      %v4899 = vsub.f32 %v4897, %v4898
      %v4900 = vand.u32 %v4899, 4294901760
      %4901 = vmatmul.mubr.f32.gmra.mxu0 %v4900
      %v4902 = vpop.f32.mrf.mxu0
      %v4903 = vadd.f32 %v4803, %v4902
      %v4904 = vpop.f32.mrf.mxu0
      %4905 = vdwg.mxu0
      %4906 = vmatprep.subr.mxu0 0.0
      %v4907 = vand.u32 %v4797, 4294901760
      %v4908 = vsub.f32 %v4797, %v4907
      %v4909 = vand.u32 %v4908, 4294901760
      %v4910 = vsub.f32 %v4908, %v4909
      %v4911 = vand.u32 %v4910, 4294901760
      %4912 = vmatpush1.msra.mxu0 %v4911
      %4913 = vmatprep.subr.mxu0 0.0
      %v4914 = vand.u32 %v4796, 4294901760
      %v4915 = vsub.f32 %v4796, %v4914
      %v4916 = vand.u32 %v4915, 4294901760
      %v4917 = vsub.f32 %v4915, %v4916
      %v4918 = vand.u32 %v4917, 4294901760
      %4919 = vmatpush1.msra.mxu0 %v4918
      %4920 = vmatprep.subr.mxu0 0.0
      %v4921 = vand.u32 %v4795, 4294901760
      %v4922 = vsub.f32 %v4795, %v4921
      %v4923 = vand.u32 %v4922, 4294901760
      %v4924 = vsub.f32 %v4922, %v4923
      %v4925 = vand.u32 %v4924, 4294901760
      %4926 = vmatpush1.msra.mxu0 %v4925
      %4927 = vmatprep.subr.mxu0 0.0
      %v4928 = vand.u32 %v4794, 4294901760
      %v4929 = vsub.f32 %v4794, %v4928
      %v4930 = vand.u32 %v4929, 4294901760
      %v4931 = vsub.f32 %v4929, %v4930
      %v4932 = vand.u32 %v4931, 4294901760
      %4933 = vmatpush1.msra.mxu0 %v4932
      %4934 = vmatprep.subr.mxu0 0.0
      %v4935 = vand.u32 %v4793, 4294901760
      %v4936 = vsub.f32 %v4793, %v4935
      %v4937 = vand.u32 %v4936, 4294901760
      %v4938 = vsub.f32 %v4936, %v4937
      %v4939 = vand.u32 %v4938, 4294901760
      %4940 = vmatpush1.msra.mxu0 %v4939
      %4941 = vmatprep.subr.mxu0 0.0
      %v4942 = vand.u32 %v4792, 4294901760
      %v4943 = vsub.f32 %v4792, %v4942
      %v4944 = vand.u32 %v4943, 4294901760
      %v4945 = vsub.f32 %v4943, %v4944
      %v4946 = vand.u32 %v4945, 4294901760
      %4947 = vmatpush1.msra.mxu0 %v4946
      %4948 = vmatprep.subr.mxu0 0.0
      %v4949 = vand.u32 %v4791, 4294901760
      %v4950 = vsub.f32 %v4791, %v4949
      %v4951 = vand.u32 %v4950, 4294901760
      %v4952 = vsub.f32 %v4950, %v4951
      %v4953 = vand.u32 %v4952, 4294901760
      %4954 = vmatpush1.msra.mxu0 %v4953
      %4955 = vmatprep.subr.mxu0 0.0
      %v4956 = vand.u32 %v4790, 4294901760
      %v4957 = vsub.f32 %v4790, %v4956
      %v4958 = vand.u32 %v4957, 4294901760
      %v4959 = vsub.f32 %v4957, %v4958
      %v4960 = vand.u32 %v4959, 4294901760
      %4961 = vmatpush1.msra.mxu0 %v4960
      %4962 = vmatprep.subr.mxu0 0.0
      %v4963 = vand.u32 %v4789, 4294901760
      %v4964 = vsub.f32 %v4789, %v4963
      %v4965 = vand.u32 %v4964, 4294901760
      %v4966 = vsub.f32 %v4964, %v4965
      %v4967 = vand.u32 %v4966, 4294901760
      %4968 = vmatpush1.msra.mxu0 %v4967
      %4969 = vmatprep.subr.mxu0 0.0
      %v4970 = vand.u32 %v4788, 4294901760
      %v4971 = vsub.f32 %v4788, %v4970
      %v4972 = vand.u32 %v4971, 4294901760
      %v4973 = vsub.f32 %v4971, %v4972
      %v4974 = vand.u32 %v4973, 4294901760
      %4975 = vmatpush1.msra.mxu0 %v4974
      %4976 = vmatprep.subr.mxu0 0.0
      %v4977 = vand.u32 %v4787, 4294901760
      %v4978 = vsub.f32 %v4787, %v4977
      %v4979 = vand.u32 %v4978, 4294901760
      %v4980 = vsub.f32 %v4978, %v4979
      %v4981 = vand.u32 %v4980, 4294901760
      %4982 = vmatpush1.msra.mxu0 %v4981
      %4983 = vmatprep.subr.mxu0 0.0
      %v4984 = vand.u32 %v4786, 4294901760
      %v4985 = vsub.f32 %v4786, %v4984
      %v4986 = vand.u32 %v4985, 4294901760
      %v4987 = vsub.f32 %v4985, %v4986
      %v4988 = vand.u32 %v4987, 4294901760
      %4989 = vmatpush1.msra.mxu0 %v4988
      %4990 = vmatprep.subr.mxu0 0.0
      %v4991 = vand.u32 %v4785, 4294901760
      %v4992 = vsub.f32 %v4785, %v4991
      %v4993 = vand.u32 %v4992, 4294901760
      %v4994 = vsub.f32 %v4992, %v4993
      %v4995 = vand.u32 %v4994, 4294901760
      %4996 = vmatpush1.msra.mxu0 %v4995
      %4997 = vmatprep.subr.mxu0 0.0
      %v4998 = vand.u32 %v4784, 4294901760
      %v4999 = vsub.f32 %v4784, %v4998
      %v5000 = vand.u32 %v4999, 4294901760
      %v5001 = vsub.f32 %v4999, %v5000
      %v5002 = vand.u32 %v5001, 4294901760
      %5003 = vmatpush1.msra.mxu0 %v5002
      %5004 = vmatprep.subr.mxu0 0.0
      %v5005 = vand.u32 %v4783, 4294901760
      %v5006 = vsub.f32 %v4783, %v5005
      %v5007 = vand.u32 %v5006, 4294901760
      %v5008 = vsub.f32 %v5006, %v5007
      %v5009 = vand.u32 %v5008, 4294901760
      %5010 = vmatpush1.msra.mxu0 %v5009
      %5011 = vmatprep.subr.mxu0 0.0
      %v5012 = vand.u32 %v4782, 4294901760
      %v5013 = vsub.f32 %v4782, %v5012
      %v5014 = vand.u32 %v5013, 4294901760
      %v5015 = vsub.f32 %v5013, %v5014
      %v5016 = vand.u32 %v5015, 4294901760
      %5017 = vmatpush1.msra.mxu0 %v5016
      %5018 = vmatprep.subr.mxu0 0.0
      %5019 = vmatpush2.msra.mxu0 0.0
      %5020 = vmatprep.subr.mxu0 0.0
      %5021 = vmatpush2.msra.mxu0 0.0
      %5022 = vmatprep.subr.mxu0 0.0
      %5023 = vmatpush2.msra.mxu0 0.0
      %5024 = vmatprep.subr.mxu0 0.0
      %5025 = vmatpush2.msra.mxu0 0.0
      %5026 = vmatprep.subr.mxu0 0.0
      %5027 = vmatpush2.msra.mxu0 0.0
      %5028 = vmatprep.subr.mxu0 0.0
      %5029 = vmatpush2.msra.mxu0 0.0
      %5030 = vmatprep.subr.mxu0 0.0
      %5031 = vmatpush2.msra.mxu0 0.0
      %5032 = vmatprep.subr.mxu0 0.0
      %5033 = vmatpush2.msra.mxu0 0.0
      %5034 = vmatprep.subr.mxu0 0.0
      %5035 = vmatpush2.msra.mxu0 0.0
      %5036 = vmatprep.subr.mxu0 0.0
      %5037 = vmatpush2.msra.mxu0 0.0
      %5038 = vmatprep.subr.mxu0 0.0
      %5039 = vmatpush2.msra.mxu0 0.0
      %5040 = vmatprep.subr.mxu0 0.0
      %5041 = vmatpush2.msra.mxu0 0.0
      %5042 = vmatprep.subr.mxu0 0.0
      %5043 = vmatpush2.msra.mxu0 0.0
      %5044 = vmatprep.subr.mxu0 0.0
      %5045 = vmatpush2.msra.mxu0 0.0
      %5046 = vmatprep.subr.mxu0 0.0
      %5047 = vmatpush2.msra.mxu0 0.0
      %5048 = vmatprep.subr.mxu0 0.0
      %5049 = vmatpush2.msra.mxu0 0.0
      %5050 = vmatprep.mubr.f32.mxu0 0.0
      %v5051 = vand.u32 %v4780, 4294901760
      %5052 = vmatmul.mubr.f32.gmra.mxu0 %v5051
      %v5053 = vpop.f32.mrf.mxu0
      %v5054 = vadd.f32 %v4893, %v5053
      %v5055 = vpop.f32.mrf.mxu0
      %5056 = vmatprep.mubr.f32.mxu0 0.0
      %v5057 = vand.u32 %v4781, 4294901760
      %5058 = vmatmul.mubr.f32.gmra.mxu0 %v5057
      %v5059 = vpop.f32.mrf.mxu0
      %v5060 = vadd.f32 %v4903, %v5059
      %v5061 = vpop.f32.mrf.mxu0
      %5062 = vdwg.mxu0
      %5063 = vmatprep.subr.mxu0 0.0
      %v5064 = vand.u32 %v4797, 4294901760
      %v5065 = vsub.f32 %v4797, %v5064
      %5066 = vmatpush1.msra.mxu0 %v5065
      %5067 = vmatprep.subr.mxu0 0.0
      %v5068 = vand.u32 %v4796, 4294901760
      %v5069 = vsub.f32 %v4796, %v5068
      %5070 = vmatpush1.msra.mxu0 %v5069
      %5071 = vmatprep.subr.mxu0 0.0
      %v5072 = vand.u32 %v4795, 4294901760
      %v5073 = vsub.f32 %v4795, %v5072
      %5074 = vmatpush1.msra.mxu0 %v5073
      %5075 = vmatprep.subr.mxu0 0.0
      %v5076 = vand.u32 %v4794, 4294901760
      %v5077 = vsub.f32 %v4794, %v5076
      %5078 = vmatpush1.msra.mxu0 %v5077
      %5079 = vmatprep.subr.mxu0 0.0
      %v5080 = vand.u32 %v4793, 4294901760
      %v5081 = vsub.f32 %v4793, %v5080
      %5082 = vmatpush1.msra.mxu0 %v5081
      %5083 = vmatprep.subr.mxu0 0.0
      %v5084 = vand.u32 %v4792, 4294901760
      %v5085 = vsub.f32 %v4792, %v5084
      %5086 = vmatpush1.msra.mxu0 %v5085
      %5087 = vmatprep.subr.mxu0 0.0
      %v5088 = vand.u32 %v4791, 4294901760
      %v5089 = vsub.f32 %v4791, %v5088
      %5090 = vmatpush1.msra.mxu0 %v5089
      %5091 = vmatprep.subr.mxu0 0.0
      %v5092 = vand.u32 %v4790, 4294901760
      %v5093 = vsub.f32 %v4790, %v5092
      %5094 = vmatpush1.msra.mxu0 %v5093
      %5095 = vmatprep.subr.mxu0 0.0
      %v5096 = vand.u32 %v4789, 4294901760
      %v5097 = vsub.f32 %v4789, %v5096
      %5098 = vmatpush1.msra.mxu0 %v5097
      %5099 = vmatprep.subr.mxu0 0.0
      %v5100 = vand.u32 %v4788, 4294901760
      %v5101 = vsub.f32 %v4788, %v5100
      %5102 = vmatpush1.msra.mxu0 %v5101
      %5103 = vmatprep.subr.mxu0 0.0
      %v5104 = vand.u32 %v4787, 4294901760
      %v5105 = vsub.f32 %v4787, %v5104
      %5106 = vmatpush1.msra.mxu0 %v5105
      %5107 = vmatprep.subr.mxu0 0.0
      %v5108 = vand.u32 %v4786, 4294901760
      %v5109 = vsub.f32 %v4786, %v5108
      %5110 = vmatpush1.msra.mxu0 %v5109
      %5111 = vmatprep.subr.mxu0 0.0
      %v5112 = vand.u32 %v4785, 4294901760
      %v5113 = vsub.f32 %v4785, %v5112
      %5114 = vmatpush1.msra.mxu0 %v5113
      %5115 = vmatprep.subr.mxu0 0.0
      %v5116 = vand.u32 %v4784, 4294901760
      %v5117 = vsub.f32 %v4784, %v5116
      %5118 = vmatpush1.msra.mxu0 %v5117
      %5119 = vmatprep.subr.mxu0 0.0
      %v5120 = vand.u32 %v4783, 4294901760
      %v5121 = vsub.f32 %v4783, %v5120
      %5122 = vmatpush1.msra.mxu0 %v5121
      %5123 = vmatprep.subr.mxu0 0.0
      %v5124 = vand.u32 %v4782, 4294901760
      %v5125 = vsub.f32 %v4782, %v5124
      %5126 = vmatpush1.msra.mxu0 %v5125
      %5127 = vmatprep.subr.mxu0 0.0
      %5128 = vmatpush2.msra.mxu0 0.0
      %5129 = vmatprep.subr.mxu0 0.0
      %5130 = vmatpush2.msra.mxu0 0.0
      %5131 = vmatprep.subr.mxu0 0.0
      %5132 = vmatpush2.msra.mxu0 0.0
      %5133 = vmatprep.subr.mxu0 0.0
      %5134 = vmatpush2.msra.mxu0 0.0
      %5135 = vmatprep.subr.mxu0 0.0
      %5136 = vmatpush2.msra.mxu0 0.0
      %5137 = vmatprep.subr.mxu0 0.0
      %5138 = vmatpush2.msra.mxu0 0.0
      %5139 = vmatprep.subr.mxu0 0.0
      %5140 = vmatpush2.msra.mxu0 0.0
      %5141 = vmatprep.subr.mxu0 0.0
      %5142 = vmatpush2.msra.mxu0 0.0
      %5143 = vmatprep.subr.mxu0 0.0
      %5144 = vmatpush2.msra.mxu0 0.0
      %5145 = vmatprep.subr.mxu0 0.0
      %5146 = vmatpush2.msra.mxu0 0.0
      %5147 = vmatprep.subr.mxu0 0.0
      %5148 = vmatpush2.msra.mxu0 0.0
      %5149 = vmatprep.subr.mxu0 0.0
      %5150 = vmatpush2.msra.mxu0 0.0
      %5151 = vmatprep.subr.mxu0 0.0
      %5152 = vmatpush2.msra.mxu0 0.0
      %5153 = vmatprep.subr.mxu0 0.0
      %5154 = vmatpush2.msra.mxu0 0.0
      %5155 = vmatprep.subr.mxu0 0.0
      %5156 = vmatpush2.msra.mxu0 0.0
      %5157 = vmatprep.subr.mxu0 0.0
      %5158 = vmatpush2.msra.mxu0 0.0
      %5159 = vmatprep.mubr.f32.mxu0 0.0
      %v5160 = vand.u32 %v4780, 4294901760
      %v5161 = vsub.f32 %v4780, %v5160
      %5162 = vmatmul.mubr.f32.gmra.mxu0 %v5161
      %v5163 = vpop.f32.mrf.mxu0
      %v5164 = vadd.f32 %v5054, %v5163
      %v5165 = vpop.f32.mrf.mxu0
      %5166 = vmatprep.mubr.f32.mxu0 0.0
      %v5167 = vand.u32 %v4781, 4294901760
      %v5168 = vsub.f32 %v4781, %v5167
      %5169 = vmatmul.mubr.f32.gmra.mxu0 %v5168
      %v5170 = vpop.f32.mrf.mxu0
      %v5171 = vadd.f32 %v5060, %v5170
      %v5172 = vpop.f32.mrf.mxu0
      %5173 = vdwg.mxu0
      %5174 = vmatprep.subr.mxu0 0.0
      %v5175 = vand.u32 %v4797, 4294901760
      %5176 = vmatpush1.msra.mxu0 %v5175
      %5177 = vmatprep.subr.mxu0 0.0
      %v5178 = vand.u32 %v4796, 4294901760
      %5179 = vmatpush1.msra.mxu0 %v5178
      %5180 = vmatprep.subr.mxu0 0.0
      %v5181 = vand.u32 %v4795, 4294901760
      %5182 = vmatpush1.msra.mxu0 %v5181
      %5183 = vmatprep.subr.mxu0 0.0
      %v5184 = vand.u32 %v4794, 4294901760
      %5185 = vmatpush1.msra.mxu0 %v5184
      %5186 = vmatprep.subr.mxu0 0.0
      %v5187 = vand.u32 %v4793, 4294901760
      %5188 = vmatpush1.msra.mxu0 %v5187
      %5189 = vmatprep.subr.mxu0 0.0
      %v5190 = vand.u32 %v4792, 4294901760
      %5191 = vmatpush1.msra.mxu0 %v5190
      %5192 = vmatprep.subr.mxu0 0.0
      %v5193 = vand.u32 %v4791, 4294901760
      %5194 = vmatpush1.msra.mxu0 %v5193
      %5195 = vmatprep.subr.mxu0 0.0
      %v5196 = vand.u32 %v4790, 4294901760
      %5197 = vmatpush1.msra.mxu0 %v5196
      %5198 = vmatprep.subr.mxu0 0.0
      %v5199 = vand.u32 %v4789, 4294901760
      %5200 = vmatpush1.msra.mxu0 %v5199
      %5201 = vmatprep.subr.mxu0 0.0
      %v5202 = vand.u32 %v4788, 4294901760
      %5203 = vmatpush1.msra.mxu0 %v5202
      %5204 = vmatprep.subr.mxu0 0.0
      %v5205 = vand.u32 %v4787, 4294901760
      %5206 = vmatpush1.msra.mxu0 %v5205
      %5207 = vmatprep.subr.mxu0 0.0
      %v5208 = vand.u32 %v4786, 4294901760
      %5209 = vmatpush1.msra.mxu0 %v5208
      %5210 = vmatprep.subr.mxu0 0.0
      %v5211 = vand.u32 %v4785, 4294901760
      %5212 = vmatpush1.msra.mxu0 %v5211
      %5213 = vmatprep.subr.mxu0 0.0
      %v5214 = vand.u32 %v4784, 4294901760
      %5215 = vmatpush1.msra.mxu0 %v5214
      %5216 = vmatprep.subr.mxu0 0.0
      %v5217 = vand.u32 %v4783, 4294901760
      %5218 = vmatpush1.msra.mxu0 %v5217
      %5219 = vmatprep.subr.mxu0 0.0
      %v5220 = vand.u32 %v4782, 4294901760
      %5221 = vmatpush1.msra.mxu0 %v5220
      %5222 = vmatprep.subr.mxu0 0.0
      %5223 = vmatpush2.msra.mxu0 0.0
      %5224 = vmatprep.subr.mxu0 0.0
      %5225 = vmatpush2.msra.mxu0 0.0
      %5226 = vmatprep.subr.mxu0 0.0
      %5227 = vmatpush2.msra.mxu0 0.0
      %5228 = vmatprep.subr.mxu0 0.0
      %5229 = vmatpush2.msra.mxu0 0.0
      %5230 = vmatprep.subr.mxu0 0.0
      %5231 = vmatpush2.msra.mxu0 0.0
      %5232 = vmatprep.subr.mxu0 0.0
      %5233 = vmatpush2.msra.mxu0 0.0
      %5234 = vmatprep.subr.mxu0 0.0
      %5235 = vmatpush2.msra.mxu0 0.0
      %5236 = vmatprep.subr.mxu0 0.0
      %5237 = vmatpush2.msra.mxu0 0.0
      %5238 = vmatprep.subr.mxu0 0.0
      %5239 = vmatpush2.msra.mxu0 0.0
      %5240 = vmatprep.subr.mxu0 0.0
      %5241 = vmatpush2.msra.mxu0 0.0
      %5242 = vmatprep.subr.mxu0 0.0
      %5243 = vmatpush2.msra.mxu0 0.0
      %5244 = vmatprep.subr.mxu0 0.0
      %5245 = vmatpush2.msra.mxu0 0.0
      %5246 = vmatprep.subr.mxu0 0.0
      %5247 = vmatpush2.msra.mxu0 0.0
      %5248 = vmatprep.subr.mxu0 0.0
      %5249 = vmatpush2.msra.mxu0 0.0
      %5250 = vmatprep.subr.mxu0 0.0
      %5251 = vmatpush2.msra.mxu0 0.0
      %5252 = vmatprep.subr.mxu0 0.0
      %5253 = vmatpush2.msra.mxu0 0.0
      %5254 = vmatprep.mubr.f32.mxu0 0.0
      %v5255 = vand.u32 %v4780, 4294901760
      %v5256 = vsub.f32 %v4780, %v5255
      %v5257 = vand.u32 %v5256, 4294901760
      %5258 = vmatmul.mubr.f32.gmra.mxu0 %v5257
      %v5259 = vpop.f32.mrf.mxu0
      %v5260 = vadd.f32 %v5164, %v5259
      %v5261 = vpop.f32.mrf.mxu0
      %5262 = vmatprep.mubr.f32.mxu0 0.0
      %v5263 = vand.u32 %v4781, 4294901760
      %v5264 = vsub.f32 %v4781, %v5263
      %v5265 = vand.u32 %v5264, 4294901760
      %5266 = vmatmul.mubr.f32.gmra.mxu0 %v5265
      %v5267 = vpop.f32.mrf.mxu0
      %v5268 = vadd.f32 %v5171, %v5267
      %v5269 = vpop.f32.mrf.mxu0
      %5270 = vdwg.mxu0
      %5271 = vmatprep.subr.mxu0 0.0
      %v5272 = vand.u32 %v4797, 4294901760
      %v5273 = vsub.f32 %v4797, %v5272
      %v5274 = vand.u32 %v5273, 4294901760
      %5275 = vmatpush1.msra.mxu0 %v5274
      %5276 = vmatprep.subr.mxu0 0.0
      %v5277 = vand.u32 %v4796, 4294901760
      %v5278 = vsub.f32 %v4796, %v5277
      %v5279 = vand.u32 %v5278, 4294901760
      %5280 = vmatpush1.msra.mxu0 %v5279
      %5281 = vmatprep.subr.mxu0 0.0
      %v5282 = vand.u32 %v4795, 4294901760
      %v5283 = vsub.f32 %v4795, %v5282
      %v5284 = vand.u32 %v5283, 4294901760
      %5285 = vmatpush1.msra.mxu0 %v5284
      %5286 = vmatprep.subr.mxu0 0.0
      %v5287 = vand.u32 %v4794, 4294901760
      %v5288 = vsub.f32 %v4794, %v5287
      %v5289 = vand.u32 %v5288, 4294901760
      %5290 = vmatpush1.msra.mxu0 %v5289
      %5291 = vmatprep.subr.mxu0 0.0
      %v5292 = vand.u32 %v4793, 4294901760
      %v5293 = vsub.f32 %v4793, %v5292
      %v5294 = vand.u32 %v5293, 4294901760
      %5295 = vmatpush1.msra.mxu0 %v5294
      %5296 = vmatprep.subr.mxu0 0.0
      %v5297 = vand.u32 %v4792, 4294901760
      %v5298 = vsub.f32 %v4792, %v5297
      %v5299 = vand.u32 %v5298, 4294901760
      %5300 = vmatpush1.msra.mxu0 %v5299
      %5301 = vmatprep.subr.mxu0 0.0
      %v5302 = vand.u32 %v4791, 4294901760
      %v5303 = vsub.f32 %v4791, %v5302
      %v5304 = vand.u32 %v5303, 4294901760
      %5305 = vmatpush1.msra.mxu0 %v5304
      %5306 = vmatprep.subr.mxu0 0.0
      %v5307 = vand.u32 %v4790, 4294901760
      %v5308 = vsub.f32 %v4790, %v5307
      %v5309 = vand.u32 %v5308, 4294901760
      %5310 = vmatpush1.msra.mxu0 %v5309
      %5311 = vmatprep.subr.mxu0 0.0
      %v5312 = vand.u32 %v4789, 4294901760
      %v5313 = vsub.f32 %v4789, %v5312
      %v5314 = vand.u32 %v5313, 4294901760
      %5315 = vmatpush1.msra.mxu0 %v5314
      %5316 = vmatprep.subr.mxu0 0.0
      %v5317 = vand.u32 %v4788, 4294901760
      %v5318 = vsub.f32 %v4788, %v5317
      %v5319 = vand.u32 %v5318, 4294901760
      %5320 = vmatpush1.msra.mxu0 %v5319
      %5321 = vmatprep.subr.mxu0 0.0
      %v5322 = vand.u32 %v4787, 4294901760
      %v5323 = vsub.f32 %v4787, %v5322
      %v5324 = vand.u32 %v5323, 4294901760
      %5325 = vmatpush1.msra.mxu0 %v5324
      %5326 = vmatprep.subr.mxu0 0.0
      %v5327 = vand.u32 %v4786, 4294901760
      %v5328 = vsub.f32 %v4786, %v5327
      %v5329 = vand.u32 %v5328, 4294901760
      %5330 = vmatpush1.msra.mxu0 %v5329
      %5331 = vmatprep.subr.mxu0 0.0
      %v5332 = vand.u32 %v4785, 4294901760
      %v5333 = vsub.f32 %v4785, %v5332
      %v5334 = vand.u32 %v5333, 4294901760
      %5335 = vmatpush1.msra.mxu0 %v5334
      %5336 = vmatprep.subr.mxu0 0.0
      %v5337 = vand.u32 %v4784, 4294901760
      %v5338 = vsub.f32 %v4784, %v5337
      %v5339 = vand.u32 %v5338, 4294901760
      %5340 = vmatpush1.msra.mxu0 %v5339
      %5341 = vmatprep.subr.mxu0 0.0
      %v5342 = vand.u32 %v4783, 4294901760
      %v5343 = vsub.f32 %v4783, %v5342
      %v5344 = vand.u32 %v5343, 4294901760
      %5345 = vmatpush1.msra.mxu0 %v5344
      %5346 = vmatprep.subr.mxu0 0.0
      %v5347 = vand.u32 %v4782, 4294901760
      %v5348 = vsub.f32 %v4782, %v5347
      %v5349 = vand.u32 %v5348, 4294901760
      %5350 = vmatpush1.msra.mxu0 %v5349
      %5351 = vmatprep.subr.mxu0 0.0
      %5352 = vmatpush2.msra.mxu0 0.0
      %5353 = vmatprep.subr.mxu0 0.0
      %5354 = vmatpush2.msra.mxu0 0.0
      %5355 = vmatprep.subr.mxu0 0.0
      %5356 = vmatpush2.msra.mxu0 0.0
      %5357 = vmatprep.subr.mxu0 0.0
      %5358 = vmatpush2.msra.mxu0 0.0
      %5359 = vmatprep.subr.mxu0 0.0
      %5360 = vmatpush2.msra.mxu0 0.0
      %5361 = vmatprep.subr.mxu0 0.0
      %5362 = vmatpush2.msra.mxu0 0.0
      %5363 = vmatprep.subr.mxu0 0.0
      %5364 = vmatpush2.msra.mxu0 0.0
      %5365 = vmatprep.subr.mxu0 0.0
      %5366 = vmatpush2.msra.mxu0 0.0
      %5367 = vmatprep.subr.mxu0 0.0
      %5368 = vmatpush2.msra.mxu0 0.0
      %5369 = vmatprep.subr.mxu0 0.0
      %5370 = vmatpush2.msra.mxu0 0.0
      %5371 = vmatprep.subr.mxu0 0.0
      %5372 = vmatpush2.msra.mxu0 0.0
      %5373 = vmatprep.subr.mxu0 0.0
      %5374 = vmatpush2.msra.mxu0 0.0
      %5375 = vmatprep.subr.mxu0 0.0
      %5376 = vmatpush2.msra.mxu0 0.0
      %5377 = vmatprep.subr.mxu0 0.0
      %5378 = vmatpush2.msra.mxu0 0.0
      %5379 = vmatprep.subr.mxu0 0.0
      %5380 = vmatpush2.msra.mxu0 0.0
      %5381 = vmatprep.subr.mxu0 0.0
      %5382 = vmatpush2.msra.mxu0 0.0
      %5383 = vmatprep.mubr.f32.mxu0 0.0
      %v5384 = vand.u32 %v4780, 4294901760
      %5385 = vmatmul.mubr.f32.gmra.mxu0 %v5384
      %v5386 = vpop.f32.mrf.mxu0
      %v5387 = vadd.f32 %v5260, %v5386
      %v5388 = vpop.f32.mrf.mxu0
      %5389 = vmatprep.mubr.f32.mxu0 0.0
      %v5390 = vand.u32 %v4781, 4294901760
      %5391 = vmatmul.mubr.f32.gmra.mxu0 %v5390
      %v5392 = vpop.f32.mrf.mxu0
      %v5393 = vadd.f32 %v5268, %v5392
      %v5394 = vpop.f32.mrf.mxu0
      %5395 = vdwg.mxu0
      %5396 = vmatprep.subr.mxu0 0.0
      %v5397 = vand.u32 %v4797, 4294901760
      %5398 = vmatpush1.msra.mxu0 %v5397
      %5399 = vmatprep.subr.mxu0 0.0
      %v5400 = vand.u32 %v4796, 4294901760
      %5401 = vmatpush1.msra.mxu0 %v5400
      %5402 = vmatprep.subr.mxu0 0.0
      %v5403 = vand.u32 %v4795, 4294901760
      %5404 = vmatpush1.msra.mxu0 %v5403
      %5405 = vmatprep.subr.mxu0 0.0
      %v5406 = vand.u32 %v4794, 4294901760
      %5407 = vmatpush1.msra.mxu0 %v5406
      %5408 = vmatprep.subr.mxu0 0.0
      %v5409 = vand.u32 %v4793, 4294901760
      %5410 = vmatpush1.msra.mxu0 %v5409
      %5411 = vmatprep.subr.mxu0 0.0
      %v5412 = vand.u32 %v4792, 4294901760
      %5413 = vmatpush1.msra.mxu0 %v5412
      %5414 = vmatprep.subr.mxu0 0.0
      %v5415 = vand.u32 %v4791, 4294901760
      %5416 = vmatpush1.msra.mxu0 %v5415
      %5417 = vmatprep.subr.mxu0 0.0
      %v5418 = vand.u32 %v4790, 4294901760
      %5419 = vmatpush1.msra.mxu0 %v5418
      %5420 = vmatprep.subr.mxu0 0.0
      %v5421 = vand.u32 %v4789, 4294901760
      %5422 = vmatpush1.msra.mxu0 %v5421
      %5423 = vmatprep.subr.mxu0 0.0
      %v5424 = vand.u32 %v4788, 4294901760
      %5425 = vmatpush1.msra.mxu0 %v5424
      %5426 = vmatprep.subr.mxu0 0.0
      %v5427 = vand.u32 %v4787, 4294901760
      %5428 = vmatpush1.msra.mxu0 %v5427
      %5429 = vmatprep.subr.mxu0 0.0
      %v5430 = vand.u32 %v4786, 4294901760
      %5431 = vmatpush1.msra.mxu0 %v5430
      %5432 = vmatprep.subr.mxu0 0.0
      %v5433 = vand.u32 %v4785, 4294901760
      %5434 = vmatpush1.msra.mxu0 %v5433
      %5435 = vmatprep.subr.mxu0 0.0
      %v5436 = vand.u32 %v4784, 4294901760
      %5437 = vmatpush1.msra.mxu0 %v5436
      %5438 = vmatprep.subr.mxu0 0.0
      %v5439 = vand.u32 %v4783, 4294901760
      %5440 = vmatpush1.msra.mxu0 %v5439
      %5441 = vmatprep.subr.mxu0 0.0
      %v5442 = vand.u32 %v4782, 4294901760
      %5443 = vmatpush1.msra.mxu0 %v5442
      %5444 = vmatprep.subr.mxu0 0.0
      %5445 = vmatpush2.msra.mxu0 0.0
      %5446 = vmatprep.subr.mxu0 0.0
      %5447 = vmatpush2.msra.mxu0 0.0
      %5448 = vmatprep.subr.mxu0 0.0
      %5449 = vmatpush2.msra.mxu0 0.0
      %5450 = vmatprep.subr.mxu0 0.0
      %5451 = vmatpush2.msra.mxu0 0.0
      %5452 = vmatprep.subr.mxu0 0.0
      %5453 = vmatpush2.msra.mxu0 0.0
      %5454 = vmatprep.subr.mxu0 0.0
      %5455 = vmatpush2.msra.mxu0 0.0
      %5456 = vmatprep.subr.mxu0 0.0
      %5457 = vmatpush2.msra.mxu0 0.0
      %5458 = vmatprep.subr.mxu0 0.0
      %5459 = vmatpush2.msra.mxu0 0.0
      %5460 = vmatprep.subr.mxu0 0.0
      %5461 = vmatpush2.msra.mxu0 0.0
      %5462 = vmatprep.subr.mxu0 0.0
      %5463 = vmatpush2.msra.mxu0 0.0
      %5464 = vmatprep.subr.mxu0 0.0
      %5465 = vmatpush2.msra.mxu0 0.0
      %5466 = vmatprep.subr.mxu0 0.0
      %5467 = vmatpush2.msra.mxu0 0.0
      %5468 = vmatprep.subr.mxu0 0.0
      %5469 = vmatpush2.msra.mxu0 0.0
      %5470 = vmatprep.subr.mxu0 0.0
      %5471 = vmatpush2.msra.mxu0 0.0
      %5472 = vmatprep.subr.mxu0 0.0
      %5473 = vmatpush2.msra.mxu0 0.0
      %5474 = vmatprep.subr.mxu0 0.0
      %5475 = vmatpush2.msra.mxu0 0.0
      %5476 = vmatprep.mubr.f32.mxu0 0.0
      %v5477 = vand.u32 %v4780, 4294901760
      %5478 = vmatmul.mubr.f32.gmra.mxu0 %v5477
      %v5479 = vpop.f32.mrf.mxu0
      %v5480 = vadd.f32 %v5387, %v5479
      %v5481 = vpop.f32.mrf.mxu0
      %5482 = vmatprep.mubr.f32.mxu0 0.0
      %v5483 = vand.u32 %v4781, 4294901760
      %5484 = vmatmul.mubr.f32.gmra.mxu0 %v5483
      %v5485 = vpop.f32.mrf.mxu0
      %v5486 = vadd.f32 %v5393, %v5485
      %v5487 = vpop.f32.mrf.mxu0
      %5488 = vdwg.mxu0
      %v5489 = vadd.f32 %v4179, %v5480
      %v5490 = vadd.f32 %v4180, %v5486
      %5491 = vst.msk [vmem:[%s444] sm:$0xff] %vm449, %v5489
      %5492 = vst.msk [vmem:[%s444 + $0x8] sm:$0xff] %vm449, %v5490
      %s5493 = smul.u32 2, %s26
      %p5494 = scmp.lt.s32.totalorder %s27, 1
      %s5495 = scalar_select %p5494, %s27, 1
      %p5496 = scmp.lt.s32.totalorder %s5493, 1
      %s5497 = scalar_select %p5496, %s5493, 1
      %s5498 = smul.addr %s5495, 2
      %s5499 = sadd.s32 %s5497, %s5498
      %s5500 = smul.addr %s5499, 8
      %s5501 = scalar_lea.vmem %s11, %s5500
      // Predicated region
      $region65: #{basic_layer_forward.2} parent=63 // pred_check
        %p5502 = pneg %p297
      $region66: #{basic_layer_forward.2} parent=63 // pred_check_branch
        %5504 = sbr.rel (%p5502) target = $region68
      $region67: #{basic_layer_forward.2} parent=63 // pred_region
        %s5505 = smul.u32 2, %s26
      $region68: #{basic_layer_forward.2} parent=63 // pred_fallthru
        _
    $region64: #{basic_layer_forward.2} parent=5 // pred_fallthru
      _
    %p5506 = scmp.le.s32.totalorder 2, %s17
    // Predicated region
    $region69: #{basic_layer_forward.2} parent=5 // pred_check
      %p5507 = pneg %p5506
    $region70: #{basic_layer_forward.2} parent=5 // pred_check_branch
      %5509 = sbr.rel (%p5507) target = $region72
    $region71: #{basic_layer_forward.2} parent=5 // pred_region
      %s5510 = ssub.s32 %s17, 2
      // Predicated region
      $region73: #{basic_layer_forward.2} parent=71 // pred_check
        %p5511 = pneg %p303
      $region74: #{basic_layer_forward.2} parent=71 // pred_check_branch
        %5513 = sbr.rel (%p5511) target = $region76
      $region75: #{basic_layer_forward.2} parent=71 // pred_region
        %s5514 = smul.u32 2, %s28
        %p5515 = scmp.lt.s32.totalorder %s29, 1
        %s5516 = scalar_select %p5515, %s29, 1
        %p5517 = scmp.lt.s32.totalorder %s5514, 1
        %s5518 = scalar_select %p5517, %s5514, 1
        %s5519 = smul.addr %s5516, 2
        %s5520 = sadd.s32 %s5518, %s5519
        %s5521 = smul.addr %s5520, 8
        %s5522 = scalar_lea.vmem %s11, %s5521
      $region76: #{basic_layer_forward.2} parent=71 // pred_fallthru
        _
    $region72: #{basic_layer_forward.2} parent=5 // pred_fallthru
      _
  $region6: #{basic_layer_forward.2} parent=0 // loop_footer
    %s21 = sadd.s32 1, %s17
  $region7: #{basic_layer_forward.2} parent=0 // loop_footer_branch
    %16 = sbr.rel target = $region3
  $region8: #{basic_layer_forward.2} parent=0 // loop_exit
    _

</llo_original>
